<compile_context>
chip_gen: v7x
topology: tpu7x:2x2x1
jax: 0.10.0
libtpu: 0.0.40
codegen_flags: <defaults>
</compile_context>

<pallas_src>
import functools

import jax
import jax.numpy as jnp
from jax.experimental import pallas as pl
from jax.experimental.pallas import tpu as pltpu

NEG_SLOPE = 0.2


def _round_up(x, m):
    return (x + m - 1) // m * m


# ----------------------------- projection kernel ------------------------------

def _proj_kernel(x_ref, ws_ref, bs_ref, wd_ref, bd_ref, s_ref, t_ref):
    x = x_ref[...]
    s_ref[...] = (jnp.dot(x, ws_ref[...], preferred_element_type=jnp.float32)
                  + bs_ref[...])
    t_ref[...] = (jnp.dot(x, wd_ref[...], preferred_element_type=jnp.float32)
                  + bd_ref[...])


def _project(x, ws, bs, wd, bd, tile):
    """s = x @ Wsrc + bsrc, t = x @ Wdst + bdst, computed once per layer."""
    n, fin = x.shape
    hd = ws.shape[1]
    return pl.pallas_call(
        _proj_kernel,
        out_shape=(jax.ShapeDtypeStruct((n, hd), jnp.float32),
                   jax.ShapeDtypeStruct((n, hd), jnp.float32)),
        grid=(n // tile,),
        in_specs=[
            pl.BlockSpec((tile, fin), lambda i: (i, 0)),
            pl.BlockSpec((fin, hd), lambda i: (0, 0)),
            pl.BlockSpec((1, hd), lambda i: (0, 0)),
            pl.BlockSpec((fin, hd), lambda i: (0, 0)),
            pl.BlockSpec((1, hd), lambda i: (0, 0)),
        ],
        out_specs=(pl.BlockSpec((tile, hd), lambda i: (i, 0)),
                   pl.BlockSpec((tile, hd), lambda i: (i, 0))),
        compiler_params=pltpu.CompilerParams(
            dimension_semantics=("parallel",)),
    )(x, ws, bs, wd, bd)


# ----------------------------- attention kernel -------------------------------

def gatv2_attn_kernel(nnz_ref,                     # scalar-prefetch (SMEM)
                      t_ref, lin_t_ref, sT_ref, s_ref, lin_s_ref, adj_ref,
                      coef_ref,                    # SMEM (1D, H*D)
                      out_ref,
                      acc_sc, m_sc, l_sc,
                      *, num_heads, head_dim, apply_elu):
    """One (dst_tile, src_tile) step of a GATv2 layer, all heads.

    Grid: (dst tiles [parallel], src tiles [reduction, innermost]).
    e[i,j,h] = lin_t[i,h] + lin_s[h,j] + sum_d coef[h,d] * |t[i,hd] + sT[hd,j]|
    followed by a flash-style online softmax over src tiles.
    """
    i = pl.program_id(0)
    k = pl.program_id(1)
    nk = pl.num_programs(1)
    H, D = num_heads, head_dim

    @pl.when(k == 0)
    def _init():
        m_sc[...] = jnp.full(m_sc.shape, -jnp.inf, dtype=jnp.float32)
        l_sc[...] = jnp.zeros(l_sc.shape, dtype=jnp.float32)
        acc_sc[...] = jnp.zeros(acc_sc.shape, dtype=jnp.float32)

    # Skip blocks with no edges entirely (they contribute exactly 0 to l / acc).
    @pl.when(nnz_ref[i, k] > 0)
    def _step():
        edge = adj_ref[...] != 0                  # (TM, TS) bool, int8 input
        t = t_ref[...]                            # (TM, HD) f32
        sT = sT_ref[...]                          # (HD, TS) f32
        s_b = s_ref[...]                          # (TS, HD) bf16
        lin_t = lin_t_ref[...]                    # (TM, H)  f32
        lin_s = lin_s_ref[...]                    # (H, TS)  f32
        m_prev = m_sc[...]                        # (TM, H)
        l_prev = l_sc[...]

        m_cols, l_cols, corr_cols, pv_cols = [], [], [], []
        for h in range(H):
            lo = h * D
            # Full-lane (TM, TS) score accumulation; linear term is rank-1.
            e = lin_t[:, h:h + 1] + lin_s[h:h + 1, :]
            for d in range(D):
                c = lo + d
                e = e + coef_ref[c] * jnp.abs(t[:, c:c + 1] + sT[c:c + 1, :])

            m_h_prev = m_prev[:, h:h + 1]
            m_h = jnp.maximum(m_h_prev, jnp.max(e, axis=1, keepdims=True))
            corr = jnp.exp(m_h_prev - m_h)        # == 0 on first visited block
            # Single mask pass: zero non-edges on the exp output (robust to rows
            # with no edges in this block).
            p = jnp.where(edge, jnp.exp(e - m_h), 0.0)

            m_cols.append(m_h)
            l_cols.append(corr * l_prev[:, h:h + 1]
                          + jnp.sum(p, axis=1, keepdims=True))
            corr_cols.append(jnp.broadcast_to(corr, (corr.shape[0], D)))
            pv_cols.append(jnp.dot(p.astype(jnp.bfloat16), s_b[:, lo:lo + D],
                                   preferred_element_type=jnp.float32))

        m_sc[...] = jnp.concatenate(m_cols, axis=1)
        l_sc[...] = jnp.concatenate(l_cols, axis=1)
        # Whole-width accumulator update (one RMW instead of H masked ones).
        acc_sc[...] = (jnp.concatenate(corr_cols, axis=1) * acc_sc[...]
                       + jnp.concatenate(pv_cols, axis=1))

    @pl.when(k == nk - 1)
    def _finalize():
        # Guard zero in-degree rows (denominator 0 -> output 0, not NaN).
        inv = pl.reciprocal(jnp.maximum(l_sc[...], 1e-20), approx=True)  # (TM,H)
        cols = [acc_sc[:, h * D:(h + 1) * D] * inv[:, h:h + 1] for h in range(H)]
        v = jnp.concatenate(cols, axis=1)
        if apply_elu:
            v = jnp.where(v > 0, v, jnp.exp(jnp.minimum(v, 0.0)) - 1.0)
        out_ref[...] = v.astype(out_ref.dtype)    # single lane-dense store


# --------------------------------- layer --------------------------------------

def gatv2_layer(x, adj_i8, w_src, b_src, w_dst, b_dst, attn, *,
                apply_elu=False, block_nodes=256):
    """x: (N, Fin); adj_i8: (N, N) int8; w_*: (H, Fin, D); b_*, attn: (H, 1, D).
    Returns (N, H*D) float32 (head-flattened, lane-dense)."""
    N, Fin = x.shape
    H, _, D = w_src.shape
    HD = H * D
    c1 = (1.0 + NEG_SLOPE) / 2.0
    c2 = (1.0 - NEG_SLOPE) / 2.0

    # Flatten per-head params head-major (column h*D + d) -- tiny one-time ops.
    ws = jnp.transpose(w_src, (1, 0, 2)).reshape(Fin, HD)
    wd = jnp.transpose(w_dst, (1, 0, 2)).reshape(Fin, HD)
    bs = b_src.reshape(1, HD)
    bd = b_dst.reshape(1, HD)
    a_hd = attn.reshape(H, D)

    # ---- tiling / padding (no full-N fallback) ----
    tile = block_nodes if N >= block_nodes else _round_up(N, 8)
    Npad = _round_up(N, tile)
    nd = Npad // tile
    ns = Npad // tile
    # TODO(synk): for v7x dual-TC balance, optionally pad further so nd is even.

    if Npad != N:
        x_p = jnp.pad(x, ((0, Npad - N), (0, 0)))
        adj_p = jnp.pad(adj_i8, ((0, Npad - N), (0, Npad - N)))
    else:
        x_p, adj_p = x, adj_i8

    # ---- projections once per layer (Pallas) ----
    s, t = _project(x_p, ws, bs, wd, bd, tile)          # (Npad, HD) f32 each

    # ---- cheap O(N*HD) reshuffles in plain JAX ----
    sT = s.T                                            # (HD, Npad), src on lanes
    s_b16 = s.astype(jnp.bfloat16)                      # aggregation MXU operand
    lin_t = c1 * jnp.einsum("nhd,hd->nh", t.reshape(Npad, H, D), a_hd)   # (Npad,H)
    lin_s = (c1 * jnp.einsum("nhd,hd->nh", s.reshape(Npad, H, D), a_hd)).T  # (H,Npad)
    coef = (c2 * a_hd.reshape(HD)).astype(jnp.float32)  # (HD,) -> SMEM scalars

    # Per-block nonzero counts for empty-block skipping (scalar prefetch).
    nnz = adj_p.astype(jnp.int32).reshape(nd, tile, ns, tile).sum(axis=(1, 3))

    kernel = functools.partial(gatv2_attn_kernel,
                               num_heads=H, head_dim=D, apply_elu=apply_elu)

    out = pl.pallas_call(
        kernel,
        out_shape=jax.ShapeDtypeStruct((Npad, HD), jnp.float32),
        grid_spec=pltpu.PrefetchScalarGridSpec(
            num_scalar_prefetch=1,
            grid=(nd, ns),
            in_specs=[
                pl.BlockSpec((tile, HD), lambda i, k, *_: (i, 0)),    # t (dst)
                pl.BlockSpec((tile, H), lambda i, k, *_: (i, 0)),     # lin_t
                pl.BlockSpec((HD, tile), lambda i, k, *_: (0, k)),    # s^T (src)
                pl.BlockSpec((tile, HD), lambda i, k, *_: (k, 0)),    # s (bf16)
                pl.BlockSpec((H, tile), lambda i, k, *_: (0, k)),     # lin_s
                pl.BlockSpec((tile, tile), lambda i, k, *_: (i, k)),  # adj int8
                pl.BlockSpec(memory_space=pltpu.MemorySpace.SMEM),    # coef
            ],
            out_specs=pl.BlockSpec((tile, HD), lambda i, k, *_: (i, 0)),
            scratch_shapes=[
                pltpu.VMEM((tile, HD), jnp.float32),   # acc
                pltpu.VMEM((tile, H), jnp.float32),    # running max per head
                pltpu.VMEM((tile, H), jnp.float32),    # running denom per head
            ],
        ),
        compiler_params=pltpu.CompilerParams(
            dimension_semantics=("parallel", "arbitrary"),
        ),
    )(nnz, t, lin_t, sT, s_b16, lin_s, adj_p, coef)
    return out[:N]                                      # drop pad rows


def gat_forward(x, adj, params):
    adj_i8 = (adj != 0).astype(jnp.int8)                # 4x smaller O(N^2) stream
    # conv1 (num_heads heads), ELU fused into the kernel epilogue; output is
    # already (N, H*hid) so conv2 consumes it directly (no transpose/reshape).
    h = gatv2_layer(x, adj_i8, *params["conv1"], apply_elu=True)      # (N, H*hid)
    out = gatv2_layer(h, adj_i8, *params["conv2"], apply_elu=False)   # (N, out)
    return out


# ---------------- pure-JAX reference (for correctness check only) -------------

def _gatv2_layer_ref(x, adj, w_src, b_src, w_dst, b_dst, attn):
    s = jnp.einsum("nf,hfd->hnd", x, w_src) + b_src          # (H, N, D)
    t = jnp.einsum("nf,hfd->hnd", x, w_dst) + b_dst
    m = t[:, :, None, :] + s[:, None, :, :]                  # (H, Ndst, Nsrc, D)
    m = jnp.where(m > 0, m, NEG_SLOPE * m)
    e = jnp.sum(m * attn[:, None, :, :], axis=-1)            # (H, N, N)
    e = jnp.where(adj[None] > 0, e, -1e30)
    e = e - jnp.max(e, axis=-1, keepdims=True)
    p = jnp.exp(e) * adj[None]
    alpha = p / jnp.sum(p, axis=-1, keepdims=True)
    out = jnp.einsum("hij,hjd->hid", alpha, s)
    return jnp.transpose(out, (1, 0, 2))                     # (N, H, D)


def _gat_forward_ref(x, adj, params):
    h = _gatv2_layer_ref(x, adj, *params["conv1"])
    h = jax.nn.elu(h)
    h = h.reshape(h.shape[0], -1)
    h = _gatv2_layer_ref(h, adj, *params["conv2"])
    return h[:, 0, :]


# ------------------------------- setup / main ---------------------------------

def _init_gatv2_params(key, in_feats, out_feats, num_heads, scale=0.1):
    k1, k2, k3, k4, k5 = jax.random.split(key, 5)
    w_src = scale * jax.random.normal(k1, (num_heads, in_feats, out_feats), jnp.float32)
    b_src = scale * jax.random.normal(k2, (num_heads, 1, out_feats), jnp.float32)
    w_dst = scale * jax.random.normal(k3, (num_heads, in_feats, out_feats), jnp.float32)
    b_dst = scale * jax.random.normal(k4, (num_heads, 1, out_feats), jnp.float32)
    attn = scale * jax.random.normal(k5, (num_heads, 1, out_feats), jnp.float32)
    return (w_src, b_src, w_dst, b_dst, attn)


if __name__ == "__main__":
    # Small shapes consistent with the module.
    N = 16            # nodes in the graph
    in_feats = 8
    hid_feats = 16
    out_feats = 8
    num_heads = 4

    key = jax.random.PRNGKey(0)
    k_x, k_adj, k_p1, k_p2 = jax.random.split(key, 4)

    # Node features.
    x = jax.random.normal(k_x, (N, in_feats), jnp.float32)

    # Synthetic graph: random directed edges + self loops. adj[dst, src].
    adj = (jax.random.uniform(k_adj, (N, N)) < 0.3).astype(jnp.float32)
    adj = jnp.maximum(adj, jnp.eye(N, dtype=jnp.float32))   # avoid zero in-degree

    params = {
        "conv1": _init_gatv2_params(k_p1, in_feats, hid_feats, num_heads),
        "conv2": _init_gatv2_params(k_p2, hid_feats * num_heads, out_feats, 1),
    }

    out = jax.jit(gat_forward)(x, adj, params)
    out = jax.block_until_ready(out)
    assert out.shape == (N, out_feats), out.shape

    ref = _gat_forward_ref(x, adj, params)
    # Tolerance loosened slightly vs f32-only: the aggregation matmul consumes
    # bf16 p/s (softmax state & accumulators stay f32).
    if not jnp.allclose(out, ref, atol=1e-2, rtol=1e-2):
        raise AssertionError("Pallas GAT output mismatch vs reference")

    print("KERNEL_OK")
</pallas_src>

<mosaic_0001>
module attributes {stable_mosaic.version = 11 : i64} {
  func.func @_proj_kernel(%arg0: i32, %arg1: memref<16x8xf32, #tpu.memory_space<vmem>>, %arg2: memref<8x64xf32, #tpu.memory_space<vmem>>, %arg3: memref<1x64xf32, #tpu.memory_space<vmem>>, %arg4: memref<8x64xf32, #tpu.memory_space<vmem>>, %arg5: memref<1x64xf32, #tpu.memory_space<vmem>>, %arg6: memref<16x64xf32, #tpu.memory_space<vmem>>, %arg7: memref<16x64xf32, #tpu.memory_space<vmem>>) attributes {dimension_semantics = [#tpu.dimension_semantics<parallel>], iteration_bounds = array<i64: 1>, scalar_prefetch = 0 : i64, scratch_operands = 0 : i64, tpu.core_type = #tpu.core_type<tc>, window_params = [{transform_indices = @transform_0, window_bounds = array<i64: 16, 8>}, {pipeline_mode = #tpu.pipeline_mode<synchronous>, transform_indices = @transform_1, window_bounds = array<i64: 8, 64>}, {pipeline_mode = #tpu.pipeline_mode<synchronous>, transform_indices = @transform_2, window_bounds = array<i64: 1, 64>}, {pipeline_mode = #tpu.pipeline_mode<synchronous>, transform_indices = @transform_3, window_bounds = array<i64: 8, 64>}, {pipeline_mode = #tpu.pipeline_mode<synchronous>, transform_indices = @transform_4, window_bounds = array<i64: 1, 64>}, {transform_indices = @transform_5, window_bounds = array<i64: 16, 64>}, {transform_indices = @transform_6, window_bounds = array<i64: 16, 64>}]} {
    %c0 = arith.constant 0 : index
    %c0_0 = arith.constant 0 : index
    %0 = vector.load %arg1[%c0, %c0_0] : memref<16x8xf32, #tpu.memory_space<vmem>>, vector<16x8xf32>
    %c0_1 = arith.constant 0 : index
    %c0_2 = arith.constant 0 : index
    %1 = vector.load %arg2[%c0_1, %c0_2] : memref<8x64xf32, #tpu.memory_space<vmem>>, vector<8x64xf32>
    %cst = arith.constant dense<0.000000e+00> : vector<16x64xf32>
    %2 = tpu.matmul %0, %1, %cst {dimension_numbers = #tpu.dot_dimension_numbers<[1], [0], [0], [1], [0, 0, 1, 1], [], []>} : vector<16x8xf32>, vector<8x64xf32>, vector<16x64xf32> -> vector<16x64xf32>
    %c0_3 = arith.constant 0 : index
    %c0_4 = arith.constant 0 : index
    %3 = vector.load %arg3[%c0_3, %c0_4] : memref<1x64xf32, #tpu.memory_space<vmem>>, vector<1x64xf32>
    %4 = vector.broadcast %3 : vector<1x64xf32> to vector<16x64xf32>
    %5 = arith.addf %2, %4 : vector<16x64xf32>
    %c0_5 = arith.constant 0 : index
    %c0_6 = arith.constant 0 : index
    %6 = vector.load %arg6[%c0_5, %c0_6] : memref<16x64xf32, #tpu.memory_space<vmem>>, vector<16x64xf32>
    tpu.vector_store %arg6[%c0_5, %c0_6], %5 {strides = array<i32>} : memref<16x64xf32, #tpu.memory_space<vmem>>, vector<16x64xf32>,
    %c0_7 = arith.constant 0 : index
    %c0_8 = arith.constant 0 : index
    %7 = vector.load %arg4[%c0_7, %c0_8] : memref<8x64xf32, #tpu.memory_space<vmem>>, vector<8x64xf32>
    %cst_9 = arith.constant dense<0.000000e+00> : vector<16x64xf32>
    %8 = tpu.matmul %0, %7, %cst_9 {dimension_numbers = #tpu.dot_dimension_numbers<[1], [0], [0], [1], [0, 0, 1, 1], [], []>} : vector<16x8xf32>, vector<8x64xf32>, vector<16x64xf32> -> vector<16x64xf32>
    %c0_10 = arith.constant 0 : index
    %c0_11 = arith.constant 0 : index
    %9 = vector.load %arg5[%c0_10, %c0_11] : memref<1x64xf32, #tpu.memory_space<vmem>>, vector<1x64xf32>
    %10 = vector.broadcast %9 : vector<1x64xf32> to vector<16x64xf32>
    %11 = arith.addf %8, %10 : vector<16x64xf32>
    %c0_12 = arith.constant 0 : index
    %c0_13 = arith.constant 0 : index
    %12 = vector.load %arg7[%c0_12, %c0_13] : memref<16x64xf32, #tpu.memory_space<vmem>>, vector<16x64xf32>
    tpu.vector_store %arg7[%c0_12, %c0_13], %11 {strides = array<i32>} : memref<16x64xf32, #tpu.memory_space<vmem>>, vector<16x64xf32>,
    return
  }
  func.func @transform_0(%arg0: i32) -> (i32, i32) {
    %c0_i32 = arith.constant 0 : i32
    %c0_i32_0 = arith.constant 0 : i32
    return %arg0, %c0_i32 : i32, i32
  }
  func.func @transform_1(%arg0: i32) -> (i32, i32) {
    %c0_i32 = arith.constant 0 : i32
    %c0_i32_0 = arith.constant 0 : i32
    %c0_i32_1 = arith.constant 0 : i32
    return %c0_i32, %c0_i32_0 : i32, i32
  }
  func.func @transform_2(%arg0: i32) -> (i32, i32) {
    %c0_i32 = arith.constant 0 : i32
    %c0_i32_0 = arith.constant 0 : i32
    %c0_i32_1 = arith.constant 0 : i32
    return %c0_i32, %c0_i32_0 : i32, i32
  }
  func.func @transform_3(%arg0: i32) -> (i32, i32) {
    %c0_i32 = arith.constant 0 : i32
    %c0_i32_0 = arith.constant 0 : i32
    %c0_i32_1 = arith.constant 0 : i32
    return %c0_i32, %c0_i32_0 : i32, i32
  }
  func.func @transform_4(%arg0: i32) -> (i32, i32) {
    %c0_i32 = arith.constant 0 : i32
    %c0_i32_0 = arith.constant 0 : i32
    %c0_i32_1 = arith.constant 0 : i32
    return %c0_i32, %c0_i32_0 : i32, i32
  }
  func.func @transform_5(%arg0: i32) -> (i32, i32) {
    %c0_i32 = arith.constant 0 : i32
    %c0_i32_0 = arith.constant 0 : i32
    return %arg0, %c0_i32 : i32, i32
  }
  func.func @transform_6(%arg0: i32) -> (i32, i32) {
    %c0_i32 = arith.constant 0 : i32
    %c0_i32_0 = arith.constant 0 : i32
    return %arg0, %c0_i32 : i32, i32
  }
}

module attributes {stable_mosaic.version = 11 : i64} {
  func.func @_proj_kernel(%arg0: i32, %arg1: memref<16x64xf32, #tpu.memory_space<vmem>>, %arg2: memref<64x8xf32, #tpu.memory_space<vmem>>, %arg3: memref<1x8xf32, #tpu.memory_space<vmem>>, %arg4: memref<64x8xf32, #tpu.memory_space<vmem>>, %arg5: memref<1x8xf32, #tpu.memory_space<vmem>>, %arg6: memref<16x8xf32, #tpu.memory_space<vmem>>, %arg7: memref<16x8xf32, #tpu.memory_space<vmem>>) attributes {dimension_semantics = [#tpu.dimension_semantics<parallel>], iteration_bounds = array<i64: 1>, scalar_prefetch = 0 : i64, scratch_operands = 0 : i64, tpu.core_type = #tpu.core_type<tc>, window_params = [{transform_indices = @transform_0, window_bounds = array<i64: 16, 64>}, {pipeline_mode = #tpu.pipeline_mode<synchronous>, transform_indices = @transform_1, window_bounds = array<i64: 64, 8>}, {pipeline_mode = #tpu.pipeline_mode<synchronous>, transform_indices = @transform_2, window_bounds = array<i64: 1, 8>}, {pipeline_mode = #tpu.pipeline_mode<synchronous>, transform_indices = @transform_3, window_bounds = array<i64: 64, 8>}, {pipeline_mode = #tpu.pipeline_mode<synchronous>, transform_indices = @transform_4, window_bounds = array<i64: 1, 8>}, {transform_indices = @transform_5, window_bounds = array<i64: 16, 8>}, {transform_indices = @transform_6, window_bounds = array<i64: 16, 8>}]} {
    %c0 = arith.constant 0 : index
    %c0_0 = arith.constant 0 : index
    %0 = vector.load %arg1[%c0, %c0_0] : memref<16x64xf32, #tpu.memory_space<vmem>>, vector<16x64xf32>
    %c0_1 = arith.constant 0 : index
    %c0_2 = arith.constant 0 : index
    %1 = vector.load %arg2[%c0_1, %c0_2] : memref<64x8xf32, #tpu.memory_space<vmem>>, vector<64x8xf32>
    %cst = arith.constant dense<0.000000e+00> : vector<16x8xf32>
    %2 = tpu.matmul %0, %1, %cst {dimension_numbers = #tpu.dot_dimension_numbers<[1], [0], [0], [1], [0, 0, 1, 1], [], []>} : vector<16x64xf32>, vector<64x8xf32>, vector<16x8xf32> -> vector<16x8xf32>
    %c0_3 = arith.constant 0 : index
    %c0_4 = arith.constant 0 : index
    %3 = vector.load %arg3[%c0_3, %c0_4] : memref<1x8xf32, #tpu.memory_space<vmem>>, vector<1x8xf32>
    %4 = vector.broadcast %3 : vector<1x8xf32> to vector<16x8xf32>
    %5 = arith.addf %2, %4 : vector<16x8xf32>
    %c0_5 = arith.constant 0 : index
    %c0_6 = arith.constant 0 : index
    %6 = vector.load %arg6[%c0_5, %c0_6] : memref<16x8xf32, #tpu.memory_space<vmem>>, vector<16x8xf32>
    tpu.vector_store %arg6[%c0_5, %c0_6], %5 {strides = array<i32>} : memref<16x8xf32, #tpu.memory_space<vmem>>, vector<16x8xf32>,
    %c0_7 = arith.constant 0 : index
    %c0_8 = arith.constant 0 : index
    %7 = vector.load %arg4[%c0_7, %c0_8] : memref<64x8xf32, #tpu.memory_space<vmem>>, vector<64x8xf32>
    %cst_9 = arith.constant dense<0.000000e+00> : vector<16x8xf32>
    %8 = tpu.matmul %0, %7, %cst_9 {dimension_numbers = #tpu.dot_dimension_numbers<[1], [0], [0], [1], [0, 0, 1, 1], [], []>} : vector<16x64xf32>, vector<64x8xf32>, vector<16x8xf32> -> vector<16x8xf32>
    %c0_10 = arith.constant 0 : index
    %c0_11 = arith.constant 0 : index
    %9 = vector.load %arg5[%c0_10, %c0_11] : memref<1x8xf32, #tpu.memory_space<vmem>>, vector<1x8xf32>
    %10 = vector.broadcast %9 : vector<1x8xf32> to vector<16x8xf32>
    %11 = arith.addf %8, %10 : vector<16x8xf32>
    %c0_12 = arith.constant 0 : index
    %c0_13 = arith.constant 0 : index
    %12 = vector.load %arg7[%c0_12, %c0_13] : memref<16x8xf32, #tpu.memory_space<vmem>>, vector<16x8xf32>
    tpu.vector_store %arg7[%c0_12, %c0_13], %11 {strides = array<i32>} : memref<16x8xf32, #tpu.memory_space<vmem>>, vector<16x8xf32>,
    return
  }
  func.func @transform_0(%arg0: i32) -> (i32, i32) {
    %c0_i32 = arith.constant 0 : i32
    %c0_i32_0 = arith.constant 0 : i32
    return %arg0, %c0_i32 : i32, i32
  }
  func.func @transform_1(%arg0: i32) -> (i32, i32) {
    %c0_i32 = arith.constant 0 : i32
    %c0_i32_0 = arith.constant 0 : i32
    %c0_i32_1 = arith.constant 0 : i32
    return %c0_i32, %c0_i32_0 : i32, i32
  }
  func.func @transform_2(%arg0: i32) -> (i32, i32) {
    %c0_i32 = arith.constant 0 : i32
    %c0_i32_0 = arith.constant 0 : i32
    %c0_i32_1 = arith.constant 0 : i32
    return %c0_i32, %c0_i32_0 : i32, i32
  }
  func.func @transform_3(%arg0: i32) -> (i32, i32) {
    %c0_i32 = arith.constant 0 : i32
    %c0_i32_0 = arith.constant 0 : i32
    %c0_i32_1 = arith.constant 0 : i32
    return %c0_i32, %c0_i32_0 : i32, i32
  }
  func.func @transform_4(%arg0: i32) -> (i32, i32) {
    %c0_i32 = arith.constant 0 : i32
    %c0_i32_0 = arith.constant 0 : i32
    %c0_i32_1 = arith.constant 0 : i32
    return %c0_i32, %c0_i32_0 : i32, i32
  }
  func.func @transform_5(%arg0: i32) -> (i32, i32) {
    %c0_i32 = arith.constant 0 : i32
    %c0_i32_0 = arith.constant 0 : i32
    return %arg0, %c0_i32 : i32, i32
  }
  func.func @transform_6(%arg0: i32) -> (i32, i32) {
    %c0_i32 = arith.constant 0 : i32
    %c0_i32_0 = arith.constant 0 : i32
    return %arg0, %c0_i32 : i32, i32
  }
}

module attributes {stable_mosaic.version = 11 : i64} {
  func.func @gatv2_attn_kernel(%arg0: i32, %arg1: i32, %arg2: memref<1x1xi32, #tpu.memory_space<smem>>, %arg3: memref<16x64xf32, #tpu.memory_space<vmem>>, %arg4: memref<16x4xf32, #tpu.memory_space<vmem>>, %arg5: memref<64x16xf32, #tpu.memory_space<vmem>>, %arg6: memref<16x64xbf16, #tpu.memory_space<vmem>>, %arg7: memref<4x16xf32, #tpu.memory_space<vmem>>, %arg8: memref<16x16xi8, #tpu.memory_space<vmem>>, %arg9: memref<64xf32, #tpu.memory_space<smem>>, %arg10: memref<16x64xf32, #tpu.memory_space<vmem>>, %arg11: memref<16x64xf32, #tpu.memory_space<vmem>>, %arg12: memref<16x4xf32, #tpu.memory_space<vmem>>, %arg13: memref<16x4xf32, #tpu.memory_space<vmem>>) attributes {dimension_semantics = [#tpu.dimension_semantics<parallel>, #tpu.dimension_semantics<arbitrary>], iteration_bounds = array<i64: 1, 1>, scalar_prefetch = 1 : i64, scratch_operands = 3 : i64, tpu.core_type = #tpu.core_type<tc>, window_params = [{transform_indices = @transform_0, window_bounds = array<i64: 16, 64>}, {transform_indices = @transform_1, window_bounds = array<i64: 16, 4>}, {transform_indices = @transform_2, window_bounds = array<i64: 64, 16>}, {transform_indices = @transform_3, window_bounds = array<i64: 16, 64>}, {transform_indices = @transform_4, window_bounds = array<i64: 4, 16>}, {transform_indices = @transform_5, window_bounds = array<i64: 16, 16>}, {transform_indices = @transform_6, window_bounds = array<i64: 64>}, {transform_indices = @transform_7, window_bounds = array<i64: 16, 64>}]} {
    %c0_i32 = arith.constant 0 : i32
    %0 = arith.cmpi eq, %arg1, %c0_i32 : i32
    %1 = arith.extui %0 : i1 to i32
    %c0_i32_0 = arith.constant 0 : i32
    %2 = arith.cmpi ne, %1, %c0_i32_0 : i32
    scf.if %2 {
      %cst = arith.constant 0xFF800000 : f32
      %12 = vector.broadcast %cst : f32 to vector<16x4xf32>
      %c0 = arith.constant 0 : index
      %c0_5 = arith.constant 0 : index
      %13 = vector.load %arg12[%c0, %c0_5] : memref<16x4xf32, #tpu.memory_space<vmem>>, vector<16x4xf32>
      tpu.vector_store %arg12[%c0, %c0_5], %12 {strides = array<i32>} : memref<16x4xf32, #tpu.memory_space<vmem>>, vector<16x4xf32>,
      %cst_6 = arith.constant 0.000000e+00 : f32
      %14 = vector.broadcast %cst_6 : f32 to vector<16x4xf32>
      %c0_7 = arith.constant 0 : index
      %c0_8 = arith.constant 0 : index
      %15 = vector.load %arg13[%c0_7, %c0_8] : memref<16x4xf32, #tpu.memory_space<vmem>>, vector<16x4xf32>
      tpu.vector_store %arg13[%c0_7, %c0_8], %14 {strides = array<i32>} : memref<16x4xf32, #tpu.memory_space<vmem>>, vector<16x4xf32>,
      %cst_9 = arith.constant 0.000000e+00 : f32
      %16 = vector.broadcast %cst_9 : f32 to vector<16x64xf32>
      %c0_10 = arith.constant 0 : index
      %c0_11 = arith.constant 0 : index
      %17 = vector.load %arg11[%c0_10, %c0_11] : memref<16x64xf32, #tpu.memory_space<vmem>>, vector<16x64xf32>
      tpu.vector_store %arg11[%c0_10, %c0_11], %16 {strides = array<i32>} : memref<16x64xf32, #tpu.memory_space<vmem>>, vector<16x64xf32>,
    } else {
    }
    %3 = arith.index_cast %arg0 : i32 to index
    %4 = arith.index_cast %arg1 : i32 to index
    %5 = memref.load %arg2[%3, %4] : memref<1x1xi32, #tpu.memory_space<smem>>
    %c0_i32_1 = arith.constant 0 : i32
    %6 = arith.cmpi sgt, %5, %c0_i32_1 : i32
    %7 = arith.extui %6 : i1 to i32
    %c0_i32_2 = arith.constant 0 : i32
    %8 = arith.cmpi ne, %7, %c0_i32_2 : i32
    scf.if %8 {
      %c0 = arith.constant 0 : index
      %c0_5 = arith.constant 0 : index
      %12 = vector.load %arg8[%c0, %c0_5] : memref<16x16xi8, #tpu.memory_space<vmem>>, vector<16x16xi8>
      %c0_i8 = arith.constant 0 : i8
      %13 = vector.broadcast %c0_i8 : i8 to vector<16x16xi8>
      %14 = arith.cmpi ne, %12, %13 : vector<16x16xi8>
      %c0_6 = arith.constant 0 : index
      %c0_7 = arith.constant 0 : index
      %15 = vector.load %arg3[%c0_6, %c0_7] : memref<16x64xf32, #tpu.memory_space<vmem>>, vector<16x64xf32>
      %c0_8 = arith.constant 0 : index
      %c0_9 = arith.constant 0 : index
      %16 = vector.load %arg5[%c0_8, %c0_9] : memref<64x16xf32, #tpu.memory_space<vmem>>, vector<64x16xf32>
      %c0_10 = arith.constant 0 : index
      %c0_11 = arith.constant 0 : index
      %17 = vector.load %arg6[%c0_10, %c0_11] : memref<16x64xbf16, #tpu.memory_space<vmem>>, vector<16x64xbf16>
      %c0_12 = arith.constant 0 : index
      %c0_13 = arith.constant 0 : index
      %18 = vector.load %arg4[%c0_12, %c0_13] : memref<16x4xf32, #tpu.memory_space<vmem>>, vector<16x4xf32>
      %c0_14 = arith.constant 0 : index
      %c0_15 = arith.constant 0 : index
      %19 = vector.load %arg7[%c0_14, %c0_15] : memref<4x16xf32, #tpu.memory_space<vmem>>, vector<4x16xf32>
      %c0_16 = arith.constant 0 : index
      %c0_17 = arith.constant 0 : index
      %20 = vector.load %arg12[%c0_16, %c0_17] : memref<16x4xf32, #tpu.memory_space<vmem>>, vector<16x4xf32>
      %c0_18 = arith.constant 0 : index
      %c0_19 = arith.constant 0 : index
      %21 = vector.load %arg13[%c0_18, %c0_19] : memref<16x4xf32, #tpu.memory_space<vmem>>, vector<16x4xf32>
      %22 = vector.extract_strided_slice %18 {offsets = [0, 0], sizes = [16, 1], strides = [1, 1]} : vector<16x4xf32> to vector<16x1xf32>
      %23 = vector.extract_strided_slice %19 {offsets = [0, 0], sizes = [1, 16], strides = [1, 1]} : vector<4x16xf32> to vector<1x16xf32>
      %24 = vector.broadcast %22 : vector<16x1xf32> to vector<16x16xf32>
      %25 = vector.broadcast %23 : vector<1x16xf32> to vector<16x16xf32>
      %26 = arith.addf %24, %25 : vector<16x16xf32>
      %c0_20 = arith.constant 0 : index
      %27 = memref.load %arg9[%c0_20] : memref<64xf32, #tpu.memory_space<smem>>
      %28 = vector.extract_strided_slice %15 {offsets = [0, 0], sizes = [16, 1], strides = [1, 1]} : vector<16x64xf32> to vector<16x1xf32>
      %29 = vector.extract_strided_slice %16 {offsets = [0, 0], sizes = [1, 16], strides = [1, 1]} : vector<64x16xf32> to vector<1x16xf32>
      %30 = vector.broadcast %28 : vector<16x1xf32> to vector<16x16xf32>
      %31 = vector.broadcast %29 : vector<1x16xf32> to vector<16x16xf32>
      %32 = arith.addf %30, %31 : vector<16x16xf32>
      %33 = math.absf %32 : vector<16x16xf32>
      %34 = vector.broadcast %27 : f32 to vector<16x16xf32>
      %35 = arith.mulf %34, %33 : vector<16x16xf32>
      %36 = arith.addf %26, %35 : vector<16x16xf32>
      %c1 = arith.constant 1 : index
      %37 = memref.load %arg9[%c1] : memref<64xf32, #tpu.memory_space<smem>>
      %38 = vector.extract_strided_slice %15 {offsets = [0, 1], sizes = [16, 1], strides = [1, 1]} : vector<16x64xf32> to vector<16x1xf32>
      %39 = vector.extract_strided_slice %16 {offsets = [1, 0], sizes = [1, 16], strides = [1, 1]} : vector<64x16xf32> to vector<1x16xf32>
      %40 = vector.broadcast %38 : vector<16x1xf32> to vector<16x16xf32>
      %41 = vector.broadcast %39 : vector<1x16xf32> to vector<16x16xf32>
      %42 = arith.addf %40, %41 : vector<16x16xf32>
      %43 = math.absf %42 : vector<16x16xf32>
      %44 = vector.broadcast %37 : f32 to vector<16x16xf32>
      %45 = arith.mulf %44, %43 : vector<16x16xf32>
      %46 = arith.addf %36, %45 : vector<16x16xf32>
      %c2 = arith.constant 2 : index
      %47 = memref.load %arg9[%c2] : memref<64xf32, #tpu.memory_space<smem>>
      %48 = vector.extract_strided_slice %15 {offsets = [0, 2], sizes = [16, 1], strides = [1, 1]} : vector<16x64xf32> to vector<16x1xf32>
      %49 = vector.extract_strided_slice %16 {offsets = [2, 0], sizes = [1, 16], strides = [1, 1]} : vector<64x16xf32> to vector<1x16xf32>
      %50 = vector.broadcast %48 : vector<16x1xf32> to vector<16x16xf32>
      %51 = vector.broadcast %49 : vector<1x16xf32> to vector<16x16xf32>
      %52 = arith.addf %50, %51 : vector<16x16xf32>
      %53 = math.absf %52 : vector<16x16xf32>
      %54 = vector.broadcast %47 : f32 to vector<16x16xf32>
      %55 = arith.mulf %54, %53 : vector<16x16xf32>
      %56 = arith.addf %46, %55 : vector<16x16xf32>
      %c3 = arith.constant 3 : index
      %57 = memref.load %arg9[%c3] : memref<64xf32, #tpu.memory_space<smem>>
      %58 = vector.extract_strided_slice %15 {offsets = [0, 3], sizes = [16, 1], strides = [1, 1]} : vector<16x64xf32> to vector<16x1xf32>
      %59 = vector.extract_strided_slice %16 {offsets = [3, 0], sizes = [1, 16], strides = [1, 1]} : vector<64x16xf32> to vector<1x16xf32>
      %60 = vector.broadcast %58 : vector<16x1xf32> to vector<16x16xf32>
      %61 = vector.broadcast %59 : vector<1x16xf32> to vector<16x16xf32>
      %62 = arith.addf %60, %61 : vector<16x16xf32>
      %63 = math.absf %62 : vector<16x16xf32>
      %64 = vector.broadcast %57 : f32 to vector<16x16xf32>
      %65 = arith.mulf %64, %63 : vector<16x16xf32>
      %66 = arith.addf %56, %65 : vector<16x16xf32>
      %c4 = arith.constant 4 : index
      %67 = memref.load %arg9[%c4] : memref<64xf32, #tpu.memory_space<smem>>
      %68 = vector.extract_strided_slice %15 {offsets = [0, 4], sizes = [16, 1], strides = [1, 1]} : vector<16x64xf32> to vector<16x1xf32>
      %69 = vector.extract_strided_slice %16 {offsets = [4, 0], sizes = [1, 16], strides = [1, 1]} : vector<64x16xf32> to vector<1x16xf32>
      %70 = vector.broadcast %68 : vector<16x1xf32> to vector<16x16xf32>
      %71 = vector.broadcast %69 : vector<1x16xf32> to vector<16x16xf32>
      %72 = arith.addf %70, %71 : vector<16x16xf32>
      %73 = math.absf %72 : vector<16x16xf32>
      %74 = vector.broadcast %67 : f32 to vector<16x16xf32>
      %75 = arith.mulf %74, %73 : vector<16x16xf32>
      %76 = arith.addf %66, %75 : vector<16x16xf32>
      %c5 = arith.constant 5 : index
      %77 = memref.load %arg9[%c5] : memref<64xf32, #tpu.memory_space<smem>>
      %78 = vector.extract_strided_slice %15 {offsets = [0, 5], sizes = [16, 1], strides = [1, 1]} : vector<16x64xf32> to vector<16x1xf32>
      %79 = vector.extract_strided_slice %16 {offsets = [5, 0], sizes = [1, 16], strides = [1, 1]} : vector<64x16xf32> to vector<1x16xf32>
      %80 = vector.broadcast %78 : vector<16x1xf32> to vector<16x16xf32>
      %81 = vector.broadcast %79 : vector<1x16xf32> to vector<16x16xf32>
      %82 = arith.addf %80, %81 : vector<16x16xf32>
      %83 = math.absf %82 : vector<16x16xf32>
      %84 = vector.broadcast %77 : f32 to vector<16x16xf32>
      %85 = arith.mulf %84, %83 : vector<16x16xf32>
      %86 = arith.addf %76, %85 : vector<16x16xf32>
      %c6 = arith.constant 6 : index
      %87 = memref.load %arg9[%c6] : memref<64xf32, #tpu.memory_space<smem>>
      %88 = vector.extract_strided_slice %15 {offsets = [0, 6], sizes = [16, 1], strides = [1, 1]} : vector<16x64xf32> to vector<16x1xf32>
      %89 = vector.extract_strided_slice %16 {offsets = [6, 0], sizes = [1, 16], strides = [1, 1]} : vector<64x16xf32> to vector<1x16xf32>
      %90 = vector.broadcast %88 : vector<16x1xf32> to vector<16x16xf32>
      %91 = vector.broadcast %89 : vector<1x16xf32> to vector<16x16xf32>
      %92 = arith.addf %90, %91 : vector<16x16xf32>
      %93 = math.absf %92 : vector<16x16xf32>
      %94 = vector.broadcast %87 : f32 to vector<16x16xf32>
      %95 = arith.mulf %94, %93 : vector<16x16xf32>
      %96 = arith.addf %86, %95 : vector<16x16xf32>
      %c7 = arith.constant 7 : index
      %97 = memref.load %arg9[%c7] : memref<64xf32, #tpu.memory_space<smem>>
      %98 = vector.extract_strided_slice %15 {offsets = [0, 7], sizes = [16, 1], strides = [1, 1]} : vector<16x64xf32> to vector<16x1xf32>
      %99 = vector.extract_strided_slice %16 {offsets = [7, 0], sizes = [1, 16], strides = [1, 1]} : vector<64x16xf32> to vector<1x16xf32>
      %100 = vector.broadcast %98 : vector<16x1xf32> to vector<16x16xf32>
      %101 = vector.broadcast %99 : vector<1x16xf32> to vector<16x16xf32>
      %102 = arith.addf %100, %101 : vector<16x16xf32>
      %103 = math.absf %102 : vector<16x16xf32>
      %104 = vector.broadcast %97 : f32 to vector<16x16xf32>
      %105 = arith.mulf %104, %103 : vector<16x16xf32>
      %106 = arith.addf %96, %105 : vector<16x16xf32>
      %c8 = arith.constant 8 : index
      %107 = memref.load %arg9[%c8] : memref<64xf32, #tpu.memory_space<smem>>
      %108 = vector.extract_strided_slice %15 {offsets = [0, 8], sizes = [16, 1], strides = [1, 1]} : vector<16x64xf32> to vector<16x1xf32>
      %109 = vector.extract_strided_slice %16 {offsets = [8, 0], sizes = [1, 16], strides = [1, 1]} : vector<64x16xf32> to vector<1x16xf32>
      %110 = vector.broadcast %108 : vector<16x1xf32> to vector<16x16xf32>
      %111 = vector.broadcast %109 : vector<1x16xf32> to vector<16x16xf32>
      %112 = arith.addf %110, %111 : vector<16x16xf32>
      %113 = math.absf %112 : vector<16x16xf32>
      %114 = vector.broadcast %107 : f32 to vector<16x16xf32>
      %115 = arith.mulf %114, %113 : vector<16x16xf32>
      %116 = arith.addf %106, %115 : vector<16x16xf32>
      %c9 = arith.constant 9 : index
      %117 = memref.load %arg9[%c9] : memref<64xf32, #tpu.memory_space<smem>>
      %118 = vector.extract_strided_slice %15 {offsets = [0, 9], sizes = [16, 1], strides = [1, 1]} : vector<16x64xf32> to vector<16x1xf32>
      %119 = vector.extract_strided_slice %16 {offsets = [9, 0], sizes = [1, 16], strides = [1, 1]} : vector<64x16xf32> to vector<1x16xf32>
      %120 = vector.broadcast %118 : vector<16x1xf32> to vector<16x16xf32>
      %121 = vector.broadcast %119 : vector<1x16xf32> to vector<16x16xf32>
      %122 = arith.addf %120, %121 : vector<16x16xf32>
      %123 = math.absf %122 : vector<16x16xf32>
      %124 = vector.broadcast %117 : f32 to vector<16x16xf32>
      %125 = arith.mulf %124, %123 : vector<16x16xf32>
      %126 = arith.addf %116, %125 : vector<16x16xf32>
      %c10 = arith.constant 10 : index
      %127 = memref.load %arg9[%c10] : memref<64xf32, #tpu.memory_space<smem>>
      %128 = vector.extract_strided_slice %15 {offsets = [0, 10], sizes = [16, 1], strides = [1, 1]} : vector<16x64xf32> to vector<16x1xf32>
      %129 = vector.extract_strided_slice %16 {offsets = [10, 0], sizes = [1, 16], strides = [1, 1]} : vector<64x16xf32> to vector<1x16xf32>
      %130 = vector.broadcast %128 : vector<16x1xf32> to vector<16x16xf32>
      %131 = vector.broadcast %129 : vector<1x16xf32> to vector<16x16xf32>
      %132 = arith.addf %130, %131 : vector<16x16xf32>
      %133 = math.absf %132 : vector<16x16xf32>
      %134 = vector.broadcast %127 : f32 to vector<16x16xf32>
      %135 = arith.mulf %134, %133 : vector<16x16xf32>
      %136 = arith.addf %126, %135 : vector<16x16xf32>
      %c11 = arith.constant 11 : index
      %137 = memref.load %arg9[%c11] : memref<64xf32, #tpu.memory_space<smem>>
      %138 = vector.extract_strided_slice %15 {offsets = [0, 11], sizes = [16, 1], strides = [1, 1]} : vector<16x64xf32> to vector<16x1xf32>
      %139 = vector.extract_strided_slice %16 {offsets = [11, 0], sizes = [1, 16], strides = [1, 1]} : vector<64x16xf32> to vector<1x16xf32>
      %140 = vector.broadcast %138 : vector<16x1xf32> to vector<16x16xf32>
      %141 = vector.broadcast %139 : vector<1x16xf32> to vector<16x16xf32>
      %142 = arith.addf %140, %141 : vector<16x16xf32>
      %143 = math.absf %142 : vector<16x16xf32>
      %144 = vector.broadcast %137 : f32 to vector<16x16xf32>
      %145 = arith.mulf %144, %143 : vector<16x16xf32>
      %146 = arith.addf %136, %145 : vector<16x16xf32>
      %c12 = arith.constant 12 : index
      %147 = memref.load %arg9[%c12] : memref<64xf32, #tpu.memory_space<smem>>
      %148 = vector.extract_strided_slice %15 {offsets = [0, 12], sizes = [16, 1], strides = [1, 1]} : vector<16x64xf32> to vector<16x1xf32>
      %149 = vector.extract_strided_slice %16 {offsets = [12, 0], sizes = [1, 16], strides = [1, 1]} : vector<64x16xf32> to vector<1x16xf32>
      %150 = vector.broadcast %148 : vector<16x1xf32> to vector<16x16xf32>
      %151 = vector.broadcast %149 : vector<1x16xf32> to vector<16x16xf32>
      %152 = arith.addf %150, %151 : vector<16x16xf32>
      %153 = math.absf %152 : vector<16x16xf32>
      %154 = vector.broadcast %147 : f32 to vector<16x16xf32>
      %155 = arith.mulf %154, %153 : vector<16x16xf32>
      %156 = arith.addf %146, %155 : vector<16x16xf32>
      %c13 = arith.constant 13 : index
      %157 = memref.load %arg9[%c13] : memref<64xf32, #tpu.memory_space<smem>>
      %158 = vector.extract_strided_slice %15 {offsets = [0, 13], sizes = [16, 1], strides = [1, 1]} : vector<16x64xf32> to vector<16x1xf32>
      %159 = vector.extract_strided_slice %16 {offsets = [13, 0], sizes = [1, 16], strides = [1, 1]} : vector<64x16xf32> to vector<1x16xf32>
      %160 = vector.broadcast %158 : vector<16x1xf32> to vector<16x16xf32>
      %161 = vector.broadcast %159 : vector<1x16xf32> to vector<16x16xf32>
      %162 = arith.addf %160, %161 : vector<16x16xf32>
      %163 = math.absf %162 : vector<16x16xf32>
      %164 = vector.broadcast %157 : f32 to vector<16x16xf32>
      %165 = arith.mulf %164, %163 : vector<16x16xf32>
      %166 = arith.addf %156, %165 : vector<16x16xf32>
      %c14 = arith.constant 14 : index
      %167 = memref.load %arg9[%c14] : memref<64xf32, #tpu.memory_space<smem>>
      %168 = vector.extract_strided_slice %15 {offsets = [0, 14], sizes = [16, 1], strides = [1, 1]} : vector<16x64xf32> to vector<16x1xf32>
      %169 = vector.extract_strided_slice %16 {offsets = [14, 0], sizes = [1, 16], strides = [1, 1]} : vector<64x16xf32> to vector<1x16xf32>
      %170 = vector.broadcast %168 : vector<16x1xf32> to vector<16x16xf32>
      %171 = vector.broadcast %169 : vector<1x16xf32> to vector<16x16xf32>
      %172 = arith.addf %170, %171 : vector<16x16xf32>
      %173 = math.absf %172 : vector<16x16xf32>
      %174 = vector.broadcast %167 : f32 to vector<16x16xf32>
      %175 = arith.mulf %174, %173 : vector<16x16xf32>
      %176 = arith.addf %166, %175 : vector<16x16xf32>
      %c15 = arith.constant 15 : index
      %177 = memref.load %arg9[%c15] : memref<64xf32, #tpu.memory_space<smem>>
      %178 = vector.extract_strided_slice %15 {offsets = [0, 15], sizes = [16, 1], strides = [1, 1]} : vector<16x64xf32> to vector<16x1xf32>
      %179 = vector.extract_strided_slice %16 {offsets = [15, 0], sizes = [1, 16], strides = [1, 1]} : vector<64x16xf32> to vector<1x16xf32>
      %180 = vector.broadcast %178 : vector<16x1xf32> to vector<16x16xf32>
      %181 = vector.broadcast %179 : vector<1x16xf32> to vector<16x16xf32>
      %182 = arith.addf %180, %181 : vector<16x16xf32>
      %183 = math.absf %182 : vector<16x16xf32>
      %184 = vector.broadcast %177 : f32 to vector<16x16xf32>
      %185 = arith.mulf %184, %183 : vector<16x16xf32>
      %186 = arith.addf %176, %185 : vector<16x16xf32>
      %187 = vector.extract_strided_slice %20 {offsets = [0, 0], sizes = [16, 1], strides = [1, 1]} : vector<16x4xf32> to vector<16x1xf32>
      %cst = arith.constant dense<0xFF800000> : vector<16xf32>
      %188 = vector.multi_reduction <maximumf>, %186, %cst [1] : vector<16x16xf32> to vector<16xf32>
      %189 = vector.shape_cast %188 : vector<16xf32> to vector<16x1xf32>
      %190 = arith.maximumf %187, %189 : vector<16x1xf32>
      %191 = arith.subf %187, %190 : vector<16x1xf32>
      %192 = math.exp %191 : vector<16x1xf32>
      %193 = vector.broadcast %190 : vector<16x1xf32> to vector<16x16xf32>
      %194 = arith.subf %186, %193 : vector<16x16xf32>
      %195 = math.exp %194 : vector<16x16xf32>
      %cst_21 = arith.constant 0.000000e+00 : f32
      %196 = vector.broadcast %cst_21 : f32 to vector<16x16xf32>
      %197 = arith.select %14, %195, %196 : vector<16x16xi1>, vector<16x16xf32>
      %198 = vector.extract_strided_slice %21 {offsets = [0, 0], sizes = [16, 1], strides = [1, 1]} : vector<16x4xf32> to vector<16x1xf32>
      %199 = arith.mulf %192, %198 : vector<16x1xf32>
      %cst_22 = arith.constant dense<0.000000e+00> : vector<16xf32>
      %200 = vector.multi_reduction <add>, %197, %cst_22 [1] : vector<16x16xf32> to vector<16xf32>
      %201 = vector.shape_cast %200 : vector<16xf32> to vector<16x1xf32>
      %202 = arith.addf %199, %201 : vector<16x1xf32>
      %203 = vector.shape_cast %192 : vector<16x1xf32> to vector<16x1xf32>
      %204 = vector.broadcast %203 : vector<16x1xf32> to vector<16x16xf32>
      %205 = arith.truncf %197 : vector<16x16xf32> to vector<16x16xbf16>
      %206 = vector.extract_strided_slice %17 {offsets = [0, 0], sizes = [16, 16], strides = [1, 1]} : vector<16x64xbf16> to vector<16x16xbf16>
      %cst_23 = arith.constant dense<0.000000e+00> : vector<16x16xf32>
      %207 = tpu.matmul %205, %206, %cst_23 {dimension_numbers = #tpu.dot_dimension_numbers<[1], [0], [0], [1], [0, 0, 1, 1], [], []>} : vector<16x16xbf16>, vector<16x16xbf16>, vector<16x16xf32> -> vector<16x16xf32>
      %208 = vector.extract_strided_slice %18 {offsets = [0, 1], sizes = [16, 1], strides = [1, 1]} : vector<16x4xf32> to vector<16x1xf32>
      %209 = vector.extract_strided_slice %19 {offsets = [1, 0], sizes = [1, 16], strides = [1, 1]} : vector<4x16xf32> to vector<1x16xf32>
      %210 = vector.broadcast %208 : vector<16x1xf32> to vector<16x16xf32>
      %211 = vector.broadcast %209 : vector<1x16xf32> to vector<16x16xf32>
      %212 = arith.addf %210, %211 : vector<16x16xf32>
      %c16 = arith.constant 16 : index
      %213 = memref.load %arg9[%c16] : memref<64xf32, #tpu.memory_space<smem>>
      %214 = vector.extract_strided_slice %15 {offsets = [0, 16], sizes = [16, 1], strides = [1, 1]} : vector<16x64xf32> to vector<16x1xf32>
      %215 = vector.extract_strided_slice %16 {offsets = [16, 0], sizes = [1, 16], strides = [1, 1]} : vector<64x16xf32> to vector<1x16xf32>
      %216 = vector.broadcast %214 : vector<16x1xf32> to vector<16x16xf32>
      %217 = vector.broadcast %215 : vector<1x16xf32> to vector<16x16xf32>
      %218 = arith.addf %216, %217 : vector<16x16xf32>
      %219 = math.absf %218 : vector<16x16xf32>
      %220 = vector.broadcast %213 : f32 to vector<16x16xf32>
      %221 = arith.mulf %220, %219 : vector<16x16xf32>
      %222 = arith.addf %212, %221 : vector<16x16xf32>
      %c17 = arith.constant 17 : index
      %223 = memref.load %arg9[%c17] : memref<64xf32, #tpu.memory_space<smem>>
      %224 = vector.extract_strided_slice %15 {offsets = [0, 17], sizes = [16, 1], strides = [1, 1]} : vector<16x64xf32> to vector<16x1xf32>
      %225 = vector.extract_strided_slice %16 {offsets = [17, 0], sizes = [1, 16], strides = [1, 1]} : vector<64x16xf32> to vector<1x16xf32>
      %226 = vector.broadcast %224 : vector<16x1xf32> to vector<16x16xf32>
      %227 = vector.broadcast %225 : vector<1x16xf32> to vector<16x16xf32>
      %228 = arith.addf %226, %227 : vector<16x16xf32>
      %229 = math.absf %228 : vector<16x16xf32>
      %230 = vector.broadcast %223 : f32 to vector<16x16xf32>
      %231 = arith.mulf %230, %229 : vector<16x16xf32>
      %232 = arith.addf %222, %231 : vector<16x16xf32>
      %c18 = arith.constant 18 : index
      %233 = memref.load %arg9[%c18] : memref<64xf32, #tpu.memory_space<smem>>
      %234 = vector.extract_strided_slice %15 {offsets = [0, 18], sizes = [16, 1], strides = [1, 1]} : vector<16x64xf32> to vector<16x1xf32>
      %235 = vector.extract_strided_slice %16 {offsets = [18, 0], sizes = [1, 16], strides = [1, 1]} : vector<64x16xf32> to vector<1x16xf32>
      %236 = vector.broadcast %234 : vector<16x1xf32> to vector<16x16xf32>
      %237 = vector.broadcast %235 : vector<1x16xf32> to vector<16x16xf32>
      %238 = arith.addf %236, %237 : vector<16x16xf32>
      %239 = math.absf %238 : vector<16x16xf32>
      %240 = vector.broadcast %233 : f32 to vector<16x16xf32>
      %241 = arith.mulf %240, %239 : vector<16x16xf32>
      %242 = arith.addf %232, %241 : vector<16x16xf32>
      %c19 = arith.constant 19 : index
      %243 = memref.load %arg9[%c19] : memref<64xf32, #tpu.memory_space<smem>>
      %244 = vector.extract_strided_slice %15 {offsets = [0, 19], sizes = [16, 1], strides = [1, 1]} : vector<16x64xf32> to vector<16x1xf32>
      %245 = vector.extract_strided_slice %16 {offsets = [19, 0], sizes = [1, 16], strides = [1, 1]} : vector<64x16xf32> to vector<1x16xf32>
      %246 = vector.broadcast %244 : vector<16x1xf32> to vector<16x16xf32>
      %247 = vector.broadcast %245 : vector<1x16xf32> to vector<16x16xf32>
      %248 = arith.addf %246, %247 : vector<16x16xf32>
      %249 = math.absf %248 : vector<16x16xf32>
      %250 = vector.broadcast %243 : f32 to vector<16x16xf32>
      %251 = arith.mulf %250, %249 : vector<16x16xf32>
      %252 = arith.addf %242, %251 : vector<16x16xf32>
      %c20 = arith.constant 20 : index
      %253 = memref.load %arg9[%c20] : memref<64xf32, #tpu.memory_space<smem>>
      %254 = vector.extract_strided_slice %15 {offsets = [0, 20], sizes = [16, 1], strides = [1, 1]} : vector<16x64xf32> to vector<16x1xf32>
      %255 = vector.extract_strided_slice %16 {offsets = [20, 0], sizes = [1, 16], strides = [1, 1]} : vector<64x16xf32> to vector<1x16xf32>
      %256 = vector.broadcast %254 : vector<16x1xf32> to vector<16x16xf32>
      %257 = vector.broadcast %255 : vector<1x16xf32> to vector<16x16xf32>
      %258 = arith.addf %256, %257 : vector<16x16xf32>
      %259 = math.absf %258 : vector<16x16xf32>
      %260 = vector.broadcast %253 : f32 to vector<16x16xf32>
      %261 = arith.mulf %260, %259 : vector<16x16xf32>
      %262 = arith.addf %252, %261 : vector<16x16xf32>
      %c21 = arith.constant 21 : index
      %263 = memref.load %arg9[%c21] : memref<64xf32, #tpu.memory_space<smem>>
      %264 = vector.extract_strided_slice %15 {offsets = [0, 21], sizes = [16, 1], strides = [1, 1]} : vector<16x64xf32> to vector<16x1xf32>
      %265 = vector.extract_strided_slice %16 {offsets = [21, 0], sizes = [1, 16], strides = [1, 1]} : vector<64x16xf32> to vector<1x16xf32>
      %266 = vector.broadcast %264 : vector<16x1xf32> to vector<16x16xf32>
      %267 = vector.broadcast %265 : vector<1x16xf32> to vector<16x16xf32>
      %268 = arith.addf %266, %267 : vector<16x16xf32>
      %269 = math.absf %268 : vector<16x16xf32>
      %270 = vector.broadcast %263 : f32 to vector<16x16xf32>
      %271 = arith.mulf %270, %269 : vector<16x16xf32>
      %272 = arith.addf %262, %271 : vector<16x16xf32>
      %c22 = arith.constant 22 : index
      %273 = memref.load %arg9[%c22] : memref<64xf32, #tpu.memory_space<smem>>
      %274 = vector.extract_strided_slice %15 {offsets = [0, 22], sizes = [16, 1], strides = [1, 1]} : vector<16x64xf32> to vector<16x1xf32>
      %275 = vector.extract_strided_slice %16 {offsets = [22, 0], sizes = [1, 16], strides = [1, 1]} : vector<64x16xf32> to vector<1x16xf32>
      %276 = vector.broadcast %274 : vector<16x1xf32> to vector<16x16xf32>
      %277 = vector.broadcast %275 : vector<1x16xf32> to vector<16x16xf32>
      %278 = arith.addf %276, %277 : vector<16x16xf32>
      %279 = math.absf %278 : vector<16x16xf32>
      %280 = vector.broadcast %273 : f32 to vector<16x16xf32>
      %281 = arith.mulf %280, %279 : vector<16x16xf32>
      %282 = arith.addf %272, %281 : vector<16x16xf32>
      %c23 = arith.constant 23 : index
      %283 = memref.load %arg9[%c23] : memref<64xf32, #tpu.memory_space<smem>>
      %284 = vector.extract_strided_slice %15 {offsets = [0, 23], sizes = [16, 1], strides = [1, 1]} : vector<16x64xf32> to vector<16x1xf32>
      %285 = vector.extract_strided_slice %16 {offsets = [23, 0], sizes = [1, 16], strides = [1, 1]} : vector<64x16xf32> to vector<1x16xf32>
      %286 = vector.broadcast %284 : vector<16x1xf32> to vector<16x16xf32>
      %287 = vector.broadcast %285 : vector<1x16xf32> to vector<16x16xf32>
      %288 = arith.addf %286, %287 : vector<16x16xf32>
      %289 = math.absf %288 : vector<16x16xf32>
      %290 = vector.broadcast %283 : f32 to vector<16x16xf32>
      %291 = arith.mulf %290, %289 : vector<16x16xf32>
      %292 = arith.addf %282, %291 : vector<16x16xf32>
      %c24 = arith.constant 24 : index
      %293 = memref.load %arg9[%c24] : memref<64xf32, #tpu.memory_space<smem>>
      %294 = vector.extract_strided_slice %15 {offsets = [0, 24], sizes = [16, 1], strides = [1, 1]} : vector<16x64xf32> to vector<16x1xf32>
      %295 = vector.extract_strided_slice %16 {offsets = [24, 0], sizes = [1, 16], strides = [1, 1]} : vector<64x16xf32> to vector<1x16xf32>
      %296 = vector.broadcast %294 : vector<16x1xf32> to vector<16x16xf32>
      %297 = vector.broadcast %295 : vector<1x16xf32> to vector<16x16xf32>
      %298 = arith.addf %296, %297 : vector<16x16xf32>
      %299 = math.absf %298 : vector<16x16xf32>
      %300 = vector.broadcast %293 : f32 to vector<16x16xf32>
      %301 = arith.mulf %300, %299 : vector<16x16xf32>
      %302 = arith.addf %292, %301 : vector<16x16xf32>
      %c25 = arith.constant 25 : index
      %303 = memref.load %arg9[%c25] : memref<64xf32, #tpu.memory_space<smem>>
      %304 = vector.extract_strided_slice %15 {offsets = [0, 25], sizes = [16, 1], strides = [1, 1]} : vector<16x64xf32> to vector<16x1xf32>
      %305 = vector.extract_strided_slice %16 {offsets = [25, 0], sizes = [1, 16], strides = [1, 1]} : vector<64x16xf32> to vector<1x16xf32>
      %306 = vector.broadcast %304 : vector<16x1xf32> to vector<16x16xf32>
      %307 = vector.broadcast %305 : vector<1x16xf32> to vector<16x16xf32>
      %308 = arith.addf %306, %307 : vector<16x16xf32>
      %309 = math.absf %308 : vector<16x16xf32>
      %310 = vector.broadcast %303 : f32 to vector<16x16xf32>
      %311 = arith.mulf %310, %309 : vector<16x16xf32>
      %312 = arith.addf %302, %311 : vector<16x16xf32>
      %c26 = arith.constant 26 : index
      %313 = memref.load %arg9[%c26] : memref<64xf32, #tpu.memory_space<smem>>
      %314 = vector.extract_strided_slice %15 {offsets = [0, 26], sizes = [16, 1], strides = [1, 1]} : vector<16x64xf32> to vector<16x1xf32>
      %315 = vector.extract_strided_slice %16 {offsets = [26, 0], sizes = [1, 16], strides = [1, 1]} : vector<64x16xf32> to vector<1x16xf32>
      %316 = vector.broadcast %314 : vector<16x1xf32> to vector<16x16xf32>
      %317 = vector.broadcast %315 : vector<1x16xf32> to vector<16x16xf32>
      %318 = arith.addf %316, %317 : vector<16x16xf32>
      %319 = math.absf %318 : vector<16x16xf32>
      %320 = vector.broadcast %313 : f32 to vector<16x16xf32>
      %321 = arith.mulf %320, %319 : vector<16x16xf32>
      %322 = arith.addf %312, %321 : vector<16x16xf32>
      %c27 = arith.constant 27 : index
      %323 = memref.load %arg9[%c27] : memref<64xf32, #tpu.memory_space<smem>>
      %324 = vector.extract_strided_slice %15 {offsets = [0, 27], sizes = [16, 1], strides = [1, 1]} : vector<16x64xf32> to vector<16x1xf32>
      %325 = vector.extract_strided_slice %16 {offsets = [27, 0], sizes = [1, 16], strides = [1, 1]} : vector<64x16xf32> to vector<1x16xf32>
      %326 = vector.broadcast %324 : vector<16x1xf32> to vector<16x16xf32>
      %327 = vector.broadcast %325 : vector<1x16xf32> to vector<16x16xf32>
      %328 = arith.addf %326, %327 : vector<16x16xf32>
      %329 = math.absf %328 : vector<16x16xf32>
      %330 = vector.broadcast %323 : f32 to vector<16x16xf32>
      %331 = arith.mulf %330, %329 : vector<16x16xf32>
      %332 = arith.addf %322, %331 : vector<16x16xf32>
      %c28 = arith.constant 28 : index
      %333 = memref.load %arg9[%c28] : memref<64xf32, #tpu.memory_space<smem>>
      %334 = vector.extract_strided_slice %15 {offsets = [0, 28], sizes = [16, 1], strides = [1, 1]} : vector<16x64xf32> to vector<16x1xf32>
      %335 = vector.extract_strided_slice %16 {offsets = [28, 0], sizes = [1, 16], strides = [1, 1]} : vector<64x16xf32> to vector<1x16xf32>
      %336 = vector.broadcast %334 : vector<16x1xf32> to vector<16x16xf32>
      %337 = vector.broadcast %335 : vector<1x16xf32> to vector<16x16xf32>
      %338 = arith.addf %336, %337 : vector<16x16xf32>
      %339 = math.absf %338 : vector<16x16xf32>
      %340 = vector.broadcast %333 : f32 to vector<16x16xf32>
      %341 = arith.mulf %340, %339 : vector<16x16xf32>
      %342 = arith.addf %332, %341 : vector<16x16xf32>
      %c29 = arith.constant 29 : index
      %343 = memref.load %arg9[%c29] : memref<64xf32, #tpu.memory_space<smem>>
      %344 = vector.extract_strided_slice %15 {offsets = [0, 29], sizes = [16, 1], strides = [1, 1]} : vector<16x64xf32> to vector<16x1xf32>
      %345 = vector.extract_strided_slice %16 {offsets = [29, 0], sizes = [1, 16], strides = [1, 1]} : vector<64x16xf32> to vector<1x16xf32>
      %346 = vector.broadcast %344 : vector<16x1xf32> to vector<16x16xf32>
      %347 = vector.broadcast %345 : vector<1x16xf32> to vector<16x16xf32>
      %348 = arith.addf %346, %347 : vector<16x16xf32>
      %349 = math.absf %348 : vector<16x16xf32>
      %350 = vector.broadcast %343 : f32 to vector<16x16xf32>
      %351 = arith.mulf %350, %349 : vector<16x16xf32>
      %352 = arith.addf %342, %351 : vector<16x16xf32>
      %c30 = arith.constant 30 : index
      %353 = memref.load %arg9[%c30] : memref<64xf32, #tpu.memory_space<smem>>
      %354 = vector.extract_strided_slice %15 {offsets = [0, 30], sizes = [16, 1], strides = [1, 1]} : vector<16x64xf32> to vector<16x1xf32>
      %355 = vector.extract_strided_slice %16 {offsets = [30, 0], sizes = [1, 16], strides = [1, 1]} : vector<64x16xf32> to vector<1x16xf32>
      %356 = vector.broadcast %354 : vector<16x1xf32> to vector<16x16xf32>
      %357 = vector.broadcast %355 : vector<1x16xf32> to vector<16x16xf32>
      %358 = arith.addf %356, %357 : vector<16x16xf32>
      %359 = math.absf %358 : vector<16x16xf32>
      %360 = vector.broadcast %353 : f32 to vector<16x16xf32>
      %361 = arith.mulf %360, %359 : vector<16x16xf32>
      %362 = arith.addf %352, %361 : vector<16x16xf32>
      %c31 = arith.constant 31 : index
      %363 = memref.load %arg9[%c31] : memref<64xf32, #tpu.memory_space<smem>>
      %364 = vector.extract_strided_slice %15 {offsets = [0, 31], sizes = [16, 1], strides = [1, 1]} : vector<16x64xf32> to vector<16x1xf32>
      %365 = vector.extract_strided_slice %16 {offsets = [31, 0], sizes = [1, 16], strides = [1, 1]} : vector<64x16xf32> to vector<1x16xf32>
      %366 = vector.broadcast %364 : vector<16x1xf32> to vector<16x16xf32>
      %367 = vector.broadcast %365 : vector<1x16xf32> to vector<16x16xf32>
      %368 = arith.addf %366, %367 : vector<16x16xf32>
      %369 = math.absf %368 : vector<16x16xf32>
      %370 = vector.broadcast %363 : f32 to vector<16x16xf32>
      %371 = arith.mulf %370, %369 : vector<16x16xf32>
      %372 = arith.addf %362, %371 : vector<16x16xf32>
      %373 = vector.extract_strided_slice %20 {offsets = [0, 1], sizes = [16, 1], strides = [1, 1]} : vector<16x4xf32> to vector<16x1xf32>
      %cst_24 = arith.constant dense<0xFF800000> : vector<16xf32>
      %374 = vector.multi_reduction <maximumf>, %372, %cst_24 [1] : vector<16x16xf32> to vector<16xf32>
      %375 = vector.shape_cast %374 : vector<16xf32> to vector<16x1xf32>
      %376 = arith.maximumf %373, %375 : vector<16x1xf32>
      %377 = arith.subf %373, %376 : vector<16x1xf32>
      %378 = math.exp %377 : vector<16x1xf32>
      %379 = vector.broadcast %376 : vector<16x1xf32> to vector<16x16xf32>
      %380 = arith.subf %372, %379 : vector<16x16xf32>
      %381 = math.exp %380 : vector<16x16xf32>
      %cst_25 = arith.constant 0.000000e+00 : f32
      %382 = vector.broadcast %cst_25 : f32 to vector<16x16xf32>
      %383 = arith.select %14, %381, %382 : vector<16x16xi1>, vector<16x16xf32>
      %384 = vector.extract_strided_slice %21 {offsets = [0, 1], sizes = [16, 1], strides = [1, 1]} : vector<16x4xf32> to vector<16x1xf32>
      %385 = arith.mulf %378, %384 : vector<16x1xf32>
      %cst_26 = arith.constant dense<0.000000e+00> : vector<16xf32>
      %386 = vector.multi_reduction <add>, %383, %cst_26 [1] : vector<16x16xf32> to vector<16xf32>
      %387 = vector.shape_cast %386 : vector<16xf32> to vector<16x1xf32>
      %388 = arith.addf %385, %387 : vector<16x1xf32>
      %389 = vector.shape_cast %378 : vector<16x1xf32> to vector<16x1xf32>
      %390 = vector.broadcast %389 : vector<16x1xf32> to vector<16x16xf32>
      %391 = arith.truncf %383 : vector<16x16xf32> to vector<16x16xbf16>
      %392 = vector.extract_strided_slice %17 {offsets = [0, 16], sizes = [16, 16], strides = [1, 1]} : vector<16x64xbf16> to vector<16x16xbf16>
      %cst_27 = arith.constant dense<0.000000e+00> : vector<16x16xf32>
      %393 = tpu.matmul %391, %392, %cst_27 {dimension_numbers = #tpu.dot_dimension_numbers<[1], [0], [0], [1], [0, 0, 1, 1], [], []>} : vector<16x16xbf16>, vector<16x16xbf16>, vector<16x16xf32> -> vector<16x16xf32>
      %394 = vector.extract_strided_slice %18 {offsets = [0, 2], sizes = [16, 1], strides = [1, 1]} : vector<16x4xf32> to vector<16x1xf32>
      %395 = vector.extract_strided_slice %19 {offsets = [2, 0], sizes = [1, 16], strides = [1, 1]} : vector<4x16xf32> to vector<1x16xf32>
      %396 = vector.broadcast %394 : vector<16x1xf32> to vector<16x16xf32>
      %397 = vector.broadcast %395 : vector<1x16xf32> to vector<16x16xf32>
      %398 = arith.addf %396, %397 : vector<16x16xf32>
      %c32 = arith.constant 32 : index
      %399 = memref.load %arg9[%c32] : memref<64xf32, #tpu.memory_space<smem>>
      %400 = vector.extract_strided_slice %15 {offsets = [0, 32], sizes = [16, 1], strides = [1, 1]} : vector<16x64xf32> to vector<16x1xf32>
      %401 = vector.extract_strided_slice %16 {offsets = [32, 0], sizes = [1, 16], strides = [1, 1]} : vector<64x16xf32> to vector<1x16xf32>
      %402 = vector.broadcast %400 : vector<16x1xf32> to vector<16x16xf32>
      %403 = vector.broadcast %401 : vector<1x16xf32> to vector<16x16xf32>
      %404 = arith.addf %402, %403 : vector<16x16xf32>
      %405 = math.absf %404 : vector<16x16xf32>
      %406 = vector.broadcast %399 : f32 to vector<16x16xf32>
      %407 = arith.mulf %406, %405 : vector<16x16xf32>
      %408 = arith.addf %398, %407 : vector<16x16xf32>
      %c33 = arith.constant 33 : index
      %409 = memref.load %arg9[%c33] : memref<64xf32, #tpu.memory_space<smem>>
      %410 = vector.extract_strided_slice %15 {offsets = [0, 33], sizes = [16, 1], strides = [1, 1]} : vector<16x64xf32> to vector<16x1xf32>
      %411 = vector.extract_strided_slice %16 {offsets = [33, 0], sizes = [1, 16], strides = [1, 1]} : vector<64x16xf32> to vector<1x16xf32>
      %412 = vector.broadcast %410 : vector<16x1xf32> to vector<16x16xf32>
      %413 = vector.broadcast %411 : vector<1x16xf32> to vector<16x16xf32>
      %414 = arith.addf %412, %413 : vector<16x16xf32>
      %415 = math.absf %414 : vector<16x16xf32>
      %416 = vector.broadcast %409 : f32 to vector<16x16xf32>
      %417 = arith.mulf %416, %415 : vector<16x16xf32>
      %418 = arith.addf %408, %417 : vector<16x16xf32>
      %c34 = arith.constant 34 : index
      %419 = memref.load %arg9[%c34] : memref<64xf32, #tpu.memory_space<smem>>
      %420 = vector.extract_strided_slice %15 {offsets = [0, 34], sizes = [16, 1], strides = [1, 1]} : vector<16x64xf32> to vector<16x1xf32>
      %421 = vector.extract_strided_slice %16 {offsets = [34, 0], sizes = [1, 16], strides = [1, 1]} : vector<64x16xf32> to vector<1x16xf32>
      %422 = vector.broadcast %420 : vector<16x1xf32> to vector<16x16xf32>
      %423 = vector.broadcast %421 : vector<1x16xf32> to vector<16x16xf32>
      %424 = arith.addf %422, %423 : vector<16x16xf32>
      %425 = math.absf %424 : vector<16x16xf32>
      %426 = vector.broadcast %419 : f32 to vector<16x16xf32>
      %427 = arith.mulf %426, %425 : vector<16x16xf32>
      %428 = arith.addf %418, %427 : vector<16x16xf32>
      %c35 = arith.constant 35 : index
      %429 = memref.load %arg9[%c35] : memref<64xf32, #tpu.memory_space<smem>>
      %430 = vector.extract_strided_slice %15 {offsets = [0, 35], sizes = [16, 1], strides = [1, 1]} : vector<16x64xf32> to vector<16x1xf32>
      %431 = vector.extract_strided_slice %16 {offsets = [35, 0], sizes = [1, 16], strides = [1, 1]} : vector<64x16xf32> to vector<1x16xf32>
      %432 = vector.broadcast %430 : vector<16x1xf32> to vector<16x16xf32>
      %433 = vector.broadcast %431 : vector<1x16xf32> to vector<16x16xf32>
      %434 = arith.addf %432, %433 : vector<16x16xf32>
      %435 = math.absf %434 : vector<16x16xf32>
      %436 = vector.broadcast %429 : f32 to vector<16x16xf32>
      %437 = arith.mulf %436, %435 : vector<16x16xf32>
      %438 = arith.addf %428, %437 : vector<16x16xf32>
      %c36 = arith.constant 36 : index
      %439 = memref.load %arg9[%c36] : memref<64xf32, #tpu.memory_space<smem>>
      %440 = vector.extract_strided_slice %15 {offsets = [0, 36], sizes = [16, 1], strides = [1, 1]} : vector<16x64xf32> to vector<16x1xf32>
      %441 = vector.extract_strided_slice %16 {offsets = [36, 0], sizes = [1, 16], strides = [1, 1]} : vector<64x16xf32> to vector<1x16xf32>
      %442 = vector.broadcast %440 : vector<16x1xf32> to vector<16x16xf32>
      %443 = vector.broadcast %441 : vector<1x16xf32> to vector<16x16xf32>
      %444 = arith.addf %442, %443 : vector<16x16xf32>
      %445 = math.absf %444 : vector<16x16xf32>
      %446 = vector.broadcast %439 : f32 to vector<16x16xf32>
      %447 = arith.mulf %446, %445 : vector<16x16xf32>
      %448 = arith.addf %438, %447 : vector<16x16xf32>
      %c37 = arith.constant 37 : index
      %449 = memref.load %arg9[%c37] : memref<64xf32, #tpu.memory_space<smem>>
      %450 = vector.extract_strided_slice %15 {offsets = [0, 37], sizes = [16, 1], strides = [1, 1]} : vector<16x64xf32> to vector<16x1xf32>
      %451 = vector.extract_strided_slice %16 {offsets = [37, 0], sizes = [1, 16], strides = [1, 1]} : vector<64x16xf32> to vector<1x16xf32>
      %452 = vector.broadcast %450 : vector<16x1xf32> to vector<16x16xf32>
      %453 = vector.broadcast %451 : vector<1x16xf32> to vector<16x16xf32>
      %454 = arith.addf %452, %453 : vector<16x16xf32>
      %455 = math.absf %454 : vector<16x16xf32>
      %456 = vector.broadcast %449 : f32 to vector<16x16xf32>
      %457 = arith.mulf %456, %455 : vector<16x16xf32>
      %458 = arith.addf %448, %457 : vector<16x16xf32>
      %c38 = arith.constant 38 : index
      %459 = memref.load %arg9[%c38] : memref<64xf32, #tpu.memory_space<smem>>
      %460 = vector.extract_strided_slice %15 {offsets = [0, 38], sizes = [16, 1], strides = [1, 1]} : vector<16x64xf32> to vector<16x1xf32>
      %461 = vector.extract_strided_slice %16 {offsets = [38, 0], sizes = [1, 16], strides = [1, 1]} : vector<64x16xf32> to vector<1x16xf32>
      %462 = vector.broadcast %460 : vector<16x1xf32> to vector<16x16xf32>
      %463 = vector.broadcast %461 : vector<1x16xf32> to vector<16x16xf32>
      %464 = arith.addf %462, %463 : vector<16x16xf32>
      %465 = math.absf %464 : vector<16x16xf32>
      %466 = vector.broadcast %459 : f32 to vector<16x16xf32>
      %467 = arith.mulf %466, %465 : vector<16x16xf32>
      %468 = arith.addf %458, %467 : vector<16x16xf32>
      %c39 = arith.constant 39 : index
      %469 = memref.load %arg9[%c39] : memref<64xf32, #tpu.memory_space<smem>>
      %470 = vector.extract_strided_slice %15 {offsets = [0, 39], sizes = [16, 1], strides = [1, 1]} : vector<16x64xf32> to vector<16x1xf32>
      %471 = vector.extract_strided_slice %16 {offsets = [39, 0], sizes = [1, 16], strides = [1, 1]} : vector<64x16xf32> to vector<1x16xf32>
      %472 = vector.broadcast %470 : vector<16x1xf32> to vector<16x16xf32>
      %473 = vector.broadcast %471 : vector<1x16xf32> to vector<16x16xf32>
      %474 = arith.addf %472, %473 : vector<16x16xf32>
      %475 = math.absf %474 : vector<16x16xf32>
      %476 = vector.broadcast %469 : f32 to vector<16x16xf32>
      %477 = arith.mulf %476, %475 : vector<16x16xf32>
      %478 = arith.addf %468, %477 : vector<16x16xf32>
      %c40 = arith.constant 40 : index
      %479 = memref.load %arg9[%c40] : memref<64xf32, #tpu.memory_space<smem>>
      %480 = vector.extract_strided_slice %15 {offsets = [0, 40], sizes = [16, 1], strides = [1, 1]} : vector<16x64xf32> to vector<16x1xf32>
      %481 = vector.extract_strided_slice %16 {offsets = [40, 0], sizes = [1, 16], strides = [1, 1]} : vector<64x16xf32> to vector<1x16xf32>
      %482 = vector.broadcast %480 : vector<16x1xf32> to vector<16x16xf32>
      %483 = vector.broadcast %481 : vector<1x16xf32> to vector<16x16xf32>
      %484 = arith.addf %482, %483 : vector<16x16xf32>
      %485 = math.absf %484 : vector<16x16xf32>
      %486 = vector.broadcast %479 : f32 to vector<16x16xf32>
      %487 = arith.mulf %486, %485 : vector<16x16xf32>
      %488 = arith.addf %478, %487 : vector<16x16xf32>
      %c41 = arith.constant 41 : index
      %489 = memref.load %arg9[%c41] : memref<64xf32, #tpu.memory_space<smem>>
      %490 = vector.extract_strided_slice %15 {offsets = [0, 41], sizes = [16, 1], strides = [1, 1]} : vector<16x64xf32> to vector<16x1xf32>
      %491 = vector.extract_strided_slice %16 {offsets = [41, 0], sizes = [1, 16], strides = [1, 1]} : vector<64x16xf32> to vector<1x16xf32>
      %492 = vector.broadcast %490 : vector<16x1xf32> to vector<16x16xf32>
      %493 = vector.broadcast %491 : vector<1x16xf32> to vector<16x16xf32>
      %494 = arith.addf %492, %493 : vector<16x16xf32>
      %495 = math.absf %494 : vector<16x16xf32>
      %496 = vector.broadcast %489 : f32 to vector<16x16xf32>
      %497 = arith.mulf %496, %495 : vector<16x16xf32>
      %498 = arith.addf %488, %497 : vector<16x16xf32>
      %c42 = arith.constant 42 : index
      %499 = memref.load %arg9[%c42] : memref<64xf32, #tpu.memory_space<smem>>
      %500 = vector.extract_strided_slice %15 {offsets = [0, 42], sizes = [16, 1], strides = [1, 1]} : vector<16x64xf32> to vector<16x1xf32>
      %501 = vector.extract_strided_slice %16 {offsets = [42, 0], sizes = [1, 16], strides = [1, 1]} : vector<64x16xf32> to vector<1x16xf32>
      %502 = vector.broadcast %500 : vector<16x1xf32> to vector<16x16xf32>
      %503 = vector.broadcast %501 : vector<1x16xf32> to vector<16x16xf32>
      %504 = arith.addf %502, %503 : vector<16x16xf32>
      %505 = math.absf %504 : vector<16x16xf32>
      %506 = vector.broadcast %499 : f32 to vector<16x16xf32>
      %507 = arith.mulf %506, %505 : vector<16x16xf32>
      %508 = arith.addf %498, %507 : vector<16x16xf32>
      %c43 = arith.constant 43 : index
      %509 = memref.load %arg9[%c43] : memref<64xf32, #tpu.memory_space<smem>>
      %510 = vector.extract_strided_slice %15 {offsets = [0, 43], sizes = [16, 1], strides = [1, 1]} : vector<16x64xf32> to vector<16x1xf32>
      %511 = vector.extract_strided_slice %16 {offsets = [43, 0], sizes = [1, 16], strides = [1, 1]} : vector<64x16xf32> to vector<1x16xf32>
      %512 = vector.broadcast %510 : vector<16x1xf32> to vector<16x16xf32>
      %513 = vector.broadcast %511 : vector<1x16xf32> to vector<16x16xf32>
      %514 = arith.addf %512, %513 : vector<16x16xf32>
      %515 = math.absf %514 : vector<16x16xf32>
      %516 = vector.broadcast %509 : f32 to vector<16x16xf32>
      %517 = arith.mulf %516, %515 : vector<16x16xf32>
      %518 = arith.addf %508, %517 : vector<16x16xf32>
      %c44 = arith.constant 44 : index
      %519 = memref.load %arg9[%c44] : memref<64xf32, #tpu.memory_space<smem>>
      %520 = vector.extract_strided_slice %15 {offsets = [0, 44], sizes = [16, 1], strides = [1, 1]} : vector<16x64xf32> to vector<16x1xf32>
      %521 = vector.extract_strided_slice %16 {offsets = [44, 0], sizes = [1, 16], strides = [1, 1]} : vector<64x16xf32> to vector<1x16xf32>
      %522 = vector.broadcast %520 : vector<16x1xf32> to vector<16x16xf32>
      %523 = vector.broadcast %521 : vector<1x16xf32> to vector<16x16xf32>
      %524 = arith.addf %522, %523 : vector<16x16xf32>
      %525 = math.absf %524 : vector<16x16xf32>
      %526 = vector.broadcast %519 : f32 to vector<16x16xf32>
      %527 = arith.mulf %526, %525 : vector<16x16xf32>
      %528 = arith.addf %518, %527 : vector<16x16xf32>
      %c45 = arith.constant 45 : index
      %529 = memref.load %arg9[%c45] : memref<64xf32, #tpu.memory_space<smem>>
      %530 = vector.extract_strided_slice %15 {offsets = [0, 45], sizes = [16, 1], strides = [1, 1]} : vector<16x64xf32> to vector<16x1xf32>
      %531 = vector.extract_strided_slice %16 {offsets = [45, 0], sizes = [1, 16], strides = [1, 1]} : vector<64x16xf32> to vector<1x16xf32>
      %532 = vector.broadcast %530 : vector<16x1xf32> to vector<16x16xf32>
      %533 = vector.broadcast %531 : vector<1x16xf32> to vector<16x16xf32>
      %534 = arith.addf %532, %533 : vector<16x16xf32>
      %535 = math.absf %534 : vector<16x16xf32>
      %536 = vector.broadcast %529 : f32 to vector<16x16xf32>
      %537 = arith.mulf %536, %535 : vector<16x16xf32>
      %538 = arith.addf %528, %537 : vector<16x16xf32>
      %c46 = arith.constant 46 : index
      %539 = memref.load %arg9[%c46] : memref<64xf32, #tpu.memory_space<smem>>
      %540 = vector.extract_strided_slice %15 {offsets = [0, 46], sizes = [16, 1], strides = [1, 1]} : vector<16x64xf32> to vector<16x1xf32>
      %541 = vector.extract_strided_slice %16 {offsets = [46, 0], sizes = [1, 16], strides = [1, 1]} : vector<64x16xf32> to vector<1x16xf32>
      %542 = vector.broadcast %540 : vector<16x1xf32> to vector<16x16xf32>
      %543 = vector.broadcast %541 : vector<1x16xf32> to vector<16x16xf32>
      %544 = arith.addf %542, %543 : vector<16x16xf32>
      %545 = math.absf %544 : vector<16x16xf32>
      %546 = vector.broadcast %539 : f32 to vector<16x16xf32>
      %547 = arith.mulf %546, %545 : vector<16x16xf32>
      %548 = arith.addf %538, %547 : vector<16x16xf32>
      %c47 = arith.constant 47 : index
      %549 = memref.load %arg9[%c47] : memref<64xf32, #tpu.memory_space<smem>>
      %550 = vector.extract_strided_slice %15 {offsets = [0, 47], sizes = [16, 1], strides = [1, 1]} : vector<16x64xf32> to vector<16x1xf32>
      %551 = vector.extract_strided_slice %16 {offsets = [47, 0], sizes = [1, 16], strides = [1, 1]} : vector<64x16xf32> to vector<1x16xf32>
      %552 = vector.broadcast %550 : vector<16x1xf32> to vector<16x16xf32>
      %553 = vector.broadcast %551 : vector<1x16xf32> to vector<16x16xf32>
      %554 = arith.addf %552, %553 : vector<16x16xf32>
      %555 = math.absf %554 : vector<16x16xf32>
      %556 = vector.broadcast %549 : f32 to vector<16x16xf32>
      %557 = arith.mulf %556, %555 : vector<16x16xf32>
      %558 = arith.addf %548, %557 : vector<16x16xf32>
      %559 = vector.extract_strided_slice %20 {offsets = [0, 2], sizes = [16, 1], strides = [1, 1]} : vector<16x4xf32> to vector<16x1xf32>
      %cst_28 = arith.constant dense<0xFF800000> : vector<16xf32>
      %560 = vector.multi_reduction <maximumf>, %558, %cst_28 [1] : vector<16x16xf32> to vector<16xf32>
      %561 = vector.shape_cast %560 : vector<16xf32> to vector<16x1xf32>
      %562 = arith.maximumf %559, %561 : vector<16x1xf32>
      %563 = arith.subf %559, %562 : vector<16x1xf32>
      %564 = math.exp %563 : vector<16x1xf32>
      %565 = vector.broadcast %562 : vector<16x1xf32> to vector<16x16xf32>
      %566 = arith.subf %558, %565 : vector<16x16xf32>
      %567 = math.exp %566 : vector<16x16xf32>
      %cst_29 = arith.constant 0.000000e+00 : f32
      %568 = vector.broadcast %cst_29 : f32 to vector<16x16xf32>
      %569 = arith.select %14, %567, %568 : vector<16x16xi1>, vector<16x16xf32>
      %570 = vector.extract_strided_slice %21 {offsets = [0, 2], sizes = [16, 1], strides = [1, 1]} : vector<16x4xf32> to vector<16x1xf32>
      %571 = arith.mulf %564, %570 : vector<16x1xf32>
      %cst_30 = arith.constant dense<0.000000e+00> : vector<16xf32>
      %572 = vector.multi_reduction <add>, %569, %cst_30 [1] : vector<16x16xf32> to vector<16xf32>
      %573 = vector.shape_cast %572 : vector<16xf32> to vector<16x1xf32>
      %574 = arith.addf %571, %573 : vector<16x1xf32>
      %575 = vector.shape_cast %564 : vector<16x1xf32> to vector<16x1xf32>
      %576 = vector.broadcast %575 : vector<16x1xf32> to vector<16x16xf32>
      %577 = arith.truncf %569 : vector<16x16xf32> to vector<16x16xbf16>
      %578 = vector.extract_strided_slice %17 {offsets = [0, 32], sizes = [16, 16], strides = [1, 1]} : vector<16x64xbf16> to vector<16x16xbf16>
      %cst_31 = arith.constant dense<0.000000e+00> : vector<16x16xf32>
      %579 = tpu.matmul %577, %578, %cst_31 {dimension_numbers = #tpu.dot_dimension_numbers<[1], [0], [0], [1], [0, 0, 1, 1], [], []>} : vector<16x16xbf16>, vector<16x16xbf16>, vector<16x16xf32> -> vector<16x16xf32>
      %580 = vector.extract_strided_slice %18 {offsets = [0, 3], sizes = [16, 1], strides = [1, 1]} : vector<16x4xf32> to vector<16x1xf32>
      %581 = vector.extract_strided_slice %19 {offsets = [3, 0], sizes = [1, 16], strides = [1, 1]} : vector<4x16xf32> to vector<1x16xf32>
      %582 = vector.broadcast %580 : vector<16x1xf32> to vector<16x16xf32>
      %583 = vector.broadcast %581 : vector<1x16xf32> to vector<16x16xf32>
      %584 = arith.addf %582, %583 : vector<16x16xf32>
      %c48 = arith.constant 48 : index
      %585 = memref.load %arg9[%c48] : memref<64xf32, #tpu.memory_space<smem>>
      %586 = vector.extract_strided_slice %15 {offsets = [0, 48], sizes = [16, 1], strides = [1, 1]} : vector<16x64xf32> to vector<16x1xf32>
      %587 = vector.extract_strided_slice %16 {offsets = [48, 0], sizes = [1, 16], strides = [1, 1]} : vector<64x16xf32> to vector<1x16xf32>
      %588 = vector.broadcast %586 : vector<16x1xf32> to vector<16x16xf32>
      %589 = vector.broadcast %587 : vector<1x16xf32> to vector<16x16xf32>
      %590 = arith.addf %588, %589 : vector<16x16xf32>
      %591 = math.absf %590 : vector<16x16xf32>
      %592 = vector.broadcast %585 : f32 to vector<16x16xf32>
      %593 = arith.mulf %592, %591 : vector<16x16xf32>
      %594 = arith.addf %584, %593 : vector<16x16xf32>
      %c49 = arith.constant 49 : index
      %595 = memref.load %arg9[%c49] : memref<64xf32, #tpu.memory_space<smem>>
      %596 = vector.extract_strided_slice %15 {offsets = [0, 49], sizes = [16, 1], strides = [1, 1]} : vector<16x64xf32> to vector<16x1xf32>
      %597 = vector.extract_strided_slice %16 {offsets = [49, 0], sizes = [1, 16], strides = [1, 1]} : vector<64x16xf32> to vector<1x16xf32>
      %598 = vector.broadcast %596 : vector<16x1xf32> to vector<16x16xf32>
      %599 = vector.broadcast %597 : vector<1x16xf32> to vector<16x16xf32>
      %600 = arith.addf %598, %599 : vector<16x16xf32>
      %601 = math.absf %600 : vector<16x16xf32>
      %602 = vector.broadcast %595 : f32 to vector<16x16xf32>
      %603 = arith.mulf %602, %601 : vector<16x16xf32>
      %604 = arith.addf %594, %603 : vector<16x16xf32>
      %c50 = arith.constant 50 : index
      %605 = memref.load %arg9[%c50] : memref<64xf32, #tpu.memory_space<smem>>
      %606 = vector.extract_strided_slice %15 {offsets = [0, 50], sizes = [16, 1], strides = [1, 1]} : vector<16x64xf32> to vector<16x1xf32>
      %607 = vector.extract_strided_slice %16 {offsets = [50, 0], sizes = [1, 16], strides = [1, 1]} : vector<64x16xf32> to vector<1x16xf32>
      %608 = vector.broadcast %606 : vector<16x1xf32> to vector<16x16xf32>
      %609 = vector.broadcast %607 : vector<1x16xf32> to vector<16x16xf32>
      %610 = arith.addf %608, %609 : vector<16x16xf32>
      %611 = math.absf %610 : vector<16x16xf32>
      %612 = vector.broadcast %605 : f32 to vector<16x16xf32>
      %613 = arith.mulf %612, %611 : vector<16x16xf32>
      %614 = arith.addf %604, %613 : vector<16x16xf32>
      %c51 = arith.constant 51 : index
      %615 = memref.load %arg9[%c51] : memref<64xf32, #tpu.memory_space<smem>>
      %616 = vector.extract_strided_slice %15 {offsets = [0, 51], sizes = [16, 1], strides = [1, 1]} : vector<16x64xf32> to vector<16x1xf32>
      %617 = vector.extract_strided_slice %16 {offsets = [51, 0], sizes = [1, 16], strides = [1, 1]} : vector<64x16xf32> to vector<1x16xf32>
      %618 = vector.broadcast %616 : vector<16x1xf32> to vector<16x16xf32>
      %619 = vector.broadcast %617 : vector<1x16xf32> to vector<16x16xf32>
      %620 = arith.addf %618, %619 : vector<16x16xf32>
      %621 = math.absf %620 : vector<16x16xf32>
      %622 = vector.broadcast %615 : f32 to vector<16x16xf32>
      %623 = arith.mulf %622, %621 : vector<16x16xf32>
      %624 = arith.addf %614, %623 : vector<16x16xf32>
      %c52 = arith.constant 52 : index
      %625 = memref.load %arg9[%c52] : memref<64xf32, #tpu.memory_space<smem>>
      %626 = vector.extract_strided_slice %15 {offsets = [0, 52], sizes = [16, 1], strides = [1, 1]} : vector<16x64xf32> to vector<16x1xf32>
      %627 = vector.extract_strided_slice %16 {offsets = [52, 0], sizes = [1, 16], strides = [1, 1]} : vector<64x16xf32> to vector<1x16xf32>
      %628 = vector.broadcast %626 : vector<16x1xf32> to vector<16x16xf32>
      %629 = vector.broadcast %627 : vector<1x16xf32> to vector<16x16xf32>
      %630 = arith.addf %628, %629 : vector<16x16xf32>
      %631 = math.absf %630 : vector<16x16xf32>
      %632 = vector.broadcast %625 : f32 to vector<16x16xf32>
      %633 = arith.mulf %632, %631 : vector<16x16xf32>
      %634 = arith.addf %624, %633 : vector<16x16xf32>
      %c53 = arith.constant 53 : index
      %635 = memref.load %arg9[%c53] : memref<64xf32, #tpu.memory_space<smem>>
      %636 = vector.extract_strided_slice %15 {offsets = [0, 53], sizes = [16, 1], strides = [1, 1]} : vector<16x64xf32> to vector<16x1xf32>
      %637 = vector.extract_strided_slice %16 {offsets = [53, 0], sizes = [1, 16], strides = [1, 1]} : vector<64x16xf32> to vector<1x16xf32>
      %638 = vector.broadcast %636 : vector<16x1xf32> to vector<16x16xf32>
      %639 = vector.broadcast %637 : vector<1x16xf32> to vector<16x16xf32>
      %640 = arith.addf %638, %639 : vector<16x16xf32>
      %641 = math.absf %640 : vector<16x16xf32>
      %642 = vector.broadcast %635 : f32 to vector<16x16xf32>
      %643 = arith.mulf %642, %641 : vector<16x16xf32>
      %644 = arith.addf %634, %643 : vector<16x16xf32>
      %c54 = arith.constant 54 : index
      %645 = memref.load %arg9[%c54] : memref<64xf32, #tpu.memory_space<smem>>
      %646 = vector.extract_strided_slice %15 {offsets = [0, 54], sizes = [16, 1], strides = [1, 1]} : vector<16x64xf32> to vector<16x1xf32>
      %647 = vector.extract_strided_slice %16 {offsets = [54, 0], sizes = [1, 16], strides = [1, 1]} : vector<64x16xf32> to vector<1x16xf32>
      %648 = vector.broadcast %646 : vector<16x1xf32> to vector<16x16xf32>
      %649 = vector.broadcast %647 : vector<1x16xf32> to vector<16x16xf32>
      %650 = arith.addf %648, %649 : vector<16x16xf32>
      %651 = math.absf %650 : vector<16x16xf32>
      %652 = vector.broadcast %645 : f32 to vector<16x16xf32>
      %653 = arith.mulf %652, %651 : vector<16x16xf32>
      %654 = arith.addf %644, %653 : vector<16x16xf32>
      %c55 = arith.constant 55 : index
      %655 = memref.load %arg9[%c55] : memref<64xf32, #tpu.memory_space<smem>>
      %656 = vector.extract_strided_slice %15 {offsets = [0, 55], sizes = [16, 1], strides = [1, 1]} : vector<16x64xf32> to vector<16x1xf32>
      %657 = vector.extract_strided_slice %16 {offsets = [55, 0], sizes = [1, 16], strides = [1, 1]} : vector<64x16xf32> to vector<1x16xf32>
      %658 = vector.broadcast %656 : vector<16x1xf32> to vector<16x16xf32>
      %659 = vector.broadcast %657 : vector<1x16xf32> to vector<16x16xf32>
      %660 = arith.addf %658, %659 : vector<16x16xf32>
      %661 = math.absf %660 : vector<16x16xf32>
      %662 = vector.broadcast %655 : f32 to vector<16x16xf32>
      %663 = arith.mulf %662, %661 : vector<16x16xf32>
      %664 = arith.addf %654, %663 : vector<16x16xf32>
      %c56 = arith.constant 56 : index
      %665 = memref.load %arg9[%c56] : memref<64xf32, #tpu.memory_space<smem>>
      %666 = vector.extract_strided_slice %15 {offsets = [0, 56], sizes = [16, 1], strides = [1, 1]} : vector<16x64xf32> to vector<16x1xf32>
      %667 = vector.extract_strided_slice %16 {offsets = [56, 0], sizes = [1, 16], strides = [1, 1]} : vector<64x16xf32> to vector<1x16xf32>
      %668 = vector.broadcast %666 : vector<16x1xf32> to vector<16x16xf32>
      %669 = vector.broadcast %667 : vector<1x16xf32> to vector<16x16xf32>
      %670 = arith.addf %668, %669 : vector<16x16xf32>
      %671 = math.absf %670 : vector<16x16xf32>
      %672 = vector.broadcast %665 : f32 to vector<16x16xf32>
      %673 = arith.mulf %672, %671 : vector<16x16xf32>
      %674 = arith.addf %664, %673 : vector<16x16xf32>
      %c57 = arith.constant 57 : index
      %675 = memref.load %arg9[%c57] : memref<64xf32, #tpu.memory_space<smem>>
      %676 = vector.extract_strided_slice %15 {offsets = [0, 57], sizes = [16, 1], strides = [1, 1]} : vector<16x64xf32> to vector<16x1xf32>
      %677 = vector.extract_strided_slice %16 {offsets = [57, 0], sizes = [1, 16], strides = [1, 1]} : vector<64x16xf32> to vector<1x16xf32>
      %678 = vector.broadcast %676 : vector<16x1xf32> to vector<16x16xf32>
      %679 = vector.broadcast %677 : vector<1x16xf32> to vector<16x16xf32>
      %680 = arith.addf %678, %679 : vector<16x16xf32>
      %681 = math.absf %680 : vector<16x16xf32>
      %682 = vector.broadcast %675 : f32 to vector<16x16xf32>
      %683 = arith.mulf %682, %681 : vector<16x16xf32>
      %684 = arith.addf %674, %683 : vector<16x16xf32>
      %c58 = arith.constant 58 : index
      %685 = memref.load %arg9[%c58] : memref<64xf32, #tpu.memory_space<smem>>
      %686 = vector.extract_strided_slice %15 {offsets = [0, 58], sizes = [16, 1], strides = [1, 1]} : vector<16x64xf32> to vector<16x1xf32>
      %687 = vector.extract_strided_slice %16 {offsets = [58, 0], sizes = [1, 16], strides = [1, 1]} : vector<64x16xf32> to vector<1x16xf32>
      %688 = vector.broadcast %686 : vector<16x1xf32> to vector<16x16xf32>
      %689 = vector.broadcast %687 : vector<1x16xf32> to vector<16x16xf32>
      %690 = arith.addf %688, %689 : vector<16x16xf32>
      %691 = math.absf %690 : vector<16x16xf32>
      %692 = vector.broadcast %685 : f32 to vector<16x16xf32>
      %693 = arith.mulf %692, %691 : vector<16x16xf32>
      %694 = arith.addf %684, %693 : vector<16x16xf32>
      %c59 = arith.constant 59 : index
      %695 = memref.load %arg9[%c59] : memref<64xf32, #tpu.memory_space<smem>>
      %696 = vector.extract_strided_slice %15 {offsets = [0, 59], sizes = [16, 1], strides = [1, 1]} : vector<16x64xf32> to vector<16x1xf32>
      %697 = vector.extract_strided_slice %16 {offsets = [59, 0], sizes = [1, 16], strides = [1, 1]} : vector<64x16xf32> to vector<1x16xf32>
      %698 = vector.broadcast %696 : vector<16x1xf32> to vector<16x16xf32>
      %699 = vector.broadcast %697 : vector<1x16xf32> to vector<16x16xf32>
      %700 = arith.addf %698, %699 : vector<16x16xf32>
      %701 = math.absf %700 : vector<16x16xf32>
      %702 = vector.broadcast %695 : f32 to vector<16x16xf32>
      %703 = arith.mulf %702, %701 : vector<16x16xf32>
      %704 = arith.addf %694, %703 : vector<16x16xf32>
      %c60 = arith.constant 60 : index
      %705 = memref.load %arg9[%c60] : memref<64xf32, #tpu.memory_space<smem>>
      %706 = vector.extract_strided_slice %15 {offsets = [0, 60], sizes = [16, 1], strides = [1, 1]} : vector<16x64xf32> to vector<16x1xf32>
      %707 = vector.extract_strided_slice %16 {offsets = [60, 0], sizes = [1, 16], strides = [1, 1]} : vector<64x16xf32> to vector<1x16xf32>
      %708 = vector.broadcast %706 : vector<16x1xf32> to vector<16x16xf32>
      %709 = vector.broadcast %707 : vector<1x16xf32> to vector<16x16xf32>
      %710 = arith.addf %708, %709 : vector<16x16xf32>
      %711 = math.absf %710 : vector<16x16xf32>
      %712 = vector.broadcast %705 : f32 to vector<16x16xf32>
      %713 = arith.mulf %712, %711 : vector<16x16xf32>
      %714 = arith.addf %704, %713 : vector<16x16xf32>
      %c61 = arith.constant 61 : index
      %715 = memref.load %arg9[%c61] : memref<64xf32, #tpu.memory_space<smem>>
      %716 = vector.extract_strided_slice %15 {offsets = [0, 61], sizes = [16, 1], strides = [1, 1]} : vector<16x64xf32> to vector<16x1xf32>
      %717 = vector.extract_strided_slice %16 {offsets = [61, 0], sizes = [1, 16], strides = [1, 1]} : vector<64x16xf32> to vector<1x16xf32>
      %718 = vector.broadcast %716 : vector<16x1xf32> to vector<16x16xf32>
      %719 = vector.broadcast %717 : vector<1x16xf32> to vector<16x16xf32>
      %720 = arith.addf %718, %719 : vector<16x16xf32>
      %721 = math.absf %720 : vector<16x16xf32>
      %722 = vector.broadcast %715 : f32 to vector<16x16xf32>
      %723 = arith.mulf %722, %721 : vector<16x16xf32>
      %724 = arith.addf %714, %723 : vector<16x16xf32>
      %c62 = arith.constant 62 : index
      %725 = memref.load %arg9[%c62] : memref<64xf32, #tpu.memory_space<smem>>
      %726 = vector.extract_strided_slice %15 {offsets = [0, 62], sizes = [16, 1], strides = [1, 1]} : vector<16x64xf32> to vector<16x1xf32>
      %727 = vector.extract_strided_slice %16 {offsets = [62, 0], sizes = [1, 16], strides = [1, 1]} : vector<64x16xf32> to vector<1x16xf32>
      %728 = vector.broadcast %726 : vector<16x1xf32> to vector<16x16xf32>
      %729 = vector.broadcast %727 : vector<1x16xf32> to vector<16x16xf32>
      %730 = arith.addf %728, %729 : vector<16x16xf32>
      %731 = math.absf %730 : vector<16x16xf32>
      %732 = vector.broadcast %725 : f32 to vector<16x16xf32>
      %733 = arith.mulf %732, %731 : vector<16x16xf32>
      %734 = arith.addf %724, %733 : vector<16x16xf32>
      %c63 = arith.constant 63 : index
      %735 = memref.load %arg9[%c63] : memref<64xf32, #tpu.memory_space<smem>>
      %736 = vector.extract_strided_slice %15 {offsets = [0, 63], sizes = [16, 1], strides = [1, 1]} : vector<16x64xf32> to vector<16x1xf32>
      %737 = vector.extract_strided_slice %16 {offsets = [63, 0], sizes = [1, 16], strides = [1, 1]} : vector<64x16xf32> to vector<1x16xf32>
      %738 = vector.broadcast %736 : vector<16x1xf32> to vector<16x16xf32>
      %739 = vector.broadcast %737 : vector<1x16xf32> to vector<16x16xf32>
      %740 = arith.addf %738, %739 : vector<16x16xf32>
      %741 = math.absf %740 : vector<16x16xf32>
      %742 = vector.broadcast %735 : f32 to vector<16x16xf32>
      %743 = arith.mulf %742, %741 : vector<16x16xf32>
      %744 = arith.addf %734, %743 : vector<16x16xf32>
      %745 = vector.extract_strided_slice %20 {offsets = [0, 3], sizes = [16, 1], strides = [1, 1]} : vector<16x4xf32> to vector<16x1xf32>
      %cst_32 = arith.constant dense<0xFF800000> : vector<16xf32>
      %746 = vector.multi_reduction <maximumf>, %744, %cst_32 [1] : vector<16x16xf32> to vector<16xf32>
      %747 = vector.shape_cast %746 : vector<16xf32> to vector<16x1xf32>
      %748 = arith.maximumf %745, %747 : vector<16x1xf32>
      %749 = arith.subf %745, %748 : vector<16x1xf32>
      %750 = math.exp %749 : vector<16x1xf32>
      %751 = vector.broadcast %748 : vector<16x1xf32> to vector<16x16xf32>
      %752 = arith.subf %744, %751 : vector<16x16xf32>
      %753 = math.exp %752 : vector<16x16xf32>
      %cst_33 = arith.constant 0.000000e+00 : f32
      %754 = vector.broadcast %cst_33 : f32 to vector<16x16xf32>
      %755 = arith.select %14, %753, %754 : vector<16x16xi1>, vector<16x16xf32>
      %756 = vector.extract_strided_slice %21 {offsets = [0, 3], sizes = [16, 1], strides = [1, 1]} : vector<16x4xf32> to vector<16x1xf32>
      %757 = arith.mulf %750, %756 : vector<16x1xf32>
      %cst_34 = arith.constant dense<0.000000e+00> : vector<16xf32>
      %758 = vector.multi_reduction <add>, %755, %cst_34 [1] : vector<16x16xf32> to vector<16xf32>
      %759 = vector.shape_cast %758 : vector<16xf32> to vector<16x1xf32>
      %760 = arith.addf %757, %759 : vector<16x1xf32>
      %761 = vector.shape_cast %750 : vector<16x1xf32> to vector<16x1xf32>
      %762 = vector.broadcast %761 : vector<16x1xf32> to vector<16x16xf32>
      %763 = arith.truncf %755 : vector<16x16xf32> to vector<16x16xbf16>
      %764 = vector.extract_strided_slice %17 {offsets = [0, 48], sizes = [16, 16], strides = [1, 1]} : vector<16x64xbf16> to vector<16x16xbf16>
      %cst_35 = arith.constant dense<0.000000e+00> : vector<16x16xf32>
      %765 = tpu.matmul %763, %764, %cst_35 {dimension_numbers = #tpu.dot_dimension_numbers<[1], [0], [0], [1], [0, 0, 1, 1], [], []>} : vector<16x16xbf16>, vector<16x16xbf16>, vector<16x16xf32> -> vector<16x16xf32>
      %766 = tpu.concatenate %190, %376, %562, %748 in 1 : vector<16x1xf32>, vector<16x1xf32>, vector<16x1xf32>, vector<16x1xf32> -> vector<16x4xf32>
      %c0_36 = arith.constant 0 : index
      %c0_37 = arith.constant 0 : index
      %767 = vector.load %arg12[%c0_36, %c0_37] : memref<16x4xf32, #tpu.memory_space<vmem>>, vector<16x4xf32>
      tpu.vector_store %arg12[%c0_36, %c0_37], %766 {strides = array<i32>} : memref<16x4xf32, #tpu.memory_space<vmem>>, vector<16x4xf32>,
      %768 = tpu.concatenate %202, %388, %574, %760 in 1 : vector<16x1xf32>, vector<16x1xf32>, vector<16x1xf32>, vector<16x1xf32> -> vector<16x4xf32>
      %c0_38 = arith.constant 0 : index
      %c0_39 = arith.constant 0 : index
      %769 = vector.load %arg13[%c0_38, %c0_39] : memref<16x4xf32, #tpu.memory_space<vmem>>, vector<16x4xf32>
      tpu.vector_store %arg13[%c0_38, %c0_39], %768 {strides = array<i32>} : memref<16x4xf32, #tpu.memory_space<vmem>>, vector<16x4xf32>,
      %770 = tpu.concatenate %204, %390, %576, %762 in 1 : vector<16x16xf32>, vector<16x16xf32>, vector<16x16xf32>, vector<16x16xf32> -> vector<16x64xf32>
      %c0_40 = arith.constant 0 : index
      %c0_41 = arith.constant 0 : index
      %771 = vector.load %arg11[%c0_40, %c0_41] : memref<16x64xf32, #tpu.memory_space<vmem>>, vector<16x64xf32>
      %772 = arith.mulf %770, %771 : vector<16x64xf32>
      %773 = tpu.concatenate %207, %393, %579, %765 in 1 : vector<16x16xf32>, vector<16x16xf32>, vector<16x16xf32>, vector<16x16xf32> -> vector<16x64xf32>
      %774 = arith.addf %772, %773 : vector<16x64xf32>
      %c0_42 = arith.constant 0 : index
      %c0_43 = arith.constant 0 : index
      %775 = vector.load %arg11[%c0_42, %c0_43] : memref<16x64xf32, #tpu.memory_space<vmem>>, vector<16x64xf32>
      tpu.vector_store %arg11[%c0_42, %c0_43], %774 {strides = array<i32>} : memref<16x64xf32, #tpu.memory_space<vmem>>, vector<16x64xf32>,
    } else {
    }
    %c0_i32_3 = arith.constant 0 : i32
    %9 = arith.cmpi eq, %arg1, %c0_i32_3 : i32
    %10 = arith.extui %9 : i1 to i32
    %c0_i32_4 = arith.constant 0 : i32
    %11 = arith.cmpi ne, %10, %c0_i32_4 : i32
    scf.if %11 {
      %c0 = arith.constant 0 : index
      %c0_5 = arith.constant 0 : index
      %12 = vector.load %arg13[%c0, %c0_5] : memref<16x4xf32, #tpu.memory_space<vmem>>, vector<16x4xf32>
      %cst = arith.constant 9.99999968E-21 : f32
      %13 = vector.broadcast %cst : f32 to vector<16x4xf32>
      %14 = arith.maximumf %12, %13 : vector<16x4xf32>
      %15 = tpu.reciprocal %14 {approx = true} : vector<16x4xf32> -> vector<16x4xf32>
      %c0_6 = arith.constant 0 : index
      %c0_7 = arith.constant 0 : index
      %16 = vector.load %arg11[%c0_6, %c0_7] : memref<16x64xf32, #tpu.memory_space<vmem>>, vector<16x16xf32>
      %17 = vector.extract_strided_slice %15 {offsets = [0, 0], sizes = [16, 1], strides = [1, 1]} : vector<16x4xf32> to vector<16x1xf32>
      %18 = vector.broadcast %17 : vector<16x1xf32> to vector<16x16xf32>
      %19 = arith.mulf %16, %18 : vector<16x16xf32>
      %c0_8 = arith.constant 0 : index
      %c16 = arith.constant 16 : index
      %20 = vector.load %arg11[%c0_8, %c16] : memref<16x64xf32, #tpu.memory_space<vmem>>, vector<16x16xf32>
      %21 = vector.extract_strided_slice %15 {offsets = [0, 1], sizes = [16, 1], strides = [1, 1]} : vector<16x4xf32> to vector<16x1xf32>
      %22 = vector.broadcast %21 : vector<16x1xf32> to vector<16x16xf32>
      %23 = arith.mulf %20, %22 : vector<16x16xf32>
      %c0_9 = arith.constant 0 : index
      %c32 = arith.constant 32 : index
      %24 = vector.load %arg11[%c0_9, %c32] : memref<16x64xf32, #tpu.memory_space<vmem>>, vector<16x16xf32>
      %25 = vector.extract_strided_slice %15 {offsets = [0, 2], sizes = [16, 1], strides = [1, 1]} : vector<16x4xf32> to vector<16x1xf32>
      %26 = vector.broadcast %25 : vector<16x1xf32> to vector<16x16xf32>
      %27 = arith.mulf %24, %26 : vector<16x16xf32>
      %c0_10 = arith.constant 0 : index
      %c48 = arith.constant 48 : index
      %28 = vector.load %arg11[%c0_10, %c48] : memref<16x64xf32, #tpu.memory_space<vmem>>, vector<16x16xf32>
      %29 = vector.extract_strided_slice %15 {offsets = [0, 3], sizes = [16, 1], strides = [1, 1]} : vector<16x4xf32> to vector<16x1xf32>
      %30 = vector.broadcast %29 : vector<16x1xf32> to vector<16x16xf32>
      %31 = arith.mulf %28, %30 : vector<16x16xf32>
      %32 = tpu.concatenate %19, %23, %27, %31 in 1 : vector<16x16xf32>, vector<16x16xf32>, vector<16x16xf32>, vector<16x16xf32> -> vector<16x64xf32>
      %cst_11 = arith.constant 0.000000e+00 : f32
      %33 = vector.broadcast %cst_11 : f32 to vector<16x64xf32>
      %34 = arith.cmpf ogt, %32, %33 : vector<16x64xf32>
      %cst_12 = arith.constant 0.000000e+00 : f32
      %35 = vector.broadcast %cst_12 : f32 to vector<16x64xf32>
      %36 = arith.minimumf %32, %35 : vector<16x64xf32>
      %37 = math.exp %36 : vector<16x64xf32>
      %cst_13 = arith.constant 1.000000e+00 : f32
      %38 = vector.broadcast %cst_13 : f32 to vector<16x64xf32>
      %39 = arith.subf %37, %38 : vector<16x64xf32>
      %40 = arith.select %34, %32, %39 : vector<16x64xi1>, vector<16x64xf32>
      %c0_14 = arith.constant 0 : index
      %c0_15 = arith.constant 0 : index
      %41 = vector.load %arg10[%c0_14, %c0_15] : memref<16x64xf32, #tpu.memory_space<vmem>>, vector<16x64xf32>
      tpu.vector_store %arg10[%c0_14, %c0_15], %40 {strides = array<i32>} : memref<16x64xf32, #tpu.memory_space<vmem>>, vector<16x64xf32>,
    } else {
    }
    return
  }
  func.func @transform_0(%arg0: i32, %arg1: i32, %arg2: memref<1x1xi32, #tpu.memory_space<smem>>) -> (i32, i32) {
    %c0_i32 = arith.constant 0 : i32
    %c0_i32_0 = arith.constant 0 : i32
    return %arg0, %c0_i32 : i32, i32
  }
  func.func @transform_1(%arg0: i32, %arg1: i32, %arg2: memref<1x1xi32, #tpu.memory_space<smem>>) -> (i32, i32) {
    %c0_i32 = arith.constant 0 : i32
    %c0_i32_0 = arith.constant 0 : i32
    return %arg0, %c0_i32 : i32, i32
  }
  func.func @transform_2(%arg0: i32, %arg1: i32, %arg2: memref<1x1xi32, #tpu.memory_space<smem>>) -> (i32, i32) {
    %c0_i32 = arith.constant 0 : i32
    %c0_i32_0 = arith.constant 0 : i32
    return %c0_i32, %arg1 : i32, i32
  }
  func.func @transform_3(%arg0: i32, %arg1: i32, %arg2: memref<1x1xi32, #tpu.memory_space<smem>>) -> (i32, i32) {
    %c0_i32 = arith.constant 0 : i32
    %c0_i32_0 = arith.constant 0 : i32
    return %arg1, %c0_i32 : i32, i32
  }
  func.func @transform_4(%arg0: i32, %arg1: i32, %arg2: memref<1x1xi32, #tpu.memory_space<smem>>) -> (i32, i32) {
    %c0_i32 = arith.constant 0 : i32
    %c0_i32_0 = arith.constant 0 : i32
    return %c0_i32, %arg1 : i32, i32
  }
  func.func @transform_5(%arg0: i32, %arg1: i32, %arg2: memref<1x1xi32, #tpu.memory_space<smem>>) -> (i32, i32) {
    %c0_i32 = arith.constant 0 : i32
    return %arg0, %arg1 : i32, i32
  }
  func.func @transform_6(%arg0: i32, %arg1: i32, %arg2: memref<1x1xi32, #tpu.memory_space<smem>>) -> i32 {
    %c0_i32 = arith.constant 0 : i32
    %c0_i32_0 = arith.constant 0 : i32
    return %c0_i32 : i32
  }
  func.func @transform_7(%arg0: i32, %arg1: i32, %arg2: memref<1x1xi32, #tpu.memory_space<smem>>) -> (i32, i32) {
    %c0_i32 = arith.constant 0 : i32
    %c0_i32_0 = arith.constant 0 : i32
    return %arg0, %c0_i32 : i32, i32
  }
}

module attributes {stable_mosaic.version = 11 : i64} {
  func.func @gatv2_attn_kernel(%arg0: i32, %arg1: i32, %arg2: memref<1x1xi32, #tpu.memory_space<smem>>, %arg3: memref<16x8xf32, #tpu.memory_space<vmem>>, %arg4: memref<16x1xf32, #tpu.memory_space<vmem>>, %arg5: memref<8x16xf32, #tpu.memory_space<vmem>>, %arg6: memref<16x8xbf16, #tpu.memory_space<vmem>>, %arg7: memref<1x16xf32, #tpu.memory_space<vmem>>, %arg8: memref<16x16xi8, #tpu.memory_space<vmem>>, %arg9: memref<8xf32, #tpu.memory_space<smem>>, %arg10: memref<16x8xf32, #tpu.memory_space<vmem>>, %arg11: memref<16x8xf32, #tpu.memory_space<vmem>>, %arg12: memref<16x1xf32, #tpu.memory_space<vmem>>, %arg13: memref<16x1xf32, #tpu.memory_space<vmem>>) attributes {dimension_semantics = [#tpu.dimension_semantics<parallel>, #tpu.dimension_semantics<arbitrary>], iteration_bounds = array<i64: 1, 1>, scalar_prefetch = 1 : i64, scratch_operands = 3 : i64, tpu.core_type = #tpu.core_type<tc>, window_params = [{transform_indices = @transform_0, window_bounds = array<i64: 16, 8>}, {transform_indices = @transform_1, window_bounds = array<i64: 16, 1>}, {transform_indices = @transform_2, window_bounds = array<i64: 8, 16>}, {transform_indices = @transform_3, window_bounds = array<i64: 16, 8>}, {transform_indices = @transform_4, window_bounds = array<i64: 1, 16>}, {transform_indices = @transform_5, window_bounds = array<i64: 16, 16>}, {transform_indices = @transform_6, window_bounds = array<i64: 8>}, {transform_indices = @transform_7, window_bounds = array<i64: 16, 8>}]} {
    %c0_i32 = arith.constant 0 : i32
    %0 = arith.cmpi eq, %arg1, %c0_i32 : i32
    %1 = arith.extui %0 : i1 to i32
    %c0_i32_0 = arith.constant 0 : i32
    %2 = arith.cmpi ne, %1, %c0_i32_0 : i32
    scf.if %2 {
      %cst = arith.constant 0xFF800000 : f32
      %12 = vector.broadcast %cst : f32 to vector<16x1xf32>
      %c0 = arith.constant 0 : index
      %c0_5 = arith.constant 0 : index
      %13 = vector.load %arg12[%c0, %c0_5] : memref<16x1xf32, #tpu.memory_space<vmem>>, vector<16x1xf32>
      tpu.vector_store %arg12[%c0, %c0_5], %12 {strides = array<i32>} : memref<16x1xf32, #tpu.memory_space<vmem>>, vector<16x1xf32>,
      %cst_6 = arith.constant 0.000000e+00 : f32
      %14 = vector.broadcast %cst_6 : f32 to vector<16x1xf32>
      %c0_7 = arith.constant 0 : index
      %c0_8 = arith.constant 0 : index
      %15 = vector.load %arg13[%c0_7, %c0_8] : memref<16x1xf32, #tpu.memory_space<vmem>>, vector<16x1xf32>
      tpu.vector_store %arg13[%c0_7, %c0_8], %14 {strides = array<i32>} : memref<16x1xf32, #tpu.memory_space<vmem>>, vector<16x1xf32>,
      %cst_9 = arith.constant 0.000000e+00 : f32
      %16 = vector.broadcast %cst_9 : f32 to vector<16x8xf32>
      %c0_10 = arith.constant 0 : index
      %c0_11 = arith.constant 0 : index
      %17 = vector.load %arg11[%c0_10, %c0_11] : memref<16x8xf32, #tpu.memory_space<vmem>>, vector<16x8xf32>
      tpu.vector_store %arg11[%c0_10, %c0_11], %16 {strides = array<i32>} : memref<16x8xf32, #tpu.memory_space<vmem>>, vector<16x8xf32>,
    } else {
    }
    %3 = arith.index_cast %arg0 : i32 to index
    %4 = arith.index_cast %arg1 : i32 to index
    %5 = memref.load %arg2[%3, %4] : memref<1x1xi32, #tpu.memory_space<smem>>
    %c0_i32_1 = arith.constant 0 : i32
    %6 = arith.cmpi sgt, %5, %c0_i32_1 : i32
    %7 = arith.extui %6 : i1 to i32
    %c0_i32_2 = arith.constant 0 : i32
    %8 = arith.cmpi ne, %7, %c0_i32_2 : i32
    scf.if %8 {
      %c0 = arith.constant 0 : index
      %c0_5 = arith.constant 0 : index
      %12 = vector.load %arg8[%c0, %c0_5] : memref<16x16xi8, #tpu.memory_space<vmem>>, vector<16x16xi8>
      %c0_i8 = arith.constant 0 : i8
      %13 = vector.broadcast %c0_i8 : i8 to vector<16x16xi8>
      %14 = arith.cmpi ne, %12, %13 : vector<16x16xi8>
      %c0_6 = arith.constant 0 : index
      %c0_7 = arith.constant 0 : index
      %15 = vector.load %arg3[%c0_6, %c0_7] : memref<16x8xf32, #tpu.memory_space<vmem>>, vector<16x8xf32>
      %c0_8 = arith.constant 0 : index
      %c0_9 = arith.constant 0 : index
      %16 = vector.load %arg5[%c0_8, %c0_9] : memref<8x16xf32, #tpu.memory_space<vmem>>, vector<8x16xf32>
      %c0_10 = arith.constant 0 : index
      %c0_11 = arith.constant 0 : index
      %17 = vector.load %arg6[%c0_10, %c0_11] : memref<16x8xbf16, #tpu.memory_space<vmem>>, vector<16x8xbf16>
      %c0_12 = arith.constant 0 : index
      %c0_13 = arith.constant 0 : index
      %18 = vector.load %arg4[%c0_12, %c0_13] : memref<16x1xf32, #tpu.memory_space<vmem>>, vector<16x1xf32>
      %c0_14 = arith.constant 0 : index
      %c0_15 = arith.constant 0 : index
      %19 = vector.load %arg7[%c0_14, %c0_15] : memref<1x16xf32, #tpu.memory_space<vmem>>, vector<1x16xf32>
      %c0_16 = arith.constant 0 : index
      %c0_17 = arith.constant 0 : index
      %20 = vector.load %arg12[%c0_16, %c0_17] : memref<16x1xf32, #tpu.memory_space<vmem>>, vector<16x1xf32>
      %c0_18 = arith.constant 0 : index
      %c0_19 = arith.constant 0 : index
      %21 = vector.load %arg13[%c0_18, %c0_19] : memref<16x1xf32, #tpu.memory_space<vmem>>, vector<16x1xf32>
      %22 = vector.broadcast %18 : vector<16x1xf32> to vector<16x16xf32>
      %23 = vector.broadcast %19 : vector<1x16xf32> to vector<16x16xf32>
      %24 = arith.addf %22, %23 : vector<16x16xf32>
      %c0_20 = arith.constant 0 : index
      %25 = memref.load %arg9[%c0_20] : memref<8xf32, #tpu.memory_space<smem>>
      %26 = vector.extract_strided_slice %15 {offsets = [0, 0], sizes = [16, 1], strides = [1, 1]} : vector<16x8xf32> to vector<16x1xf32>
      %27 = vector.extract_strided_slice %16 {offsets = [0, 0], sizes = [1, 16], strides = [1, 1]} : vector<8x16xf32> to vector<1x16xf32>
      %28 = vector.broadcast %26 : vector<16x1xf32> to vector<16x16xf32>
      %29 = vector.broadcast %27 : vector<1x16xf32> to vector<16x16xf32>
      %30 = arith.addf %28, %29 : vector<16x16xf32>
      %31 = math.absf %30 : vector<16x16xf32>
      %32 = vector.broadcast %25 : f32 to vector<16x16xf32>
      %33 = arith.mulf %32, %31 : vector<16x16xf32>
      %34 = arith.addf %24, %33 : vector<16x16xf32>
      %c1 = arith.constant 1 : index
      %35 = memref.load %arg9[%c1] : memref<8xf32, #tpu.memory_space<smem>>
      %36 = vector.extract_strided_slice %15 {offsets = [0, 1], sizes = [16, 1], strides = [1, 1]} : vector<16x8xf32> to vector<16x1xf32>
      %37 = vector.extract_strided_slice %16 {offsets = [1, 0], sizes = [1, 16], strides = [1, 1]} : vector<8x16xf32> to vector<1x16xf32>
      %38 = vector.broadcast %36 : vector<16x1xf32> to vector<16x16xf32>
      %39 = vector.broadcast %37 : vector<1x16xf32> to vector<16x16xf32>
      %40 = arith.addf %38, %39 : vector<16x16xf32>
      %41 = math.absf %40 : vector<16x16xf32>
      %42 = vector.broadcast %35 : f32 to vector<16x16xf32>
      %43 = arith.mulf %42, %41 : vector<16x16xf32>
      %44 = arith.addf %34, %43 : vector<16x16xf32>
      %c2 = arith.constant 2 : index
      %45 = memref.load %arg9[%c2] : memref<8xf32, #tpu.memory_space<smem>>
      %46 = vector.extract_strided_slice %15 {offsets = [0, 2], sizes = [16, 1], strides = [1, 1]} : vector<16x8xf32> to vector<16x1xf32>
      %47 = vector.extract_strided_slice %16 {offsets = [2, 0], sizes = [1, 16], strides = [1, 1]} : vector<8x16xf32> to vector<1x16xf32>
      %48 = vector.broadcast %46 : vector<16x1xf32> to vector<16x16xf32>
      %49 = vector.broadcast %47 : vector<1x16xf32> to vector<16x16xf32>
      %50 = arith.addf %48, %49 : vector<16x16xf32>
      %51 = math.absf %50 : vector<16x16xf32>
      %52 = vector.broadcast %45 : f32 to vector<16x16xf32>
      %53 = arith.mulf %52, %51 : vector<16x16xf32>
      %54 = arith.addf %44, %53 : vector<16x16xf32>
      %c3 = arith.constant 3 : index
      %55 = memref.load %arg9[%c3] : memref<8xf32, #tpu.memory_space<smem>>
      %56 = vector.extract_strided_slice %15 {offsets = [0, 3], sizes = [16, 1], strides = [1, 1]} : vector<16x8xf32> to vector<16x1xf32>
      %57 = vector.extract_strided_slice %16 {offsets = [3, 0], sizes = [1, 16], strides = [1, 1]} : vector<8x16xf32> to vector<1x16xf32>
      %58 = vector.broadcast %56 : vector<16x1xf32> to vector<16x16xf32>
      %59 = vector.broadcast %57 : vector<1x16xf32> to vector<16x16xf32>
      %60 = arith.addf %58, %59 : vector<16x16xf32>
      %61 = math.absf %60 : vector<16x16xf32>
      %62 = vector.broadcast %55 : f32 to vector<16x16xf32>
      %63 = arith.mulf %62, %61 : vector<16x16xf32>
      %64 = arith.addf %54, %63 : vector<16x16xf32>
      %c4 = arith.constant 4 : index
      %65 = memref.load %arg9[%c4] : memref<8xf32, #tpu.memory_space<smem>>
      %66 = vector.extract_strided_slice %15 {offsets = [0, 4], sizes = [16, 1], strides = [1, 1]} : vector<16x8xf32> to vector<16x1xf32>
      %67 = vector.extract_strided_slice %16 {offsets = [4, 0], sizes = [1, 16], strides = [1, 1]} : vector<8x16xf32> to vector<1x16xf32>
      %68 = vector.broadcast %66 : vector<16x1xf32> to vector<16x16xf32>
      %69 = vector.broadcast %67 : vector<1x16xf32> to vector<16x16xf32>
      %70 = arith.addf %68, %69 : vector<16x16xf32>
      %71 = math.absf %70 : vector<16x16xf32>
      %72 = vector.broadcast %65 : f32 to vector<16x16xf32>
      %73 = arith.mulf %72, %71 : vector<16x16xf32>
      %74 = arith.addf %64, %73 : vector<16x16xf32>
      %c5 = arith.constant 5 : index
      %75 = memref.load %arg9[%c5] : memref<8xf32, #tpu.memory_space<smem>>
      %76 = vector.extract_strided_slice %15 {offsets = [0, 5], sizes = [16, 1], strides = [1, 1]} : vector<16x8xf32> to vector<16x1xf32>
      %77 = vector.extract_strided_slice %16 {offsets = [5, 0], sizes = [1, 16], strides = [1, 1]} : vector<8x16xf32> to vector<1x16xf32>
      %78 = vector.broadcast %76 : vector<16x1xf32> to vector<16x16xf32>
      %79 = vector.broadcast %77 : vector<1x16xf32> to vector<16x16xf32>
      %80 = arith.addf %78, %79 : vector<16x16xf32>
      %81 = math.absf %80 : vector<16x16xf32>
      %82 = vector.broadcast %75 : f32 to vector<16x16xf32>
      %83 = arith.mulf %82, %81 : vector<16x16xf32>
      %84 = arith.addf %74, %83 : vector<16x16xf32>
      %c6 = arith.constant 6 : index
      %85 = memref.load %arg9[%c6] : memref<8xf32, #tpu.memory_space<smem>>
      %86 = vector.extract_strided_slice %15 {offsets = [0, 6], sizes = [16, 1], strides = [1, 1]} : vector<16x8xf32> to vector<16x1xf32>
      %87 = vector.extract_strided_slice %16 {offsets = [6, 0], sizes = [1, 16], strides = [1, 1]} : vector<8x16xf32> to vector<1x16xf32>
      %88 = vector.broadcast %86 : vector<16x1xf32> to vector<16x16xf32>
      %89 = vector.broadcast %87 : vector<1x16xf32> to vector<16x16xf32>
      %90 = arith.addf %88, %89 : vector<16x16xf32>
      %91 = math.absf %90 : vector<16x16xf32>
      %92 = vector.broadcast %85 : f32 to vector<16x16xf32>
      %93 = arith.mulf %92, %91 : vector<16x16xf32>
      %94 = arith.addf %84, %93 : vector<16x16xf32>
      %c7 = arith.constant 7 : index
      %95 = memref.load %arg9[%c7] : memref<8xf32, #tpu.memory_space<smem>>
      %96 = vector.extract_strided_slice %15 {offsets = [0, 7], sizes = [16, 1], strides = [1, 1]} : vector<16x8xf32> to vector<16x1xf32>
      %97 = vector.extract_strided_slice %16 {offsets = [7, 0], sizes = [1, 16], strides = [1, 1]} : vector<8x16xf32> to vector<1x16xf32>
      %98 = vector.broadcast %96 : vector<16x1xf32> to vector<16x16xf32>
      %99 = vector.broadcast %97 : vector<1x16xf32> to vector<16x16xf32>
      %100 = arith.addf %98, %99 : vector<16x16xf32>
      %101 = math.absf %100 : vector<16x16xf32>
      %102 = vector.broadcast %95 : f32 to vector<16x16xf32>
      %103 = arith.mulf %102, %101 : vector<16x16xf32>
      %104 = arith.addf %94, %103 : vector<16x16xf32>
      %cst = arith.constant dense<0xFF800000> : vector<16xf32>
      %105 = vector.multi_reduction <maximumf>, %104, %cst [1] : vector<16x16xf32> to vector<16xf32>
      %106 = vector.shape_cast %105 : vector<16xf32> to vector<16x1xf32>
      %107 = arith.maximumf %20, %106 : vector<16x1xf32>
      %108 = arith.subf %20, %107 : vector<16x1xf32>
      %109 = math.exp %108 : vector<16x1xf32>
      %110 = vector.broadcast %107 : vector<16x1xf32> to vector<16x16xf32>
      %111 = arith.subf %104, %110 : vector<16x16xf32>
      %112 = math.exp %111 : vector<16x16xf32>
      %cst_21 = arith.constant 0.000000e+00 : f32
      %113 = vector.broadcast %cst_21 : f32 to vector<16x16xf32>
      %114 = arith.select %14, %112, %113 : vector<16x16xi1>, vector<16x16xf32>
      %115 = arith.mulf %109, %21 : vector<16x1xf32>
      %cst_22 = arith.constant dense<0.000000e+00> : vector<16xf32>
      %116 = vector.multi_reduction <add>, %114, %cst_22 [1] : vector<16x16xf32> to vector<16xf32>
      %117 = vector.shape_cast %116 : vector<16xf32> to vector<16x1xf32>
      %118 = arith.addf %115, %117 : vector<16x1xf32>
      %119 = vector.shape_cast %109 : vector<16x1xf32> to vector<16x1xf32>
      %120 = vector.broadcast %119 : vector<16x1xf32> to vector<16x8xf32>
      %121 = arith.truncf %114 : vector<16x16xf32> to vector<16x16xbf16>
      %cst_23 = arith.constant dense<0.000000e+00> : vector<16x8xf32>
      %122 = tpu.matmul %121, %17, %cst_23 {dimension_numbers = #tpu.dot_dimension_numbers<[1], [0], [0], [1], [0, 0, 1, 1], [], []>} : vector<16x16xbf16>, vector<16x8xbf16>, vector<16x8xf32> -> vector<16x8xf32>
      %c0_24 = arith.constant 0 : index
      %c0_25 = arith.constant 0 : index
      %123 = vector.load %arg12[%c0_24, %c0_25] : memref<16x1xf32, #tpu.memory_space<vmem>>, vector<16x1xf32>
      tpu.vector_store %arg12[%c0_24, %c0_25], %107 {strides = array<i32>} : memref<16x1xf32, #tpu.memory_space<vmem>>, vector<16x1xf32>,
      %c0_26 = arith.constant 0 : index
      %c0_27 = arith.constant 0 : index
      %124 = vector.load %arg13[%c0_26, %c0_27] : memref<16x1xf32, #tpu.memory_space<vmem>>, vector<16x1xf32>
      tpu.vector_store %arg13[%c0_26, %c0_27], %118 {strides = array<i32>} : memref<16x1xf32, #tpu.memory_space<vmem>>, vector<16x1xf32>,
      %c0_28 = arith.constant 0 : index
      %c0_29 = arith.constant 0 : index
      %125 = vector.load %arg11[%c0_28, %c0_29] : memref<16x8xf32, #tpu.memory_space<vmem>>, vector<16x8xf32>
      %126 = arith.mulf %120, %125 : vector<16x8xf32>
      %127 = arith.addf %126, %122 : vector<16x8xf32>
      %c0_30 = arith.constant 0 : index
      %c0_31 = arith.constant 0 : index
      %128 = vector.load %arg11[%c0_30, %c0_31] : memref<16x8xf32, #tpu.memory_space<vmem>>, vector<16x8xf32>
      tpu.vector_store %arg11[%c0_30, %c0_31], %127 {strides = array<i32>} : memref<16x8xf32, #tpu.memory_space<vmem>>, vector<16x8xf32>,
    } else {
    }
    %c0_i32_3 = arith.constant 0 : i32
    %9 = arith.cmpi eq, %arg1, %c0_i32_3 : i32
    %10 = arith.extui %9 : i1 to i32
    %c0_i32_4 = arith.constant 0 : i32
    %11 = arith.cmpi ne, %10, %c0_i32_4 : i32
    scf.if %11 {
      %c0 = arith.constant 0 : index
      %c0_5 = arith.constant 0 : index
      %12 = vector.load %arg13[%c0, %c0_5] : memref<16x1xf32, #tpu.memory_space<vmem>>, vector<16x1xf32>
      %cst = arith.constant 9.99999968E-21 : f32
      %13 = vector.broadcast %cst : f32 to vector<16x1xf32>
      %14 = arith.maximumf %12, %13 : vector<16x1xf32>
      %15 = tpu.reciprocal %14 {approx = true} : vector<16x1xf32> -> vector<16x1xf32>
      %c0_6 = arith.constant 0 : index
      %c0_7 = arith.constant 0 : index
      %16 = vector.load %arg11[%c0_6, %c0_7] : memref<16x8xf32, #tpu.memory_space<vmem>>, vector<16x8xf32>
      %17 = vector.broadcast %15 : vector<16x1xf32> to vector<16x8xf32>
      %18 = arith.mulf %16, %17 : vector<16x8xf32>
      %c0_8 = arith.constant 0 : index
      %c0_9 = arith.constant 0 : index
      %19 = vector.load %arg10[%c0_8, %c0_9] : memref<16x8xf32, #tpu.memory_space<vmem>>, vector<16x8xf32>
      tpu.vector_store %arg10[%c0_8, %c0_9], %18 {strides = array<i32>} : memref<16x8xf32, #tpu.memory_space<vmem>>, vector<16x8xf32>,
    } else {
    }
    return
  }
  func.func @transform_0(%arg0: i32, %arg1: i32, %arg2: memref<1x1xi32, #tpu.memory_space<smem>>) -> (i32, i32) {
    %c0_i32 = arith.constant 0 : i32
    %c0_i32_0 = arith.constant 0 : i32
    return %arg0, %c0_i32 : i32, i32
  }
  func.func @transform_1(%arg0: i32, %arg1: i32, %arg2: memref<1x1xi32, #tpu.memory_space<smem>>) -> (i32, i32) {
    %c0_i32 = arith.constant 0 : i32
    %c0_i32_0 = arith.constant 0 : i32
    return %arg0, %c0_i32 : i32, i32
  }
  func.func @transform_2(%arg0: i32, %arg1: i32, %arg2: memref<1x1xi32, #tpu.memory_space<smem>>) -> (i32, i32) {
    %c0_i32 = arith.constant 0 : i32
    %c0_i32_0 = arith.constant 0 : i32
    return %c0_i32, %arg1 : i32, i32
  }
  func.func @transform_3(%arg0: i32, %arg1: i32, %arg2: memref<1x1xi32, #tpu.memory_space<smem>>) -> (i32, i32) {
    %c0_i32 = arith.constant 0 : i32
    %c0_i32_0 = arith.constant 0 : i32
    return %arg1, %c0_i32 : i32, i32
  }
  func.func @transform_4(%arg0: i32, %arg1: i32, %arg2: memref<1x1xi32, #tpu.memory_space<smem>>) -> (i32, i32) {
    %c0_i32 = arith.constant 0 : i32
    %c0_i32_0 = arith.constant 0 : i32
    return %c0_i32, %arg1 : i32, i32
  }
  func.func @transform_5(%arg0: i32, %arg1: i32, %arg2: memref<1x1xi32, #tpu.memory_space<smem>>) -> (i32, i32) {
    %c0_i32 = arith.constant 0 : i32
    return %arg0, %arg1 : i32, i32
  }
  func.func @transform_6(%arg0: i32, %arg1: i32, %arg2: memref<1x1xi32, #tpu.memory_space<smem>>) -> i32 {
    %c0_i32 = arith.constant 0 : i32
    %c0_i32_0 = arith.constant 0 : i32
    return %c0_i32 : i32
  }
  func.func @transform_7(%arg0: i32, %arg1: i32, %arg2: memref<1x1xi32, #tpu.memory_space<smem>>) -> (i32, i32) {
    %c0_i32 = arith.constant 0 : i32
    %c0_i32_0 = arith.constant 0 : i32
    return %arg0, %c0_i32 : i32, i32
  }
}

</mosaic_0001>

<llo_original>
// kernel: gat_forward.4
$region0: #{gat_forward.4}
  #allocation0 [shape = 'u32[]', space=smem, size = 0x4, offset = 0x4, fixed_abs, tag = 'smem constant byte address 0x4 - core index']
  #allocation1 [shape = 'u32[144,128]{1,0:T(1,128)}', space=vmem, size = 0x12000, scoped, tag = 'internal scratch']
  %s0 = inlined_call_operand.vmem [shape: f32[16,8], index: 0, kind: input, shape index: {}]
  %s1 = inlined_call_operand.vmem [shape: f32[8,64], index: 1, kind: input, shape index: {}]
  %s2 = inlined_call_operand.vmem [shape: f32[1,64], index: 2, kind: input, shape index: {}]
  %s3 = inlined_call_operand.vmem [shape: f32[8,64], index: 3, kind: input, shape index: {}]
  %s4 = inlined_call_operand.vmem [shape: f32[1,64], index: 4, kind: input, shape index: {}]
  %s5 = inlined_call_operand.vmem [shape: f32[16,64], index: 5, kind: output, shape index: {0}]
  %s6 = inlined_call_operand.vmem [shape: f32[16,64], index: 6, kind: output, shape index: {1}]
  %7 = xla_tuple %s5, %s6
  %s8 = sld [smem:[#allocation0]]
  $region38: #{gat_forward.4} parent=0
    _
  %s10 = ssub.s32 1, %s8
  %s11 = scalar_select 0, %s10, %s8
  // Predicated region
  $region2: #{gat_forward.4} parent=0 // pred_check
    _
  $region3: #{gat_forward.4} parent=0 // pred_check_branch
    %13 = sbr.rel (0) target = $region5
  $region4: #{gat_forward.4} parent=0 // pred_region
    _
  $region5: #{gat_forward.4} parent=0 // pred_fallthru
    _
  // Predicated region
  $region6: #{gat_forward.4} parent=0 // pred_check
    _
  $region7: #{gat_forward.4} parent=0 // pred_check_branch
    %15 = sbr.rel (0) target = $region9
  $region8: #{gat_forward.4} parent=0 // pred_region
    _
  $region9: #{gat_forward.4} parent=0 // pred_fallthru
    _
  // Predicated region
  $region10: #{gat_forward.4} parent=0 // pred_check
    _
  $region11: #{gat_forward.4} parent=0 // pred_check_branch
    %17 = sbr.rel (0) target = $region13
  $region12: #{gat_forward.4} parent=0 // pred_region
    _
  $region13: #{gat_forward.4} parent=0 // pred_fallthru
    _
  // Predicated region
  $region14: #{gat_forward.4} parent=0 // pred_check
    _
  $region15: #{gat_forward.4} parent=0 // pred_check_branch
    %19 = sbr.rel (0) target = $region17
  $region16: #{gat_forward.4} parent=0 // pred_region
    _
  $region17: #{gat_forward.4} parent=0 // pred_fallthru
    _
  // Predicated region
  $region18: #{gat_forward.4} parent=0 // pred_check
    _
  $region19: #{gat_forward.4} parent=0 // pred_check_branch
    %21 = sbr.rel (0) target = $region21
  $region20: #{gat_forward.4} parent=0 // pred_region
    _
  $region21: #{gat_forward.4} parent=0 // pred_fallthru
    _
  %v22 = vld [vmem:[%s0] sm:$0xff]
  %v23 = vld [vmem:[%s0 + $0x8] sm:$0xff]
  %v24 = vld [vmem:[%s1] sm:$0xff]
  %v25 = vld [vmem:[%s2] sm:$0x1]
  %v27 = vlaneseq
  %v28 = vshrl.u32 %v27, 7
  %v29 = vsub.s32 0, %v28
  %v30 = vrot.slane %v25, %v29
  %vm32 = vcmask 64512
  %v34 = vsel %vm32, %v22, 0
  %v37 = vsel %vm32, %v23, 0
  %39 = vmatprep.subr.mxu0 0.0
  %40 = vmatpush1.msra.mxu0 %v24
  %41 = vmatprep.subr.mxu0 0.0
  %42 = vmatpush1.msra.mxu0 0.0
  %43 = vmatprep.subr.mxu0 0.0
  %44 = vmatpush1.msra.mxu0 0.0
  %45 = vmatprep.subr.mxu0 0.0
  %46 = vmatpush1.msra.mxu0 0.0
  %47 = vmatprep.subr.mxu0 0.0
  %48 = vmatpush1.msra.mxu0 0.0
  %49 = vmatprep.subr.mxu0 0.0
  %50 = vmatpush1.msra.mxu0 0.0
  %51 = vmatprep.subr.mxu0 0.0
  %52 = vmatpush1.msra.mxu0 0.0
  %53 = vmatprep.subr.mxu0 0.0
  %54 = vmatpush1.msra.mxu0 0.0
  %55 = vmatprep.subr.mxu0 0.0
  %56 = vmatpush1.msra.mxu0 0.0
  %57 = vmatprep.subr.mxu0 0.0
  %58 = vmatpush1.msra.mxu0 0.0
  %59 = vmatprep.subr.mxu0 0.0
  %60 = vmatpush1.msra.mxu0 0.0
  %61 = vmatprep.subr.mxu0 0.0
  %62 = vmatpush1.msra.mxu0 0.0
  %63 = vmatprep.subr.mxu0 0.0
  %64 = vmatpush1.msra.mxu0 0.0
  %65 = vmatprep.subr.mxu0 0.0
  %66 = vmatpush1.msra.mxu0 0.0
  %67 = vmatprep.subr.mxu0 0.0
  %68 = vmatpush1.msra.mxu0 0.0
  %69 = vmatprep.subr.mxu0 0.0
  %70 = vmatpush1.msra.mxu0 0.0
  %71 = vmatprep.subr.mxu0 0.0
  %72 = vmatpush1.msra.mxu0 0.0
  %73 = vmatprep.subr.mxu0 0.0
  %74 = vmatpush1.msra.mxu0 0.0
  %75 = vmatprep.subr.mxu0 0.0
  %76 = vmatpush1.msra.mxu0 0.0
  %77 = vmatprep.subr.mxu0 0.0
  %78 = vmatpush1.msra.mxu0 0.0
  %79 = vmatprep.subr.mxu0 0.0
  %80 = vmatpush1.msra.mxu0 0.0
  %81 = vmatprep.subr.mxu0 0.0
  %82 = vmatpush1.msra.mxu0 0.0
  %83 = vmatprep.subr.mxu0 0.0
  %84 = vmatpush1.msra.mxu0 0.0
  %85 = vmatprep.subr.mxu0 0.0
  %86 = vmatpush1.msra.mxu0 0.0
  %87 = vmatprep.subr.mxu0 0.0
  %88 = vmatpush1.msra.mxu0 0.0
  %89 = vmatprep.subr.mxu0 0.0
  %90 = vmatpush1.msra.mxu0 0.0
  %91 = vmatprep.subr.mxu0 0.0
  %92 = vmatpush1.msra.mxu0 0.0
  %93 = vmatprep.subr.mxu0 0.0
  %94 = vmatpush1.msra.mxu0 0.0
  %95 = vmatprep.subr.mxu0 0.0
  %96 = vmatpush1.msra.mxu0 0.0
  %97 = vmatprep.subr.mxu0 0.0
  %98 = vmatpush1.msra.mxu0 0.0
  %99 = vmatprep.subr.mxu0 0.0
  %100 = vmatpush1.msra.mxu0 0.0
  %101 = vmatprep.subr.mxu0 0.0
  %102 = vmatpush1.msra.mxu0 0.0
  %103 = vmatprep.mubr.f32.mxu0 0.0
  %104 = vmatmul.mubr.f32.gmra.mrb[0].mxu0 %v34
  %v105 = vpop.f32.mrb[0].mxu0
  %v106 = vadd.f32 %v30, %v105
  %v107 = vpop.f32.mrb[0].mxu0
  %108 = vmatprep.mubr.f32.mxu0 0.0
  %109 = vmatmul.mubr.f32.gmra.mrb[0].mxu0 %v37
  %v110 = vpop.f32.mrb[0].mxu0
  %v111 = vadd.f32 %v30, %v110
  %v112 = vpop.f32.mrb[0].mxu0
  %113 = vdwg.mxu0
  %vm114 = vcmask 523264
  %115 = vst.msk [vmem:[%s5] sm:$0xff] %vm114, %v106
  %116 = vst.msk [vmem:[%s5 + $0x8] sm:$0xff] %vm114, %v111
  %v117 = vld [vmem:[%s3] sm:$0xff]
  %v118 = vld [vmem:[%s4] sm:$0x1]
  %v120 = vlaneseq
  %v121 = vshrl.u32 %v120, 7
  %v122 = vsub.s32 0, %v121
  %v123 = vrot.slane %v118, %v122
  %125 = vmatprep.subr.mxu0 0.0
  %126 = vmatpush1.msra.mxu0 %v117
  %127 = vmatprep.subr.mxu0 0.0
  %128 = vmatpush1.msra.mxu0 0.0
  %129 = vmatprep.subr.mxu0 0.0
  %130 = vmatpush1.msra.mxu0 0.0
  %131 = vmatprep.subr.mxu0 0.0
  %132 = vmatpush1.msra.mxu0 0.0
  %133 = vmatprep.subr.mxu0 0.0
  %134 = vmatpush1.msra.mxu0 0.0
  %135 = vmatprep.subr.mxu0 0.0
  %136 = vmatpush1.msra.mxu0 0.0
  %137 = vmatprep.subr.mxu0 0.0
  %138 = vmatpush1.msra.mxu0 0.0
  %139 = vmatprep.subr.mxu0 0.0
  %140 = vmatpush1.msra.mxu0 0.0
  %141 = vmatprep.subr.mxu0 0.0
  %142 = vmatpush1.msra.mxu0 0.0
  %143 = vmatprep.subr.mxu0 0.0
  %144 = vmatpush1.msra.mxu0 0.0
  %145 = vmatprep.subr.mxu0 0.0
  %146 = vmatpush1.msra.mxu0 0.0
  %147 = vmatprep.subr.mxu0 0.0
  %148 = vmatpush1.msra.mxu0 0.0
  %149 = vmatprep.subr.mxu0 0.0
  %150 = vmatpush1.msra.mxu0 0.0
  %151 = vmatprep.subr.mxu0 0.0
  %152 = vmatpush1.msra.mxu0 0.0
  %153 = vmatprep.subr.mxu0 0.0
  %154 = vmatpush1.msra.mxu0 0.0
  %155 = vmatprep.subr.mxu0 0.0
  %156 = vmatpush1.msra.mxu0 0.0
  %157 = vmatprep.subr.mxu0 0.0
  %158 = vmatpush1.msra.mxu0 0.0
  %159 = vmatprep.subr.mxu0 0.0
  %160 = vmatpush1.msra.mxu0 0.0
  %161 = vmatprep.subr.mxu0 0.0
  %162 = vmatpush1.msra.mxu0 0.0
  %163 = vmatprep.subr.mxu0 0.0
  %164 = vmatpush1.msra.mxu0 0.0
  %165 = vmatprep.subr.mxu0 0.0
  %166 = vmatpush1.msra.mxu0 0.0
  %167 = vmatprep.subr.mxu0 0.0
  %168 = vmatpush1.msra.mxu0 0.0
  %169 = vmatprep.subr.mxu0 0.0
  %170 = vmatpush1.msra.mxu0 0.0
  %171 = vmatprep.subr.mxu0 0.0
  %172 = vmatpush1.msra.mxu0 0.0
  %173 = vmatprep.subr.mxu0 0.0
  %174 = vmatpush1.msra.mxu0 0.0
  %175 = vmatprep.subr.mxu0 0.0
  %176 = vmatpush1.msra.mxu0 0.0
  %177 = vmatprep.subr.mxu0 0.0
  %178 = vmatpush1.msra.mxu0 0.0
  %179 = vmatprep.subr.mxu0 0.0
  %180 = vmatpush1.msra.mxu0 0.0
  %181 = vmatprep.subr.mxu0 0.0
  %182 = vmatpush1.msra.mxu0 0.0
  %183 = vmatprep.subr.mxu0 0.0
  %184 = vmatpush1.msra.mxu0 0.0
  %185 = vmatprep.subr.mxu0 0.0
  %186 = vmatpush1.msra.mxu0 0.0
  %187 = vmatprep.subr.mxu0 0.0
  %188 = vmatpush1.msra.mxu0 0.0
  %189 = vmatprep.mubr.f32.mxu0 0.0
  %190 = vmatmul.mubr.f32.gmra.mrb[0].mxu0 %v34
  %v191 = vpop.f32.mrb[0].mxu0
  %v192 = vadd.f32 %v123, %v191
  %v193 = vpop.f32.mrb[0].mxu0
  %194 = vmatprep.mubr.f32.mxu0 0.0
  %195 = vmatmul.mubr.f32.gmra.mrb[0].mxu0 %v37
  %v196 = vpop.f32.mrb[0].mxu0
  %v197 = vadd.f32 %v123, %v196
  %v198 = vpop.f32.mrb[0].mxu0
  %199 = vdwg.mxu0
  %200 = vst.msk [vmem:[%s6] sm:$0xff] %vm114, %v192
  %201 = vst.msk [vmem:[%s6 + $0x8] sm:$0xff] %vm114, %v197
  // Predicated region
  $region22: #{gat_forward.4} parent=0 // pred_check
    _
  $region23: #{gat_forward.4} parent=0 // pred_check_branch
    %203 = sbr.rel (0) target = $region25
  $region24: #{gat_forward.4} parent=0 // pred_region
    _
  $region25: #{gat_forward.4} parent=0 // pred_fallthru
    _
  // Predicated region
  $region26: #{gat_forward.4} parent=0 // pred_check
    _
  $region27: #{gat_forward.4} parent=0 // pred_check_branch
    %205 = sbr.rel (0) target = $region29
  $region28: #{gat_forward.4} parent=0 // pred_region
    _
  $region29: #{gat_forward.4} parent=0 // pred_fallthru
    _
  // Predicated region
  $region30: #{gat_forward.4} parent=0 // pred_check
    _
  $region31: #{gat_forward.4} parent=0 // pred_check_branch
    %207 = sbr.rel (0) target = $region33
  $region32: #{gat_forward.4} parent=0 // pred_region
    _
  $region33: #{gat_forward.4} parent=0 // pred_fallthru
    _
  // Predicated region
  $region34: #{gat_forward.4} parent=0 // pred_check
    _
  $region35: #{gat_forward.4} parent=0 // pred_check_branch
    %209 = sbr.rel (0) target = $region37
  $region36: #{gat_forward.4} parent=0 // pred_region
    _
  $region37: #{gat_forward.4} parent=0 // pred_fallthru
    _

// kernel: gat_forward.6
$region0: #{gat_forward.6}
  #allocation0 [shape = 'u32[]', space=smem, size = 0x4, offset = 0x4, fixed_abs, tag = 'smem constant byte address 0x4 - core index']
  #allocation1 [shape = 'u32[144,128]{1,0:T(1,128)}', space=vmem, size = 0x12000, scoped, tag = 'internal scratch']
  %s0 = inlined_call_operand.vmem [shape: f32[16,64], index: 0, kind: input, shape index: {}]
  %s1 = inlined_call_operand.vmem [shape: f32[64,8], index: 1, kind: input, shape index: {}]
  %s2 = inlined_call_operand.vmem [shape: f32[1,8], index: 2, kind: input, shape index: {}]
  %s3 = inlined_call_operand.vmem [shape: f32[64,8], index: 3, kind: input, shape index: {}]
  %s4 = inlined_call_operand.vmem [shape: f32[1,8], index: 4, kind: input, shape index: {}]
  %s5 = inlined_call_operand.vmem [shape: f32[16,8], index: 5, kind: output, shape index: {0}]
  %s6 = inlined_call_operand.vmem [shape: f32[16,8], index: 6, kind: output, shape index: {1}]
  %7 = xla_tuple %s5, %s6
  %s8 = sld [smem:[#allocation0]]
  $region38: #{gat_forward.6} parent=0
    _
  %s10 = ssub.s32 1, %s8
  %s11 = scalar_select 0, %s10, %s8
  // Predicated region
  $region2: #{gat_forward.6} parent=0 // pred_check
    _
  $region3: #{gat_forward.6} parent=0 // pred_check_branch
    %13 = sbr.rel (0) target = $region5
  $region4: #{gat_forward.6} parent=0 // pred_region
    _
  $region5: #{gat_forward.6} parent=0 // pred_fallthru
    _
  // Predicated region
  $region6: #{gat_forward.6} parent=0 // pred_check
    _
  $region7: #{gat_forward.6} parent=0 // pred_check_branch
    %15 = sbr.rel (0) target = $region9
  $region8: #{gat_forward.6} parent=0 // pred_region
    _
  $region9: #{gat_forward.6} parent=0 // pred_fallthru
    _
  // Predicated region
  $region10: #{gat_forward.6} parent=0 // pred_check
    _
  $region11: #{gat_forward.6} parent=0 // pred_check_branch
    %17 = sbr.rel (0) target = $region13
  $region12: #{gat_forward.6} parent=0 // pred_region
    _
  $region13: #{gat_forward.6} parent=0 // pred_fallthru
    _
  // Predicated region
  $region14: #{gat_forward.6} parent=0 // pred_check
    _
  $region15: #{gat_forward.6} parent=0 // pred_check_branch
    %19 = sbr.rel (0) target = $region17
  $region16: #{gat_forward.6} parent=0 // pred_region
    _
  $region17: #{gat_forward.6} parent=0 // pred_fallthru
    _
  // Predicated region
  $region18: #{gat_forward.6} parent=0 // pred_check
    _
  $region19: #{gat_forward.6} parent=0 // pred_check_branch
    %21 = sbr.rel (0) target = $region21
  $region20: #{gat_forward.6} parent=0 // pred_region
    _
  $region21: #{gat_forward.6} parent=0 // pred_fallthru
    _
  %v22 = vld [vmem:[%s0] sm:$0xff]
  %v23 = vld [vmem:[%s0 + $0x8] sm:$0xff]
  %v24 = vld [vmem:[%s1] sm:$0xff]
  %v25 = vld [vmem:[%s1 + $0x8] sm:$0xff]
  %v26 = vld [vmem:[%s1 + $0x10] sm:$0xff]
  %v27 = vld [vmem:[%s1 + $0x18] sm:$0xff]
  %v28 = vld [vmem:[%s1 + $0x20] sm:$0xff]
  %v29 = vld [vmem:[%s1 + $0x28] sm:$0xff]
  %v30 = vld [vmem:[%s1 + $0x30] sm:$0xff]
  %v31 = vld [vmem:[%s1 + $0x38] sm:$0xff]
  %v32 = vld [vmem:[%s2] sm:$0x1]
  %v34 = vlaneseq
  %v35 = vshrl.u32 %v34, 7
  %v36 = vsub.s32 0, %v35
  %v37 = vrot.slane %v32, %v36
  %vm39 = vcmask 523264
  %v41 = vsel %vm39, %v22, 0
  %v44 = vsel %vm39, %v23, 0
  %46 = vmatprep.subr.mxu0 0.0
  %47 = vmatpush1.msra.mxu0 %v24
  %48 = vmatprep.subr.mxu0 0.0
  %49 = vmatpush1.msra.mxu0 %v25
  %50 = vmatprep.subr.mxu0 0.0
  %51 = vmatpush1.msra.mxu0 %v26
  %52 = vmatprep.subr.mxu0 0.0
  %53 = vmatpush1.msra.mxu0 %v27
  %54 = vmatprep.subr.mxu0 0.0
  %55 = vmatpush1.msra.mxu0 %v28
  %56 = vmatprep.subr.mxu0 0.0
  %57 = vmatpush1.msra.mxu0 %v29
  %58 = vmatprep.subr.mxu0 0.0
  %59 = vmatpush1.msra.mxu0 %v30
  %60 = vmatprep.subr.mxu0 0.0
  %61 = vmatpush1.msra.mxu0 %v31
  %62 = vmatprep.subr.mxu0 0.0
  %63 = vmatpush1.msra.mxu0 0.0
  %64 = vmatprep.subr.mxu0 0.0
  %65 = vmatpush1.msra.mxu0 0.0
  %66 = vmatprep.subr.mxu0 0.0
  %67 = vmatpush1.msra.mxu0 0.0
  %68 = vmatprep.subr.mxu0 0.0
  %69 = vmatpush1.msra.mxu0 0.0
  %70 = vmatprep.subr.mxu0 0.0
  %71 = vmatpush1.msra.mxu0 0.0
  %72 = vmatprep.subr.mxu0 0.0
  %73 = vmatpush1.msra.mxu0 0.0
  %74 = vmatprep.subr.mxu0 0.0
  %75 = vmatpush1.msra.mxu0 0.0
  %76 = vmatprep.subr.mxu0 0.0
  %77 = vmatpush1.msra.mxu0 0.0
  %78 = vmatprep.subr.mxu0 0.0
  %79 = vmatpush1.msra.mxu0 0.0
  %80 = vmatprep.subr.mxu0 0.0
  %81 = vmatpush1.msra.mxu0 0.0
  %82 = vmatprep.subr.mxu0 0.0
  %83 = vmatpush1.msra.mxu0 0.0
  %84 = vmatprep.subr.mxu0 0.0
  %85 = vmatpush1.msra.mxu0 0.0
  %86 = vmatprep.subr.mxu0 0.0
  %87 = vmatpush1.msra.mxu0 0.0
  %88 = vmatprep.subr.mxu0 0.0
  %89 = vmatpush1.msra.mxu0 0.0
  %90 = vmatprep.subr.mxu0 0.0
  %91 = vmatpush1.msra.mxu0 0.0
  %92 = vmatprep.subr.mxu0 0.0
  %93 = vmatpush1.msra.mxu0 0.0
  %94 = vmatprep.subr.mxu0 0.0
  %95 = vmatpush1.msra.mxu0 0.0
  %96 = vmatprep.subr.mxu0 0.0
  %97 = vmatpush1.msra.mxu0 0.0
  %98 = vmatprep.subr.mxu0 0.0
  %99 = vmatpush1.msra.mxu0 0.0
  %100 = vmatprep.subr.mxu0 0.0
  %101 = vmatpush1.msra.mxu0 0.0
  %102 = vmatprep.subr.mxu0 0.0
  %103 = vmatpush1.msra.mxu0 0.0
  %104 = vmatprep.subr.mxu0 0.0
  %105 = vmatpush1.msra.mxu0 0.0
  %106 = vmatprep.subr.mxu0 0.0
  %107 = vmatpush1.msra.mxu0 0.0
  %108 = vmatprep.subr.mxu0 0.0
  %109 = vmatpush1.msra.mxu0 0.0
  %110 = vmatprep.mubr.f32.mxu0 0.0
  %111 = vmatmul.mubr.f32.gmra.mrb[0].mxu0 %v41
  %v112 = vpop.f32.mrb[0].mxu0
  %v113 = vadd.f32 %v37, %v112
  %v114 = vpop.f32.mrb[0].mxu0
  %115 = vmatprep.mubr.f32.mxu0 0.0
  %116 = vmatmul.mubr.f32.gmra.mrb[0].mxu0 %v44
  %v117 = vpop.f32.mrb[0].mxu0
  %v118 = vadd.f32 %v37, %v117
  %v119 = vpop.f32.mrb[0].mxu0
  %120 = vdwg.mxu0
  %vm121 = vcmask 64512
  %122 = vst.msk [vmem:[%s5] sm:$0xff] %vm121, %v113
  %123 = vst.msk [vmem:[%s5 + $0x8] sm:$0xff] %vm121, %v118
  %v124 = vld [vmem:[%s3] sm:$0xff]
  %v125 = vld [vmem:[%s3 + $0x8] sm:$0xff]
  %v126 = vld [vmem:[%s3 + $0x10] sm:$0xff]
  %v127 = vld [vmem:[%s3 + $0x18] sm:$0xff]
  %v128 = vld [vmem:[%s3 + $0x20] sm:$0xff]
  %v129 = vld [vmem:[%s3 + $0x28] sm:$0xff]
  %v130 = vld [vmem:[%s3 + $0x30] sm:$0xff]
  %v131 = vld [vmem:[%s3 + $0x38] sm:$0xff]
  %v132 = vld [vmem:[%s4] sm:$0x1]
  %v134 = vlaneseq
  %v135 = vshrl.u32 %v134, 7
  %v136 = vsub.s32 0, %v135
  %v137 = vrot.slane %v132, %v136
  %139 = vmatprep.subr.mxu0 0.0
  %140 = vmatpush1.msra.mxu0 %v124
  %141 = vmatprep.subr.mxu0 0.0
  %142 = vmatpush1.msra.mxu0 %v125
  %143 = vmatprep.subr.mxu0 0.0
  %144 = vmatpush1.msra.mxu0 %v126
  %145 = vmatprep.subr.mxu0 0.0
  %146 = vmatpush1.msra.mxu0 %v127
  %147 = vmatprep.subr.mxu0 0.0
  %148 = vmatpush1.msra.mxu0 %v128
  %149 = vmatprep.subr.mxu0 0.0
  %150 = vmatpush1.msra.mxu0 %v129
  %151 = vmatprep.subr.mxu0 0.0
  %152 = vmatpush1.msra.mxu0 %v130
  %153 = vmatprep.subr.mxu0 0.0
  %154 = vmatpush1.msra.mxu0 %v131
  %155 = vmatprep.subr.mxu0 0.0
  %156 = vmatpush1.msra.mxu0 0.0
  %157 = vmatprep.subr.mxu0 0.0
  %158 = vmatpush1.msra.mxu0 0.0
  %159 = vmatprep.subr.mxu0 0.0
  %160 = vmatpush1.msra.mxu0 0.0
  %161 = vmatprep.subr.mxu0 0.0
  %162 = vmatpush1.msra.mxu0 0.0
  %163 = vmatprep.subr.mxu0 0.0
  %164 = vmatpush1.msra.mxu0 0.0
  %165 = vmatprep.subr.mxu0 0.0
  %166 = vmatpush1.msra.mxu0 0.0
  %167 = vmatprep.subr.mxu0 0.0
  %168 = vmatpush1.msra.mxu0 0.0
  %169 = vmatprep.subr.mxu0 0.0
  %170 = vmatpush1.msra.mxu0 0.0
  %171 = vmatprep.subr.mxu0 0.0
  %172 = vmatpush1.msra.mxu0 0.0
  %173 = vmatprep.subr.mxu0 0.0
  %174 = vmatpush1.msra.mxu0 0.0
  %175 = vmatprep.subr.mxu0 0.0
  %176 = vmatpush1.msra.mxu0 0.0
  %177 = vmatprep.subr.mxu0 0.0
  %178 = vmatpush1.msra.mxu0 0.0
  %179 = vmatprep.subr.mxu0 0.0
  %180 = vmatpush1.msra.mxu0 0.0
  %181 = vmatprep.subr.mxu0 0.0
  %182 = vmatpush1.msra.mxu0 0.0
  %183 = vmatprep.subr.mxu0 0.0
  %184 = vmatpush1.msra.mxu0 0.0
  %185 = vmatprep.subr.mxu0 0.0
  %186 = vmatpush1.msra.mxu0 0.0
  %187 = vmatprep.subr.mxu0 0.0
  %188 = vmatpush1.msra.mxu0 0.0
  %189 = vmatprep.subr.mxu0 0.0
  %190 = vmatpush1.msra.mxu0 0.0
  %191 = vmatprep.subr.mxu0 0.0
  %192 = vmatpush1.msra.mxu0 0.0
  %193 = vmatprep.subr.mxu0 0.0
  %194 = vmatpush1.msra.mxu0 0.0
  %195 = vmatprep.subr.mxu0 0.0
  %196 = vmatpush1.msra.mxu0 0.0
  %197 = vmatprep.subr.mxu0 0.0
  %198 = vmatpush1.msra.mxu0 0.0
  %199 = vmatprep.subr.mxu0 0.0
  %200 = vmatpush1.msra.mxu0 0.0
  %201 = vmatprep.subr.mxu0 0.0
  %202 = vmatpush1.msra.mxu0 0.0
  %203 = vmatprep.mubr.f32.mxu0 0.0
  %204 = vmatmul.mubr.f32.gmra.mrb[0].mxu0 %v41
  %v205 = vpop.f32.mrb[0].mxu0
  %v206 = vadd.f32 %v137, %v205
  %v207 = vpop.f32.mrb[0].mxu0
  %208 = vmatprep.mubr.f32.mxu0 0.0
  %209 = vmatmul.mubr.f32.gmra.mrb[0].mxu0 %v44
  %v210 = vpop.f32.mrb[0].mxu0
  %v211 = vadd.f32 %v137, %v210
  %v212 = vpop.f32.mrb[0].mxu0
  %213 = vdwg.mxu0
  %214 = vst.msk [vmem:[%s6] sm:$0xff] %vm121, %v206
  %215 = vst.msk [vmem:[%s6 + $0x8] sm:$0xff] %vm121, %v211
  // Predicated region
  $region22: #{gat_forward.6} parent=0 // pred_check
    _
  $region23: #{gat_forward.6} parent=0 // pred_check_branch
    %217 = sbr.rel (0) target = $region25
  $region24: #{gat_forward.6} parent=0 // pred_region
    _
  $region25: #{gat_forward.6} parent=0 // pred_fallthru
    _
  // Predicated region
  $region26: #{gat_forward.6} parent=0 // pred_check
    _
  $region27: #{gat_forward.6} parent=0 // pred_check_branch
    %219 = sbr.rel (0) target = $region29
  $region28: #{gat_forward.6} parent=0 // pred_region
    _
  $region29: #{gat_forward.6} parent=0 // pred_fallthru
    _
  // Predicated region
  $region30: #{gat_forward.6} parent=0 // pred_check
    _
  $region31: #{gat_forward.6} parent=0 // pred_check_branch
    %221 = sbr.rel (0) target = $region33
  $region32: #{gat_forward.6} parent=0 // pred_region
    _
  $region33: #{gat_forward.6} parent=0 // pred_fallthru
    _
  // Predicated region
  $region34: #{gat_forward.6} parent=0 // pred_check
    _
  $region35: #{gat_forward.6} parent=0 // pred_check_branch
    %223 = sbr.rel (0) target = $region37
  $region36: #{gat_forward.6} parent=0 // pred_region
    _
  $region37: #{gat_forward.6} parent=0 // pred_fallthru
    _

// kernel: gat_forward.7
$region0: #{gat_forward.7}
  #allocation0 [shape = 'u32[]', space=smem, size = 0x4, offset = 0x4, fixed_abs, tag = 'smem constant byte address 0x4 - core index']
  #allocation1 [shape = 'u32[144,128]{1,0:T(1,128)}', space=vmem, size = 0x12000, scoped, tag = 'internal scratch']
  #allocation2 [shape = 'f32[16,8]{1,0:T(8,128)}', space=vmem, size = 0x2000, scoped, tag = 'scratch operand']
  #allocation3 [shape = 'f32[16,1]{1,0:T(8,128)}', space=vmem, size = 0x2000, scoped, tag = 'scratch operand']
  #allocation4 [shape = 'f32[16,1]{1,0:T(8,128)}', space=vmem, size = 0x2000, scoped, tag = 'scratch operand']
  #allocation5 [shape = 's32[1]{0}', space=sflag, size = 0x4, scoped, tag = 'scoped memory for gat_forward.7']
  #allocation6 [shape = 's32[1,1]{1,0:T(1,128)S(6)}', space=smem, size = 0x200, scoped, tag = 'prefetched SMEM operand 0']
  %s0 = inlined_call_operand.<no memory space> [shape: s32[1,1], index: 0, kind: input, shape index: {}]
  %s1 = inlined_call_operand.vmem [shape: f32[16,8], index: 1, kind: input, shape index: {}]
  %s2 = inlined_call_operand.vmem [shape: f32[16,1], index: 2, kind: input, shape index: {}]
  %s3 = inlined_call_operand.vmem [shape: f32[8,16], index: 3, kind: input, shape index: {}]
  %s4 = inlined_call_operand.vmem [shape: bf16[16,8], index: 4, kind: input, shape index: {}]
  %s5 = inlined_call_operand.vmem [shape: f32[1,16], index: 5, kind: input, shape index: {}]
  %s6 = inlined_call_operand.vmem [shape: s8[16,16], index: 6, kind: input, shape index: {}]
  %s7 = inlined_call_operand.vmem [shape: f32[8], index: 7, kind: input, shape index: {}]
  %s8 = inlined_call_operand.vmem [shape: f32[16,8], index: 8, kind: output, shape index: {}]
  %s9 = sld [smem:[#allocation0]]
  $region54: #{gat_forward.7} parent=0
    _
  %s11 = ssub.s32 1, %s9
  %s12 = scalar_select 0, %s11, %s9
  %13 = sst [smem:[#allocation6]] %s0
  $region1: #{gat_forward.7} parent=0
    #allocation7 [shape = 'u8[512]{0}', space=smem, size = 0x200, scoped, tag = 'input window, operand 7, single buffered']
    #allocation8 [shape = 's32[1]{0}', space=sflag, size = 0x4, scoped, tag = 'scoped memory for gat_forward.7']
    %14 = vsyncpa [#allocation8], 0
    // Predicated region
    $region2: #{gat_forward.7} parent=1 // pred_check
      _
    $region3: #{gat_forward.7} parent=1 // pred_check_branch
      %16 = sbr.rel (0) target = $region5
    $region4: #{gat_forward.7} parent=1 // pred_region
      _
    $region5: #{gat_forward.7} parent=1 // pred_fallthru
      _
    // Predicated region
    $region6: #{gat_forward.7} parent=1 // pred_check
      _
    $region7: #{gat_forward.7} parent=1 // pred_check_branch
      %18 = sbr.rel (0) target = $region9
    $region8: #{gat_forward.7} parent=1 // pred_region
      _
    $region9: #{gat_forward.7} parent=1 // pred_fallthru
      _
    // Predicated region
    $region10: #{gat_forward.7} parent=1 // pred_check
      _
    $region11: #{gat_forward.7} parent=1 // pred_check_branch
      %20 = sbr.rel (0) target = $region13
    $region12: #{gat_forward.7} parent=1 // pred_region
      _
    $region13: #{gat_forward.7} parent=1 // pred_fallthru
      _
    // Predicated region
    $region14: #{gat_forward.7} parent=1 // pred_check
      _
    $region15: #{gat_forward.7} parent=1 // pred_check_branch
      %22 = sbr.rel (0) target = $region17
    $region16: #{gat_forward.7} parent=1 // pred_region
      _
    $region17: #{gat_forward.7} parent=1 // pred_fallthru
      _
    // Predicated region
    $region18: #{gat_forward.7} parent=1 // pred_check
      _
    $region19: #{gat_forward.7} parent=1 // pred_check_branch
      %24 = sbr.rel (0) target = $region21
    $region20: #{gat_forward.7} parent=1 // pred_region
      _
    $region21: #{gat_forward.7} parent=1 // pred_fallthru
      _
    // Predicated region
    $region22: #{gat_forward.7} parent=1 // pred_check
      _
    $region23: #{gat_forward.7} parent=1 // pred_check_branch
      %26 = sbr.rel (0) target = $region25
    $region24: #{gat_forward.7} parent=1 // pred_region
      _
    $region25: #{gat_forward.7} parent=1 // pred_fallthru
      _
    // Predicated region
    $region26: #{gat_forward.7} parent=1 // pred_check
      _
    $region27: #{gat_forward.7} parent=1 // pred_check_branch
      %28 = sbr.rel (0) target = $region29
    $region28: #{gat_forward.7} parent=1 // pred_region
      %s30 = ssub.s32 16, 16
      %31 = vsyncadd [#allocation8], %s30
      %s33 = sshll.u32 %s7, 4
      %s34 = int_to_ptr.vmem [resolvable:$true] %s33
      %36 = dma.vmem_to_smem %s34, 16, [#allocation7], [#allocation8]
    $region29: #{gat_forward.7} parent=1 // pred_fallthru
      _
    // Predicated region
    $region30: #{gat_forward.7} parent=1 // pred_check
      _
    $region31: #{gat_forward.7} parent=1 // pred_check_branch
      %38 = sbr.rel (0) target = $region33
    $region32: #{gat_forward.7} parent=1 // pred_region
      %39 = dma.done [#allocation8], 16
    $region33: #{gat_forward.7} parent=1 // pred_fallthru
      _
    %40 = sfence
    %p44 = scmp.eq.s32.totalorder 0, 0
    // Predicated region
    $region34: #{gat_forward.7} parent=1 // pred_check
      %p45 = pneg %p44
    $region35: #{gat_forward.7} parent=1 // pred_check_branch
      %47 = sbr.rel (%p45) target = $region37
    $region36: #{gat_forward.7} parent=1 // pred_region
      %vm48 = vcmask 7168
      %49 = vst.msk [vmem:[#allocation3] sm:$0xff] %vm48, -inf
      %50 = vst.msk [vmem:[#allocation3 + $0x8] sm:$0xff] %vm48, -inf
      %51 = vst.msk [vmem:[#allocation4] sm:$0xff] %vm48, 0.0
      %52 = vst.msk [vmem:[#allocation4 + $0x8] sm:$0xff] %vm48, 0.0
      %vm53 = vcmask 64512
      %54 = vst.msk [vmem:[#allocation2] sm:$0xff] %vm53, 0.0
      %55 = vst.msk [vmem:[#allocation2 + $0x8] sm:$0xff] %vm53, 0.0
    $region37: #{gat_forward.7} parent=1 // pred_fallthru
      _
    %s56 = sadd.s32 0, 0
    %s57 = smul.u32 %s56, 128
    %s58 = sadd.s32 %s57, 0
    %s59 = sld [smem:[#allocation6 + %s58]]
    %p60 = scmp.gt.s32.totalorder %s59, 0
    // Predicated region
    $region38: #{gat_forward.7} parent=1 // pred_check
      %p61 = pneg %p60
    $region39: #{gat_forward.7} parent=1 // pred_check_branch
      %63 = sbr.rel (%p61) target = $region41
    $region40: #{gat_forward.7} parent=1 // pred_region
      %v64 = vld [vmem:[%s6] sm:$0x3]
      %v65 = vld [vmem:[%s6 + $0x2] sm:$0x3]
      %vm66 = vnez %v64
      %vm67 = vnez %v65
      %v68 = vld [vmem:[%s1] sm:$0xff]
      %v69 = vld [vmem:[%s1 + $0x8] sm:$0xff]
      %v70 = vld [vmem:[%s3] sm:$0xff]
      %v71 = vld [vmem:[%s4] sm:$0xf]
      %v72 = vld [vmem:[%s4 + $0x4] sm:$0xf]
      %v73 = vld [vmem:[%s2] sm:$0xff]
      %v74 = vld [vmem:[%s2 + $0x8] sm:$0xff]
      %v75 = vld [vmem:[%s5] sm:$0x1]
      %v76 = vld [vmem:[#allocation3] sm:$0xff]
      %v77 = vld [vmem:[#allocation3 + $0x8] sm:$0xff]
      %v78 = vld [vmem:[#allocation4] sm:$0xff]
      %v79 = vld [vmem:[#allocation4 + $0x8] sm:$0xff]
      %81 = vset.pattern.permute.xlu0 0
      %82 = vperm.xlu0 %81, %v73
      %v83 = vpop.permute.xlu0 %82
      %86 = vset.pattern.permute.xlu0 0
      %87 = vperm.xlu0 %86, %v74
      %v88 = vpop.permute.xlu0 %87
      %v91 = vlaneseq
      %v92 = vshrl.u32 %v91, 7
      %v93 = vsub.s32 0, %v92
      %v94 = vrot.slane %v75, %v93
      %v96 = vadd.f32 %v83, %v94
      %v97 = vadd.f32 %v88, %v94
      %s98 = sld [smem:[#allocation7]]
      %100 = vset.pattern.permute.xlu0 0
      %101 = vperm.xlu0 %100, %v68
      %v102 = vpop.permute.xlu0 %101
      %105 = vset.pattern.permute.xlu0 0
      %106 = vperm.xlu0 %105, %v69
      %v107 = vpop.permute.xlu0 %106
      %v109 = vlaneseq
      %v110 = vshrl.u32 %v109, 7
      %v111 = vsub.s32 0, %v110
      %v112 = vrot.slane %v70, %v111
      %v113 = vadd.f32 %v102, %v112
      %v114 = vadd.f32 %v107, %v112
      %v115 = vand.u32 2147483647, %v113
      %v116 = vand.u32 2147483647, %v114
      %v117 = vstv %s98
      %v118 = vmul.f32 %v117, %v115
      %v119 = vmul.f32 %v117, %v116
      %v120 = vadd.f32 %v96, %v118
      %v121 = vadd.f32 %v97, %v119
      %s122 = sld [smem:[#allocation7 + $0x1]]
      %123 = vset.pattern.permute.xlu0 1
      %124 = vperm.xlu0 %123, %v68
      %v125 = vpop.permute.xlu0 %124
      %127 = vset.pattern.permute.xlu0 1
      %128 = vperm.xlu0 %127, %v69
      %v129 = vpop.permute.xlu0 %128
      %v131 = vlaneseq
      %v132 = vshrl.u32 %v131, 7
      %v133 = vsub.s32 1, %v132
      %v134 = vrot.slane %v70, %v133
      %v135 = vadd.f32 %v125, %v134
      %v136 = vadd.f32 %v129, %v134
      %v137 = vand.u32 2147483647, %v135
      %v138 = vand.u32 2147483647, %v136
      %v139 = vstv %s122
      %v140 = vmul.f32 %v139, %v137
      %v141 = vmul.f32 %v139, %v138
      %v142 = vadd.f32 %v120, %v140
      %v143 = vadd.f32 %v121, %v141
      %s144 = sld [smem:[#allocation7 + $0x2]]
      %145 = vset.pattern.permute.xlu0 2
      %146 = vperm.xlu0 %145, %v68
      %v147 = vpop.permute.xlu0 %146
      %149 = vset.pattern.permute.xlu0 2
      %150 = vperm.xlu0 %149, %v69
      %v151 = vpop.permute.xlu0 %150
      %v153 = vlaneseq
      %v154 = vshrl.u32 %v153, 7
      %v155 = vsub.s32 2, %v154
      %v156 = vrot.slane %v70, %v155
      %v157 = vadd.f32 %v147, %v156
      %v158 = vadd.f32 %v151, %v156
      %v159 = vand.u32 2147483647, %v157
      %v160 = vand.u32 2147483647, %v158
      %v161 = vstv %s144
      %v162 = vmul.f32 %v161, %v159
      %v163 = vmul.f32 %v161, %v160
      %v164 = vadd.f32 %v142, %v162
      %v165 = vadd.f32 %v143, %v163
      %s166 = sld [smem:[#allocation7 + $0x3]]
      %167 = vset.pattern.permute.xlu0 3
      %168 = vperm.xlu0 %167, %v68
      %v169 = vpop.permute.xlu0 %168
      %171 = vset.pattern.permute.xlu0 3
      %172 = vperm.xlu0 %171, %v69
      %v173 = vpop.permute.xlu0 %172
      %v175 = vlaneseq
      %v176 = vshrl.u32 %v175, 7
      %v177 = vsub.s32 3, %v176
      %v178 = vrot.slane %v70, %v177
      %v179 = vadd.f32 %v169, %v178
      %v180 = vadd.f32 %v173, %v178
      %v181 = vand.u32 2147483647, %v179
      %v182 = vand.u32 2147483647, %v180
      %v183 = vstv %s166
      %v184 = vmul.f32 %v183, %v181
      %v185 = vmul.f32 %v183, %v182
      %v186 = vadd.f32 %v164, %v184
      %v187 = vadd.f32 %v165, %v185
      %s188 = sld [smem:[#allocation7 + $0x4]]
      %189 = vset.pattern.permute.xlu0 4
      %190 = vperm.xlu0 %189, %v68
      %v191 = vpop.permute.xlu0 %190
      %193 = vset.pattern.permute.xlu0 4
      %194 = vperm.xlu0 %193, %v69
      %v195 = vpop.permute.xlu0 %194
      %v197 = vlaneseq
      %v198 = vshrl.u32 %v197, 7
      %v199 = vsub.s32 4, %v198
      %v200 = vrot.slane %v70, %v199
      %v201 = vadd.f32 %v191, %v200
      %v202 = vadd.f32 %v195, %v200
      %v203 = vand.u32 2147483647, %v201
      %v204 = vand.u32 2147483647, %v202
      %v205 = vstv %s188
      %v206 = vmul.f32 %v205, %v203
      %v207 = vmul.f32 %v205, %v204
      %v208 = vadd.f32 %v186, %v206
      %v209 = vadd.f32 %v187, %v207
      %s210 = sld [smem:[#allocation7 + $0x5]]
      %211 = vset.pattern.permute.xlu0 5
      %212 = vperm.xlu0 %211, %v68
      %v213 = vpop.permute.xlu0 %212
      %215 = vset.pattern.permute.xlu0 5
      %216 = vperm.xlu0 %215, %v69
      %v217 = vpop.permute.xlu0 %216
      %v219 = vlaneseq
      %v220 = vshrl.u32 %v219, 7
      %v221 = vsub.s32 5, %v220
      %v222 = vrot.slane %v70, %v221
      %v223 = vadd.f32 %v213, %v222
      %v224 = vadd.f32 %v217, %v222
      %v225 = vand.u32 2147483647, %v223
      %v226 = vand.u32 2147483647, %v224
      %v227 = vstv %s210
      %v228 = vmul.f32 %v227, %v225
      %v229 = vmul.f32 %v227, %v226
      %v230 = vadd.f32 %v208, %v228
      %v231 = vadd.f32 %v209, %v229
      %s232 = sld [smem:[#allocation7 + $0x6]]
      %233 = vset.pattern.permute.xlu0 6
      %234 = vperm.xlu0 %233, %v68
      %v235 = vpop.permute.xlu0 %234
      %237 = vset.pattern.permute.xlu0 6
      %238 = vperm.xlu0 %237, %v69
      %v239 = vpop.permute.xlu0 %238
      %v241 = vlaneseq
      %v242 = vshrl.u32 %v241, 7
      %v243 = vsub.s32 6, %v242
      %v244 = vrot.slane %v70, %v243
      %v245 = vadd.f32 %v235, %v244
      %v246 = vadd.f32 %v239, %v244
      %v247 = vand.u32 2147483647, %v245
      %v248 = vand.u32 2147483647, %v246
      %v249 = vstv %s232
      %v250 = vmul.f32 %v249, %v247
      %v251 = vmul.f32 %v249, %v248
      %v252 = vadd.f32 %v230, %v250
      %v253 = vadd.f32 %v231, %v251
      %s254 = sld [smem:[#allocation7 + $0x7]]
      %255 = vset.pattern.permute.xlu0 7
      %256 = vperm.xlu0 %255, %v68
      %v257 = vpop.permute.xlu0 %256
      %259 = vset.pattern.permute.xlu0 7
      %260 = vperm.xlu0 %259, %v69
      %v261 = vpop.permute.xlu0 %260
      %v263 = vlaneseq
      %v264 = vshrl.u32 %v263, 7
      %v265 = vsub.s32 7, %v264
      %v266 = vrot.slane %v70, %v265
      %v267 = vadd.f32 %v257, %v266
      %v268 = vadd.f32 %v261, %v266
      %v269 = vand.u32 2147483647, %v267
      %v270 = vand.u32 2147483647, %v268
      %v271 = vstv %s254
      %v272 = vmul.f32 %v271, %v269
      %v273 = vmul.f32 %v271, %v270
      %v274 = vadd.f32 %v252, %v272
      %v275 = vadd.f32 %v253, %v273
      %vm276 = vcmask 130048
      %v277 = vsel %vm276, %v274, -inf
      %278 = vmax.xlane.f32.xlu0 %v277
      %v279 = vpop.xlane.xlu0 %278
      %v280 = vsel %vm276, %v275, -inf
      %281 = vmax.xlane.f32.xlu0 %v280
      %v282 = vpop.xlane.xlu0 %281
      %v283 = vmax.f32 %v76, %v279
      %v284 = vmax.f32 %v77, %v282
      %v285 = vsub.f32 %v76, %v283
      %v286 = vsub.f32 %v77, %v284
      %v287 = vmul.f32 %v285, 1.442695
      %v288 = vpow.pop %v287
      %v289 = vmul.f32 %v286, 1.442695
      %v290 = vpow.pop %v289
      %292 = vset.pattern.permute.xlu0 0
      %293 = vperm.xlu0 %292, %v283
      %v294 = vpop.permute.xlu0 %293
      %297 = vset.pattern.permute.xlu0 0
      %298 = vperm.xlu0 %297, %v284
      %v299 = vpop.permute.xlu0 %298
      %v301 = vsub.f32 %v274, %v294
      %v302 = vsub.f32 %v275, %v299
      %v303 = vmul.f32 %v301, 1.442695
      %v304 = vpow.pop %v303
      %v305 = vmul.f32 %v302, 1.442695
      %v306 = vpow.pop %v305
      %v307 = vsel %vm66, 16843009, 0
      %v308 = vsel %vm67, 16843009, 0
      %v309 = vunpack.c.0.s8 %v307
      %v310 = vunpack.c.0.s8 %v308
      %vm311 = vcmp.ne.s32.totalorder %v309, 0
      %vm312 = vcmp.ne.s32.totalorder %v310, 0
      %v313 = vsel %vm311, %v304, 0.0
      %v314 = vsel %vm312, %v306, 0.0
      %v315 = vmul.f32 %v288, %v78
      %v316 = vmul.f32 %v290, %v79
      %v317 = vsel %vm276, %v313, 0.0
      %318 = vadd.xlane.f32.xlu0 %v317
      %v319 = vpop.xlane.xlu0 %318
      %v320 = vsel %vm276, %v314, 0.0
      %321 = vadd.xlane.f32.xlu0 %v320
      %v322 = vpop.xlane.xlu0 %321
      %v323 = vadd.f32 %v315, %v319
      %v324 = vadd.f32 %v316, %v322
      %326 = vset.pattern.permute.xlu0 0
      %327 = vperm.xlu0 %326, %v288
      %v328 = vpop.permute.xlu0 %327
      %331 = vset.pattern.permute.xlu0 0
      %332 = vperm.xlu0 %331, %v290
      %v333 = vpop.permute.xlu0 %332
      %v335 = vpack.c.bf16 %v314, %v313
      %v338 = vunpack.c.l.b16 %v71
      %v339 = vunpack.c.l.b16 %v72
      %v340 = vpack.c.b16 %v339, %v338
      %v343 = vsel %vm276, %v335, 0
      %345 = vmatprep.subr.bf16.mxu0 0
      %346 = vmatpush1.bf16.msra.mxu0 %v340
      %347 = vmatprep.subr.bf16.mxu0 0
      %348 = vmatpush1.bf16.msra.mxu0 0
      %349 = vmatprep.subr.bf16.mxu0 0
      %350 = vmatpush1.bf16.msra.mxu0 0
      %351 = vmatprep.subr.bf16.mxu0 0
      %352 = vmatpush1.bf16.msra.mxu0 0
      %353 = vmatprep.subr.bf16.mxu0 0
      %354 = vmatpush1.bf16.msra.mxu0 0
      %355 = vmatprep.subr.bf16.mxu0 0
      %356 = vmatpush1.bf16.msra.mxu0 0
      %357 = vmatprep.subr.bf16.mxu0 0
      %358 = vmatpush1.bf16.msra.mxu0 0
      %359 = vmatprep.subr.bf16.mxu0 0
      %360 = vmatpush1.bf16.msra.mxu0 0
      %361 = vmatprep.subr.bf16.mxu0 0
      %362 = vmatpush1.bf16.msra.mxu0 0
      %363 = vmatprep.subr.bf16.mxu0 0
      %364 = vmatpush1.bf16.msra.mxu0 0
      %365 = vmatprep.subr.bf16.mxu0 0
      %366 = vmatpush1.bf16.msra.mxu0 0
      %367 = vmatprep.subr.bf16.mxu0 0
      %368 = vmatpush1.bf16.msra.mxu0 0
      %369 = vmatprep.subr.bf16.mxu0 0
      %370 = vmatpush1.bf16.msra.mxu0 0
      %371 = vmatprep.subr.bf16.mxu0 0
      %372 = vmatpush1.bf16.msra.mxu0 0
      %373 = vmatprep.subr.bf16.mxu0 0
      %374 = vmatpush1.bf16.msra.mxu0 0
      %375 = vmatprep.subr.bf16.mxu0 0
      %376 = vmatpush1.bf16.msra.mxu0 0
      %377 = vmatprep.mubr.bf16.mxu0 0
      %378 = vmatmul.mubr.bf16.gmra.mrb[0].mxu0 %v343
      %v379 = vpop.f32.mrb[0].mxu0
      %v380 = vadd.f32 0.0, %v379
      %v381 = vpop.f32.mrb[0].mxu0
      %v382 = vpop.f32.mrb[0].mxu0
      %v383 = vadd.f32 0.0, %v382
      %v384 = vpop.f32.mrb[0].mxu0
      %385 = vdwg.mxu0
      %vm386 = vcmask 7168
      %387 = vst.msk [vmem:[#allocation3] sm:$0xff] %vm386, %v283
      %388 = vst.msk [vmem:[#allocation3 + $0x8] sm:$0xff] %vm386, %v284
      %389 = vst.msk [vmem:[#allocation4] sm:$0xff] %vm386, %v323
      %390 = vst.msk [vmem:[#allocation4 + $0x8] sm:$0xff] %vm386, %v324
      %v391 = vld [vmem:[#allocation2] sm:$0xff]
      %v392 = vld [vmem:[#allocation2 + $0x8] sm:$0xff]
      %v393 = vmul.f32 %v328, %v391
      %v394 = vmul.f32 %v333, %v392
      %v395 = vadd.f32 %v393, %v380
      %v396 = vadd.f32 %v394, %v383
      %vm397 = vcmask 64512
      %398 = vst.msk [vmem:[#allocation2] sm:$0xff] %vm397, %v395
      %399 = vst.msk [vmem:[#allocation2 + $0x8] sm:$0xff] %vm397, %v396
    $region41: #{gat_forward.7} parent=1 // pred_fallthru
      _
    // Predicated region
    $region42: #{gat_forward.7} parent=1 // pred_check
      %p400 = pneg %p44
    $region43: #{gat_forward.7} parent=1 // pred_check_branch
      %402 = sbr.rel (%p400) target = $region45
    $region44: #{gat_forward.7} parent=1 // pred_region
      %v403 = vld [vmem:[#allocation4] sm:$0xff]
      %v404 = vld [vmem:[#allocation4 + $0x8] sm:$0xff]
      %v405 = vmax.f32 %v403, 1e-20
      %v406 = vmax.f32 %v404, 1e-20
      %v407 = vrcp.pop %v405
      %v408 = vrcp.pop %v406
      %v409 = vld [vmem:[#allocation2] sm:$0xff]
      %v410 = vld [vmem:[#allocation2 + $0x8] sm:$0xff]
      %412 = vset.pattern.permute.xlu0 0
      %413 = vperm.xlu0 %412, %v407
      %v414 = vpop.permute.xlu0 %413
      %417 = vset.pattern.permute.xlu0 0
      %418 = vperm.xlu0 %417, %v408
      %v419 = vpop.permute.xlu0 %418
      %v421 = vmul.f32 %v409, %v414
      %v422 = vmul.f32 %v410, %v419
      %vm423 = vcmask 64512
      %424 = vst.msk [vmem:[%s8] sm:$0xff] %vm423, %v421
      %425 = vst.msk [vmem:[%s8 + $0x8] sm:$0xff] %vm423, %v422
    $region45: #{gat_forward.7} parent=1 // pred_fallthru
      _
    // Predicated region
    $region46: #{gat_forward.7} parent=1 // pred_check
      _
    $region47: #{gat_forward.7} parent=1 // pred_check_branch
      %427 = sbr.rel (0) target = $region49
    $region48: #{gat_forward.7} parent=1 // pred_region
      _
    $region49: #{gat_forward.7} parent=1 // pred_fallthru
      _
    // Predicated region
    $region50: #{gat_forward.7} parent=1 // pred_check
      _
    $region51: #{gat_forward.7} parent=1 // pred_check_branch
      %429 = sbr.rel (0) target = $region53
    $region52: #{gat_forward.7} parent=1 // pred_region
      _
    $region53: #{gat_forward.7} parent=1 // pred_fallthru
      _
    %430 = vsyncpa [#allocation8], 1

// kernel: gat_forward.5
$region0: #{gat_forward.5}
  #allocation0 [shape = 'u32[]', space=smem, size = 0x4, offset = 0x4, fixed_abs, tag = 'smem constant byte address 0x4 - core index']
  #allocation1 [shape = 'u32[144,128]{1,0:T(1,128)}', space=vmem, size = 0x12000, scoped, tag = 'internal scratch']
  #allocation2 [shape = 'f32[16,64]{1,0:T(8,128)}', space=vmem, size = 0x2000, scoped, tag = 'scratch operand']
  #allocation3 [shape = 'f32[16,4]{1,0:T(8,128)}', space=vmem, size = 0x2000, scoped, tag = 'scratch operand']
  #allocation4 [shape = 'f32[16,4]{1,0:T(8,128)}', space=vmem, size = 0x2000, scoped, tag = 'scratch operand']
  #allocation5 [shape = 's32[1]{0}', space=sflag, size = 0x4, scoped, tag = 'scoped memory for gat_forward.5']
  #allocation6 [shape = 's32[1,1]{1,0:T(1,128)S(6)}', space=smem, size = 0x200, scoped, tag = 'prefetched SMEM operand 0']
  %s0 = inlined_call_operand.<no memory space> [shape: s32[1,1], index: 0, kind: input, shape index: {}]
  %s1 = inlined_call_operand.vmem [shape: f32[16,64], index: 1, kind: input, shape index: {}]
  %s2 = inlined_call_operand.vmem [shape: f32[16,4], index: 2, kind: input, shape index: {}]
  %s3 = inlined_call_operand.vmem [shape: f32[64,16], index: 3, kind: input, shape index: {}]
  %s4 = inlined_call_operand.vmem [shape: bf16[16,64], index: 4, kind: input, shape index: {}]
  %s5 = inlined_call_operand.vmem [shape: f32[4,16], index: 5, kind: input, shape index: {}]
  %s6 = inlined_call_operand.vmem [shape: s8[16,16], index: 6, kind: input, shape index: {}]
  %s7 = inlined_call_operand.vmem [shape: f32[64], index: 7, kind: input, shape index: {}]
  %s8 = inlined_call_operand.vmem [shape: f32[16,64], index: 8, kind: output, shape index: {}]
  %s9 = sld [smem:[#allocation0]]
  $region54: #{gat_forward.5} parent=0
    _
  %s11 = ssub.s32 1, %s9
  %s12 = scalar_select 0, %s11, %s9
  %13 = sst [smem:[#allocation6]] %s0
  $region1: #{gat_forward.5} parent=0
    #allocation7 [shape = 'u8[512]{0}', space=smem, size = 0x200, scoped, tag = 'input window, operand 7, single buffered']
    #allocation8 [shape = 's32[1]{0}', space=sflag, size = 0x4, scoped, tag = 'scoped memory for gat_forward.5']
    %14 = vsyncpa [#allocation8], 0
    // Predicated region
    $region2: #{gat_forward.5} parent=1 // pred_check
      _
    $region3: #{gat_forward.5} parent=1 // pred_check_branch
      %16 = sbr.rel (0) target = $region5
    $region4: #{gat_forward.5} parent=1 // pred_region
      _
    $region5: #{gat_forward.5} parent=1 // pred_fallthru
      _
    // Predicated region
    $region6: #{gat_forward.5} parent=1 // pred_check
      _
    $region7: #{gat_forward.5} parent=1 // pred_check_branch
      %18 = sbr.rel (0) target = $region9
    $region8: #{gat_forward.5} parent=1 // pred_region
      _
    $region9: #{gat_forward.5} parent=1 // pred_fallthru
      _
    // Predicated region
    $region10: #{gat_forward.5} parent=1 // pred_check
      _
    $region11: #{gat_forward.5} parent=1 // pred_check_branch
      %20 = sbr.rel (0) target = $region13
    $region12: #{gat_forward.5} parent=1 // pred_region
      _
    $region13: #{gat_forward.5} parent=1 // pred_fallthru
      _
    // Predicated region
    $region14: #{gat_forward.5} parent=1 // pred_check
      _
    $region15: #{gat_forward.5} parent=1 // pred_check_branch
      %22 = sbr.rel (0) target = $region17
    $region16: #{gat_forward.5} parent=1 // pred_region
      _
    $region17: #{gat_forward.5} parent=1 // pred_fallthru
      _
    // Predicated region
    $region18: #{gat_forward.5} parent=1 // pred_check
      _
    $region19: #{gat_forward.5} parent=1 // pred_check_branch
      %24 = sbr.rel (0) target = $region21
    $region20: #{gat_forward.5} parent=1 // pred_region
      _
    $region21: #{gat_forward.5} parent=1 // pred_fallthru
      _
    // Predicated region
    $region22: #{gat_forward.5} parent=1 // pred_check
      _
    $region23: #{gat_forward.5} parent=1 // pred_check_branch
      %26 = sbr.rel (0) target = $region25
    $region24: #{gat_forward.5} parent=1 // pred_region
      _
    $region25: #{gat_forward.5} parent=1 // pred_fallthru
      _
    // Predicated region
    $region26: #{gat_forward.5} parent=1 // pred_check
      _
    $region27: #{gat_forward.5} parent=1 // pred_check_branch
      %28 = sbr.rel (0) target = $region29
    $region28: #{gat_forward.5} parent=1 // pred_region
      %s30 = ssub.s32 16, 16
      %31 = vsyncadd [#allocation8], %s30
      %s33 = sshll.u32 %s7, 4
      %s34 = int_to_ptr.vmem [resolvable:$true] %s33
      %36 = dma.vmem_to_smem %s34, 16, [#allocation7], [#allocation8]
    $region29: #{gat_forward.5} parent=1 // pred_fallthru
      _
    // Predicated region
    $region30: #{gat_forward.5} parent=1 // pred_check
      _
    $region31: #{gat_forward.5} parent=1 // pred_check_branch
      %38 = sbr.rel (0) target = $region33
    $region32: #{gat_forward.5} parent=1 // pred_region
      %39 = dma.done [#allocation8], 16
    $region33: #{gat_forward.5} parent=1 // pred_fallthru
      _
    %40 = sfence
    %p44 = scmp.eq.s32.totalorder 0, 0
    // Predicated region
    $region34: #{gat_forward.5} parent=1 // pred_check
      %p45 = pneg %p44
    $region35: #{gat_forward.5} parent=1 // pred_check_branch
      %47 = sbr.rel (%p45) target = $region37
    $region36: #{gat_forward.5} parent=1 // pred_region
      %vm48 = vcmask 31744
      %49 = vst.msk [vmem:[#allocation3] sm:$0xff] %vm48, -inf
      %50 = vst.msk [vmem:[#allocation3 + $0x8] sm:$0xff] %vm48, -inf
      %51 = vst.msk [vmem:[#allocation4] sm:$0xff] %vm48, 0.0
      %52 = vst.msk [vmem:[#allocation4 + $0x8] sm:$0xff] %vm48, 0.0
      %vm53 = vcmask 523264
      %54 = vst.msk [vmem:[#allocation2] sm:$0xff] %vm53, 0.0
      %55 = vst.msk [vmem:[#allocation2 + $0x8] sm:$0xff] %vm53, 0.0
    $region37: #{gat_forward.5} parent=1 // pred_fallthru
      _
    %s56 = sadd.s32 0, 0
    %s57 = smul.u32 %s56, 128
    %s58 = sadd.s32 %s57, 0
    %s59 = sld [smem:[#allocation6 + %s58]]
    %p60 = scmp.gt.s32.totalorder %s59, 0
    // Predicated region
    $region38: #{gat_forward.5} parent=1 // pred_check
      %p61 = pneg %p60
    $region39: #{gat_forward.5} parent=1 // pred_check_branch
      %63 = sbr.rel (%p61) target = $region41
    $region40: #{gat_forward.5} parent=1 // pred_region
      %v64 = vld [vmem:[%s6] sm:$0x3]
      %v65 = vld [vmem:[%s6 + $0x2] sm:$0x3]
      %vm66 = vnez %v64
      %vm67 = vnez %v65
      %v68 = vld [vmem:[%s1] sm:$0xff]
      %v69 = vld [vmem:[%s1 + $0x8] sm:$0xff]
      %v70 = vld [vmem:[%s3] sm:$0xff]
      %v71 = vld [vmem:[%s3 + $0x8] sm:$0xff]
      %v72 = vld [vmem:[%s3 + $0x10] sm:$0xff]
      %v73 = vld [vmem:[%s3 + $0x18] sm:$0xff]
      %v74 = vld [vmem:[%s3 + $0x20] sm:$0xff]
      %v75 = vld [vmem:[%s3 + $0x28] sm:$0xff]
      %v76 = vld [vmem:[%s3 + $0x30] sm:$0xff]
      %v77 = vld [vmem:[%s3 + $0x38] sm:$0xff]
      %v78 = vld [vmem:[%s4] sm:$0xf]
      %v79 = vld [vmem:[%s4 + $0x4] sm:$0xf]
      %v80 = vld [vmem:[%s2] sm:$0xff]
      %v81 = vld [vmem:[%s2 + $0x8] sm:$0xff]
      %v82 = vld [vmem:[%s5] sm:$0xf]
      %v83 = vld [vmem:[#allocation3] sm:$0xff]
      %v84 = vld [vmem:[#allocation3 + $0x8] sm:$0xff]
      %v85 = vld [vmem:[#allocation4] sm:$0xff]
      %v86 = vld [vmem:[#allocation4 + $0x8] sm:$0xff]
      %88 = vset.pattern.permute.xlu0 0
      %89 = vperm.xlu0 %88, %v80
      %v90 = vpop.permute.xlu0 %89
      %93 = vset.pattern.permute.xlu0 0
      %94 = vperm.xlu0 %93, %v81
      %v95 = vpop.permute.xlu0 %94
      %v97 = vlaneseq
      %v98 = vshrl.u32 %v97, 7
      %v99 = vsub.s32 0, %v98
      %v100 = vrot.slane %v82, %v99
      %v101 = vadd.f32 %v90, %v100
      %v102 = vadd.f32 %v95, %v100
      %s103 = sld [smem:[#allocation7]]
      %105 = vset.pattern.permute.xlu0 0
      %106 = vperm.xlu0 %105, %v68
      %v107 = vpop.permute.xlu0 %106
      %110 = vset.pattern.permute.xlu0 0
      %111 = vperm.xlu0 %110, %v69
      %v112 = vpop.permute.xlu0 %111
      %v114 = vlaneseq
      %v115 = vshrl.u32 %v114, 7
      %v116 = vsub.s32 0, %v115
      %v117 = vrot.slane %v70, %v116
      %v118 = vadd.f32 %v107, %v117
      %v119 = vadd.f32 %v112, %v117
      %v120 = vand.u32 2147483647, %v118
      %v121 = vand.u32 2147483647, %v119
      %v122 = vstv %s103
      %v123 = vmul.f32 %v122, %v120
      %v124 = vmul.f32 %v122, %v121
      %v125 = vadd.f32 %v101, %v123
      %v126 = vadd.f32 %v102, %v124
      %s127 = sld [smem:[#allocation7 + $0x1]]
      %128 = vset.pattern.permute.xlu0 1
      %129 = vperm.xlu0 %128, %v68
      %v130 = vpop.permute.xlu0 %129
      %132 = vset.pattern.permute.xlu0 1
      %133 = vperm.xlu0 %132, %v69
      %v134 = vpop.permute.xlu0 %133
      %v136 = vlaneseq
      %v137 = vshrl.u32 %v136, 7
      %v138 = vsub.s32 1, %v137
      %v139 = vrot.slane %v70, %v138
      %v140 = vadd.f32 %v130, %v139
      %v141 = vadd.f32 %v134, %v139
      %v142 = vand.u32 2147483647, %v140
      %v143 = vand.u32 2147483647, %v141
      %v144 = vstv %s127
      %v145 = vmul.f32 %v144, %v142
      %v146 = vmul.f32 %v144, %v143
      %v147 = vadd.f32 %v125, %v145
      %v148 = vadd.f32 %v126, %v146
      %s149 = sld [smem:[#allocation7 + $0x2]]
      %150 = vset.pattern.permute.xlu0 2
      %151 = vperm.xlu0 %150, %v68
      %v152 = vpop.permute.xlu0 %151
      %154 = vset.pattern.permute.xlu0 2
      %155 = vperm.xlu0 %154, %v69
      %v156 = vpop.permute.xlu0 %155
      %v158 = vlaneseq
      %v159 = vshrl.u32 %v158, 7
      %v160 = vsub.s32 2, %v159
      %v161 = vrot.slane %v70, %v160
      %v162 = vadd.f32 %v152, %v161
      %v163 = vadd.f32 %v156, %v161
      %v164 = vand.u32 2147483647, %v162
      %v165 = vand.u32 2147483647, %v163
      %v166 = vstv %s149
      %v167 = vmul.f32 %v166, %v164
      %v168 = vmul.f32 %v166, %v165
      %v169 = vadd.f32 %v147, %v167
      %v170 = vadd.f32 %v148, %v168
      %s171 = sld [smem:[#allocation7 + $0x3]]
      %172 = vset.pattern.permute.xlu0 3
      %173 = vperm.xlu0 %172, %v68
      %v174 = vpop.permute.xlu0 %173
      %176 = vset.pattern.permute.xlu0 3
      %177 = vperm.xlu0 %176, %v69
      %v178 = vpop.permute.xlu0 %177
      %v180 = vlaneseq
      %v181 = vshrl.u32 %v180, 7
      %v182 = vsub.s32 3, %v181
      %v183 = vrot.slane %v70, %v182
      %v184 = vadd.f32 %v174, %v183
      %v185 = vadd.f32 %v178, %v183
      %v186 = vand.u32 2147483647, %v184
      %v187 = vand.u32 2147483647, %v185
      %v188 = vstv %s171
      %v189 = vmul.f32 %v188, %v186
      %v190 = vmul.f32 %v188, %v187
      %v191 = vadd.f32 %v169, %v189
      %v192 = vadd.f32 %v170, %v190
      %s193 = sld [smem:[#allocation7 + $0x4]]
      %194 = vset.pattern.permute.xlu0 4
      %195 = vperm.xlu0 %194, %v68
      %v196 = vpop.permute.xlu0 %195
      %198 = vset.pattern.permute.xlu0 4
      %199 = vperm.xlu0 %198, %v69
      %v200 = vpop.permute.xlu0 %199
      %v202 = vlaneseq
      %v203 = vshrl.u32 %v202, 7
      %v204 = vsub.s32 4, %v203
      %v205 = vrot.slane %v70, %v204
      %v206 = vadd.f32 %v196, %v205
      %v207 = vadd.f32 %v200, %v205
      %v208 = vand.u32 2147483647, %v206
      %v209 = vand.u32 2147483647, %v207
      %v210 = vstv %s193
      %v211 = vmul.f32 %v210, %v208
      %v212 = vmul.f32 %v210, %v209
      %v213 = vadd.f32 %v191, %v211
      %v214 = vadd.f32 %v192, %v212
      %s215 = sld [smem:[#allocation7 + $0x5]]
      %216 = vset.pattern.permute.xlu0 5
      %217 = vperm.xlu0 %216, %v68
      %v218 = vpop.permute.xlu0 %217
      %220 = vset.pattern.permute.xlu0 5
      %221 = vperm.xlu0 %220, %v69
      %v222 = vpop.permute.xlu0 %221
      %v224 = vlaneseq
      %v225 = vshrl.u32 %v224, 7
      %v226 = vsub.s32 5, %v225
      %v227 = vrot.slane %v70, %v226
      %v228 = vadd.f32 %v218, %v227
      %v229 = vadd.f32 %v222, %v227
      %v230 = vand.u32 2147483647, %v228
      %v231 = vand.u32 2147483647, %v229
      %v232 = vstv %s215
      %v233 = vmul.f32 %v232, %v230
      %v234 = vmul.f32 %v232, %v231
      %v235 = vadd.f32 %v213, %v233
      %v236 = vadd.f32 %v214, %v234
      %s237 = sld [smem:[#allocation7 + $0x6]]
      %238 = vset.pattern.permute.xlu0 6
      %239 = vperm.xlu0 %238, %v68
      %v240 = vpop.permute.xlu0 %239
      %242 = vset.pattern.permute.xlu0 6
      %243 = vperm.xlu0 %242, %v69
      %v244 = vpop.permute.xlu0 %243
      %v246 = vlaneseq
      %v247 = vshrl.u32 %v246, 7
      %v248 = vsub.s32 6, %v247
      %v249 = vrot.slane %v70, %v248
      %v250 = vadd.f32 %v240, %v249
      %v251 = vadd.f32 %v244, %v249
      %v252 = vand.u32 2147483647, %v250
      %v253 = vand.u32 2147483647, %v251
      %v254 = vstv %s237
      %v255 = vmul.f32 %v254, %v252
      %v256 = vmul.f32 %v254, %v253
      %v257 = vadd.f32 %v235, %v255
      %v258 = vadd.f32 %v236, %v256
      %s259 = sld [smem:[#allocation7 + $0x7]]
      %260 = vset.pattern.permute.xlu0 7
      %261 = vperm.xlu0 %260, %v68
      %v262 = vpop.permute.xlu0 %261
      %264 = vset.pattern.permute.xlu0 7
      %265 = vperm.xlu0 %264, %v69
      %v266 = vpop.permute.xlu0 %265
      %v268 = vlaneseq
      %v269 = vshrl.u32 %v268, 7
      %v270 = vsub.s32 7, %v269
      %v271 = vrot.slane %v70, %v270
      %v272 = vadd.f32 %v262, %v271
      %v273 = vadd.f32 %v266, %v271
      %v274 = vand.u32 2147483647, %v272
      %v275 = vand.u32 2147483647, %v273
      %v276 = vstv %s259
      %v277 = vmul.f32 %v276, %v274
      %v278 = vmul.f32 %v276, %v275
      %v279 = vadd.f32 %v257, %v277
      %v280 = vadd.f32 %v258, %v278
      %s281 = sld [smem:[#allocation7 + $0x8]]
      %282 = vset.pattern.permute.xlu0 8
      %283 = vperm.xlu0 %282, %v68
      %v284 = vpop.permute.xlu0 %283
      %286 = vset.pattern.permute.xlu0 8
      %287 = vperm.xlu0 %286, %v69
      %v288 = vpop.permute.xlu0 %287
      %v290 = vlaneseq
      %v291 = vshrl.u32 %v290, 7
      %v292 = vsub.s32 0, %v291
      %v293 = vrot.slane %v71, %v292
      %v294 = vadd.f32 %v284, %v293
      %v295 = vadd.f32 %v288, %v293
      %v296 = vand.u32 2147483647, %v294
      %v297 = vand.u32 2147483647, %v295
      %v298 = vstv %s281
      %v299 = vmul.f32 %v298, %v296
      %v300 = vmul.f32 %v298, %v297
      %v301 = vadd.f32 %v279, %v299
      %v302 = vadd.f32 %v280, %v300
      %s303 = sld [smem:[#allocation7 + $0x9]]
      %304 = vset.pattern.permute.xlu0 9
      %305 = vperm.xlu0 %304, %v68
      %v306 = vpop.permute.xlu0 %305
      %308 = vset.pattern.permute.xlu0 9
      %309 = vperm.xlu0 %308, %v69
      %v310 = vpop.permute.xlu0 %309
      %v312 = vlaneseq
      %v313 = vshrl.u32 %v312, 7
      %v314 = vsub.s32 1, %v313
      %v315 = vrot.slane %v71, %v314
      %v316 = vadd.f32 %v306, %v315
      %v317 = vadd.f32 %v310, %v315
      %v318 = vand.u32 2147483647, %v316
      %v319 = vand.u32 2147483647, %v317
      %v320 = vstv %s303
      %v321 = vmul.f32 %v320, %v318
      %v322 = vmul.f32 %v320, %v319
      %v323 = vadd.f32 %v301, %v321
      %v324 = vadd.f32 %v302, %v322
      %s325 = sld [smem:[#allocation7 + $0xa]]
      %326 = vset.pattern.permute.xlu0 10
      %327 = vperm.xlu0 %326, %v68
      %v328 = vpop.permute.xlu0 %327
      %330 = vset.pattern.permute.xlu0 10
      %331 = vperm.xlu0 %330, %v69
      %v332 = vpop.permute.xlu0 %331
      %v334 = vlaneseq
      %v335 = vshrl.u32 %v334, 7
      %v336 = vsub.s32 2, %v335
      %v337 = vrot.slane %v71, %v336
      %v338 = vadd.f32 %v328, %v337
      %v339 = vadd.f32 %v332, %v337
      %v340 = vand.u32 2147483647, %v338
      %v341 = vand.u32 2147483647, %v339
      %v342 = vstv %s325
      %v343 = vmul.f32 %v342, %v340
      %v344 = vmul.f32 %v342, %v341
      %v345 = vadd.f32 %v323, %v343
      %v346 = vadd.f32 %v324, %v344
      %s347 = sld [smem:[#allocation7 + $0xb]]
      %348 = vset.pattern.permute.xlu0 11
      %349 = vperm.xlu0 %348, %v68
      %v350 = vpop.permute.xlu0 %349
      %352 = vset.pattern.permute.xlu0 11
      %353 = vperm.xlu0 %352, %v69
      %v354 = vpop.permute.xlu0 %353
      %v356 = vlaneseq
      %v357 = vshrl.u32 %v356, 7
      %v358 = vsub.s32 3, %v357
      %v359 = vrot.slane %v71, %v358
      %v360 = vadd.f32 %v350, %v359
      %v361 = vadd.f32 %v354, %v359
      %v362 = vand.u32 2147483647, %v360
      %v363 = vand.u32 2147483647, %v361
      %v364 = vstv %s347
      %v365 = vmul.f32 %v364, %v362
      %v366 = vmul.f32 %v364, %v363
      %v367 = vadd.f32 %v345, %v365
      %v368 = vadd.f32 %v346, %v366
      %s369 = sld [smem:[#allocation7 + $0xc]]
      %370 = vset.pattern.permute.xlu0 12
      %371 = vperm.xlu0 %370, %v68
      %v372 = vpop.permute.xlu0 %371
      %374 = vset.pattern.permute.xlu0 12
      %375 = vperm.xlu0 %374, %v69
      %v376 = vpop.permute.xlu0 %375
      %v378 = vlaneseq
      %v379 = vshrl.u32 %v378, 7
      %v380 = vsub.s32 4, %v379
      %v381 = vrot.slane %v71, %v380
      %v382 = vadd.f32 %v372, %v381
      %v383 = vadd.f32 %v376, %v381
      %v384 = vand.u32 2147483647, %v382
      %v385 = vand.u32 2147483647, %v383
      %v386 = vstv %s369
      %v387 = vmul.f32 %v386, %v384
      %v388 = vmul.f32 %v386, %v385
      %v389 = vadd.f32 %v367, %v387
      %v390 = vadd.f32 %v368, %v388
      %s391 = sld [smem:[#allocation7 + $0xd]]
      %392 = vset.pattern.permute.xlu0 13
      %393 = vperm.xlu0 %392, %v68
      %v394 = vpop.permute.xlu0 %393
      %396 = vset.pattern.permute.xlu0 13
      %397 = vperm.xlu0 %396, %v69
      %v398 = vpop.permute.xlu0 %397
      %v400 = vlaneseq
      %v401 = vshrl.u32 %v400, 7
      %v402 = vsub.s32 5, %v401
      %v403 = vrot.slane %v71, %v402
      %v404 = vadd.f32 %v394, %v403
      %v405 = vadd.f32 %v398, %v403
      %v406 = vand.u32 2147483647, %v404
      %v407 = vand.u32 2147483647, %v405
      %v408 = vstv %s391
      %v409 = vmul.f32 %v408, %v406
      %v410 = vmul.f32 %v408, %v407
      %v411 = vadd.f32 %v389, %v409
      %v412 = vadd.f32 %v390, %v410
      %s413 = sld [smem:[#allocation7 + $0xe]]
      %414 = vset.pattern.permute.xlu0 14
      %415 = vperm.xlu0 %414, %v68
      %v416 = vpop.permute.xlu0 %415
      %418 = vset.pattern.permute.xlu0 14
      %419 = vperm.xlu0 %418, %v69
      %v420 = vpop.permute.xlu0 %419
      %v422 = vlaneseq
      %v423 = vshrl.u32 %v422, 7
      %v424 = vsub.s32 6, %v423
      %v425 = vrot.slane %v71, %v424
      %v426 = vadd.f32 %v416, %v425
      %v427 = vadd.f32 %v420, %v425
      %v428 = vand.u32 2147483647, %v426
      %v429 = vand.u32 2147483647, %v427
      %v430 = vstv %s413
      %v431 = vmul.f32 %v430, %v428
      %v432 = vmul.f32 %v430, %v429
      %v433 = vadd.f32 %v411, %v431
      %v434 = vadd.f32 %v412, %v432
      %s435 = sld [smem:[#allocation7 + $0xf]]
      %436 = vset.pattern.permute.xlu0 15
      %437 = vperm.xlu0 %436, %v68
      %v438 = vpop.permute.xlu0 %437
      %440 = vset.pattern.permute.xlu0 15
      %441 = vperm.xlu0 %440, %v69
      %v442 = vpop.permute.xlu0 %441
      %v444 = vlaneseq
      %v445 = vshrl.u32 %v444, 7
      %v446 = vsub.s32 7, %v445
      %v447 = vrot.slane %v71, %v446
      %v448 = vadd.f32 %v438, %v447
      %v449 = vadd.f32 %v442, %v447
      %v450 = vand.u32 2147483647, %v448
      %v451 = vand.u32 2147483647, %v449
      %v452 = vstv %s435
      %v453 = vmul.f32 %v452, %v450
      %v454 = vmul.f32 %v452, %v451
      %v455 = vadd.f32 %v433, %v453
      %v456 = vadd.f32 %v434, %v454
      %vm457 = vcmask 130048
      %v458 = vsel %vm457, %v455, -inf
      %459 = vmax.xlane.f32.xlu0 %v458
      %v460 = vpop.xlane.xlu0 %459
      %v461 = vsel %vm457, %v456, -inf
      %462 = vmax.xlane.f32.xlu0 %v461
      %v463 = vpop.xlane.xlu0 %462
      %v464 = vmax.f32 %v83, %v460
      %v465 = vmax.f32 %v84, %v463
      %v466 = vsub.f32 %v83, %v464
      %v467 = vsub.f32 %v84, %v465
      %v468 = vmul.f32 %v466, 1.442695
      %v469 = vpow.pop %v468
      %v470 = vmul.f32 %v467, 1.442695
      %v471 = vpow.pop %v470
      %473 = vset.pattern.permute.xlu0 0
      %474 = vperm.xlu0 %473, %v464
      %v475 = vpop.permute.xlu0 %474
      %478 = vset.pattern.permute.xlu0 0
      %479 = vperm.xlu0 %478, %v465
      %v480 = vpop.permute.xlu0 %479
      %v482 = vsub.f32 %v455, %v475
      %v483 = vsub.f32 %v456, %v480
      %v484 = vmul.f32 %v482, 1.442695
      %v485 = vpow.pop %v484
      %v486 = vmul.f32 %v483, 1.442695
      %v487 = vpow.pop %v486
      %v488 = vsel %vm66, 16843009, 0
      %v489 = vsel %vm67, 16843009, 0
      %v490 = vunpack.c.0.s8 %v488
      %v491 = vunpack.c.0.s8 %v489
      %vm492 = vcmp.ne.s32.totalorder %v490, 0
      %vm493 = vcmp.ne.s32.totalorder %v491, 0
      %v494 = vsel %vm492, %v485, 0.0
      %v495 = vsel %vm493, %v487, 0.0
      %v496 = vmul.f32 %v469, %v85
      %v497 = vmul.f32 %v471, %v86
      %v498 = vsel %vm457, %v494, 0.0
      %499 = vadd.xlane.f32.xlu0 %v498
      %v500 = vpop.xlane.xlu0 %499
      %v501 = vsel %vm457, %v495, 0.0
      %502 = vadd.xlane.f32.xlu0 %v501
      %v503 = vpop.xlane.xlu0 %502
      %v504 = vadd.f32 %v496, %v500
      %v505 = vadd.f32 %v497, %v503
      %507 = vset.pattern.permute.xlu0 0
      %508 = vperm.xlu0 %507, %v469
      %v509 = vpop.permute.xlu0 %508
      %512 = vset.pattern.permute.xlu0 0
      %513 = vperm.xlu0 %512, %v471
      %v514 = vpop.permute.xlu0 %513
      %v516 = vpack.c.bf16 %v495, %v494
      %v519 = vunpack.c.l.b16 %v78
      %v520 = vunpack.c.l.b16 %v79
      %v521 = vpack.c.b16 %v520, %v519
      %v524 = vsel %vm457, %v516, 0
      %526 = vmatprep.subr.bf16.mxu0 0
      %527 = vmatpush1.bf16.msra.mxu0 %v521
      %528 = vmatprep.subr.bf16.mxu0 0
      %529 = vmatpush1.bf16.msra.mxu0 0
      %530 = vmatprep.subr.bf16.mxu0 0
      %531 = vmatpush1.bf16.msra.mxu0 0
      %532 = vmatprep.subr.bf16.mxu0 0
      %533 = vmatpush1.bf16.msra.mxu0 0
      %534 = vmatprep.subr.bf16.mxu0 0
      %535 = vmatpush1.bf16.msra.mxu0 0
      %536 = vmatprep.subr.bf16.mxu0 0
      %537 = vmatpush1.bf16.msra.mxu0 0
      %538 = vmatprep.subr.bf16.mxu0 0
      %539 = vmatpush1.bf16.msra.mxu0 0
      %540 = vmatprep.subr.bf16.mxu0 0
      %541 = vmatpush1.bf16.msra.mxu0 0
      %542 = vmatprep.subr.bf16.mxu0 0
      %543 = vmatpush1.bf16.msra.mxu0 0
      %544 = vmatprep.subr.bf16.mxu0 0
      %545 = vmatpush1.bf16.msra.mxu0 0
      %546 = vmatprep.subr.bf16.mxu0 0
      %547 = vmatpush1.bf16.msra.mxu0 0
      %548 = vmatprep.subr.bf16.mxu0 0
      %549 = vmatpush1.bf16.msra.mxu0 0
      %550 = vmatprep.subr.bf16.mxu0 0
      %551 = vmatpush1.bf16.msra.mxu0 0
      %552 = vmatprep.subr.bf16.mxu0 0
      %553 = vmatpush1.bf16.msra.mxu0 0
      %554 = vmatprep.subr.bf16.mxu0 0
      %555 = vmatpush1.bf16.msra.mxu0 0
      %556 = vmatprep.subr.bf16.mxu0 0
      %557 = vmatpush1.bf16.msra.mxu0 0
      %558 = vmatprep.mubr.bf16.mxu0 0
      %559 = vmatmul.mubr.bf16.gmra.mrb[0].mxu0 %v524
      %v560 = vpop.f32.mrb[0].mxu0
      %v561 = vadd.f32 0.0, %v560
      %v562 = vpop.f32.mrb[0].mxu0
      %v563 = vpop.f32.mrb[0].mxu0
      %v564 = vadd.f32 0.0, %v563
      %v565 = vpop.f32.mrb[0].mxu0
      %566 = vdwg.mxu0
      %567 = vset.pattern.permute.xlu0 1
      %568 = vperm.xlu0 %567, %v80
      %v569 = vpop.permute.xlu0 %568
      %571 = vset.pattern.permute.xlu0 1
      %572 = vperm.xlu0 %571, %v81
      %v573 = vpop.permute.xlu0 %572
      %v575 = vlaneseq
      %v576 = vshrl.u32 %v575, 7
      %v577 = vsub.s32 1, %v576
      %v578 = vrot.slane %v82, %v577
      %v579 = vadd.f32 %v569, %v578
      %v580 = vadd.f32 %v573, %v578
      %s581 = sld [smem:[#allocation7 + $0x10]]
      %582 = vset.pattern.permute.xlu0 16
      %583 = vperm.xlu0 %582, %v68
      %v584 = vpop.permute.xlu0 %583
      %586 = vset.pattern.permute.xlu0 16
      %587 = vperm.xlu0 %586, %v69
      %v588 = vpop.permute.xlu0 %587
      %v590 = vlaneseq
      %v591 = vshrl.u32 %v590, 7
      %v592 = vsub.s32 0, %v591
      %v593 = vrot.slane %v72, %v592
      %v594 = vadd.f32 %v584, %v593
      %v595 = vadd.f32 %v588, %v593
      %v596 = vand.u32 2147483647, %v594
      %v597 = vand.u32 2147483647, %v595
      %v598 = vstv %s581
      %v599 = vmul.f32 %v598, %v596
      %v600 = vmul.f32 %v598, %v597
      %v601 = vadd.f32 %v579, %v599
      %v602 = vadd.f32 %v580, %v600
      %s603 = sld [smem:[#allocation7 + $0x11]]
      %604 = vset.pattern.permute.xlu0 17
      %605 = vperm.xlu0 %604, %v68
      %v606 = vpop.permute.xlu0 %605
      %608 = vset.pattern.permute.xlu0 17
      %609 = vperm.xlu0 %608, %v69
      %v610 = vpop.permute.xlu0 %609
      %v612 = vlaneseq
      %v613 = vshrl.u32 %v612, 7
      %v614 = vsub.s32 1, %v613
      %v615 = vrot.slane %v72, %v614
      %v616 = vadd.f32 %v606, %v615
      %v617 = vadd.f32 %v610, %v615
      %v618 = vand.u32 2147483647, %v616
      %v619 = vand.u32 2147483647, %v617
      %v620 = vstv %s603
      %v621 = vmul.f32 %v620, %v618
      %v622 = vmul.f32 %v620, %v619
      %v623 = vadd.f32 %v601, %v621
      %v624 = vadd.f32 %v602, %v622
      %s625 = sld [smem:[#allocation7 + $0x12]]
      %626 = vset.pattern.permute.xlu0 18
      %627 = vperm.xlu0 %626, %v68
      %v628 = vpop.permute.xlu0 %627
      %630 = vset.pattern.permute.xlu0 18
      %631 = vperm.xlu0 %630, %v69
      %v632 = vpop.permute.xlu0 %631
      %v634 = vlaneseq
      %v635 = vshrl.u32 %v634, 7
      %v636 = vsub.s32 2, %v635
      %v637 = vrot.slane %v72, %v636
      %v638 = vadd.f32 %v628, %v637
      %v639 = vadd.f32 %v632, %v637
      %v640 = vand.u32 2147483647, %v638
      %v641 = vand.u32 2147483647, %v639
      %v642 = vstv %s625
      %v643 = vmul.f32 %v642, %v640
      %v644 = vmul.f32 %v642, %v641
      %v645 = vadd.f32 %v623, %v643
      %v646 = vadd.f32 %v624, %v644
      %s647 = sld [smem:[#allocation7 + $0x13]]
      %648 = vset.pattern.permute.xlu0 19
      %649 = vperm.xlu0 %648, %v68
      %v650 = vpop.permute.xlu0 %649
      %652 = vset.pattern.permute.xlu0 19
      %653 = vperm.xlu0 %652, %v69
      %v654 = vpop.permute.xlu0 %653
      %v656 = vlaneseq
      %v657 = vshrl.u32 %v656, 7
      %v658 = vsub.s32 3, %v657
      %v659 = vrot.slane %v72, %v658
      %v660 = vadd.f32 %v650, %v659
      %v661 = vadd.f32 %v654, %v659
      %v662 = vand.u32 2147483647, %v660
      %v663 = vand.u32 2147483647, %v661
      %v664 = vstv %s647
      %v665 = vmul.f32 %v664, %v662
      %v666 = vmul.f32 %v664, %v663
      %v667 = vadd.f32 %v645, %v665
      %v668 = vadd.f32 %v646, %v666
      %s669 = sld [smem:[#allocation7 + $0x14]]
      %670 = vset.pattern.permute.xlu0 20
      %671 = vperm.xlu0 %670, %v68
      %v672 = vpop.permute.xlu0 %671
      %674 = vset.pattern.permute.xlu0 20
      %675 = vperm.xlu0 %674, %v69
      %v676 = vpop.permute.xlu0 %675
      %v678 = vlaneseq
      %v679 = vshrl.u32 %v678, 7
      %v680 = vsub.s32 4, %v679
      %v681 = vrot.slane %v72, %v680
      %v682 = vadd.f32 %v672, %v681
      %v683 = vadd.f32 %v676, %v681
      %v684 = vand.u32 2147483647, %v682
      %v685 = vand.u32 2147483647, %v683
      %v686 = vstv %s669
      %v687 = vmul.f32 %v686, %v684
      %v688 = vmul.f32 %v686, %v685
      %v689 = vadd.f32 %v667, %v687
      %v690 = vadd.f32 %v668, %v688
      %s691 = sld [smem:[#allocation7 + $0x15]]
      %692 = vset.pattern.permute.xlu0 21
      %693 = vperm.xlu0 %692, %v68
      %v694 = vpop.permute.xlu0 %693
      %696 = vset.pattern.permute.xlu0 21
      %697 = vperm.xlu0 %696, %v69
      %v698 = vpop.permute.xlu0 %697
      %v700 = vlaneseq
      %v701 = vshrl.u32 %v700, 7
      %v702 = vsub.s32 5, %v701
      %v703 = vrot.slane %v72, %v702
      %v704 = vadd.f32 %v694, %v703
      %v705 = vadd.f32 %v698, %v703
      %v706 = vand.u32 2147483647, %v704
      %v707 = vand.u32 2147483647, %v705
      %v708 = vstv %s691
      %v709 = vmul.f32 %v708, %v706
      %v710 = vmul.f32 %v708, %v707
      %v711 = vadd.f32 %v689, %v709
      %v712 = vadd.f32 %v690, %v710
      %s713 = sld [smem:[#allocation7 + $0x16]]
      %714 = vset.pattern.permute.xlu0 22
      %715 = vperm.xlu0 %714, %v68
      %v716 = vpop.permute.xlu0 %715
      %718 = vset.pattern.permute.xlu0 22
      %719 = vperm.xlu0 %718, %v69
      %v720 = vpop.permute.xlu0 %719
      %v722 = vlaneseq
      %v723 = vshrl.u32 %v722, 7
      %v724 = vsub.s32 6, %v723
      %v725 = vrot.slane %v72, %v724
      %v726 = vadd.f32 %v716, %v725
      %v727 = vadd.f32 %v720, %v725
      %v728 = vand.u32 2147483647, %v726
      %v729 = vand.u32 2147483647, %v727
      %v730 = vstv %s713
      %v731 = vmul.f32 %v730, %v728
      %v732 = vmul.f32 %v730, %v729
      %v733 = vadd.f32 %v711, %v731
      %v734 = vadd.f32 %v712, %v732
      %s735 = sld [smem:[#allocation7 + $0x17]]
      %736 = vset.pattern.permute.xlu0 23
      %737 = vperm.xlu0 %736, %v68
      %v738 = vpop.permute.xlu0 %737
      %740 = vset.pattern.permute.xlu0 23
      %741 = vperm.xlu0 %740, %v69
      %v742 = vpop.permute.xlu0 %741
      %v744 = vlaneseq
      %v745 = vshrl.u32 %v744, 7
      %v746 = vsub.s32 7, %v745
      %v747 = vrot.slane %v72, %v746
      %v748 = vadd.f32 %v738, %v747
      %v749 = vadd.f32 %v742, %v747
      %v750 = vand.u32 2147483647, %v748
      %v751 = vand.u32 2147483647, %v749
      %v752 = vstv %s735
      %v753 = vmul.f32 %v752, %v750
      %v754 = vmul.f32 %v752, %v751
      %v755 = vadd.f32 %v733, %v753
      %v756 = vadd.f32 %v734, %v754
      %s757 = sld [smem:[#allocation7 + $0x18]]
      %758 = vset.pattern.permute.xlu0 24
      %759 = vperm.xlu0 %758, %v68
      %v760 = vpop.permute.xlu0 %759
      %762 = vset.pattern.permute.xlu0 24
      %763 = vperm.xlu0 %762, %v69
      %v764 = vpop.permute.xlu0 %763
      %v766 = vlaneseq
      %v767 = vshrl.u32 %v766, 7
      %v768 = vsub.s32 0, %v767
      %v769 = vrot.slane %v73, %v768
      %v770 = vadd.f32 %v760, %v769
      %v771 = vadd.f32 %v764, %v769
      %v772 = vand.u32 2147483647, %v770
      %v773 = vand.u32 2147483647, %v771
      %v774 = vstv %s757
      %v775 = vmul.f32 %v774, %v772
      %v776 = vmul.f32 %v774, %v773
      %v777 = vadd.f32 %v755, %v775
      %v778 = vadd.f32 %v756, %v776
      %s779 = sld [smem:[#allocation7 + $0x19]]
      %780 = vset.pattern.permute.xlu0 25
      %781 = vperm.xlu0 %780, %v68
      %v782 = vpop.permute.xlu0 %781
      %784 = vset.pattern.permute.xlu0 25
      %785 = vperm.xlu0 %784, %v69
      %v786 = vpop.permute.xlu0 %785
      %v788 = vlaneseq
      %v789 = vshrl.u32 %v788, 7
      %v790 = vsub.s32 1, %v789
      %v791 = vrot.slane %v73, %v790
      %v792 = vadd.f32 %v782, %v791
      %v793 = vadd.f32 %v786, %v791
      %v794 = vand.u32 2147483647, %v792
      %v795 = vand.u32 2147483647, %v793
      %v796 = vstv %s779
      %v797 = vmul.f32 %v796, %v794
      %v798 = vmul.f32 %v796, %v795
      %v799 = vadd.f32 %v777, %v797
      %v800 = vadd.f32 %v778, %v798
      %s801 = sld [smem:[#allocation7 + $0x1a]]
      %802 = vset.pattern.permute.xlu0 26
      %803 = vperm.xlu0 %802, %v68
      %v804 = vpop.permute.xlu0 %803
      %806 = vset.pattern.permute.xlu0 26
      %807 = vperm.xlu0 %806, %v69
      %v808 = vpop.permute.xlu0 %807
      %v810 = vlaneseq
      %v811 = vshrl.u32 %v810, 7
      %v812 = vsub.s32 2, %v811
      %v813 = vrot.slane %v73, %v812
      %v814 = vadd.f32 %v804, %v813
      %v815 = vadd.f32 %v808, %v813
      %v816 = vand.u32 2147483647, %v814
      %v817 = vand.u32 2147483647, %v815
      %v818 = vstv %s801
      %v819 = vmul.f32 %v818, %v816
      %v820 = vmul.f32 %v818, %v817
      %v821 = vadd.f32 %v799, %v819
      %v822 = vadd.f32 %v800, %v820
      %s823 = sld [smem:[#allocation7 + $0x1b]]
      %824 = vset.pattern.permute.xlu0 27
      %825 = vperm.xlu0 %824, %v68
      %v826 = vpop.permute.xlu0 %825
      %828 = vset.pattern.permute.xlu0 27
      %829 = vperm.xlu0 %828, %v69
      %v830 = vpop.permute.xlu0 %829
      %v832 = vlaneseq
      %v833 = vshrl.u32 %v832, 7
      %v834 = vsub.s32 3, %v833
      %v835 = vrot.slane %v73, %v834
      %v836 = vadd.f32 %v826, %v835
      %v837 = vadd.f32 %v830, %v835
      %v838 = vand.u32 2147483647, %v836
      %v839 = vand.u32 2147483647, %v837
      %v840 = vstv %s823
      %v841 = vmul.f32 %v840, %v838
      %v842 = vmul.f32 %v840, %v839
      %v843 = vadd.f32 %v821, %v841
      %v844 = vadd.f32 %v822, %v842
      %s845 = sld [smem:[#allocation7 + $0x1c]]
      %846 = vset.pattern.permute.xlu0 28
      %847 = vperm.xlu0 %846, %v68
      %v848 = vpop.permute.xlu0 %847
      %850 = vset.pattern.permute.xlu0 28
      %851 = vperm.xlu0 %850, %v69
      %v852 = vpop.permute.xlu0 %851
      %v854 = vlaneseq
      %v855 = vshrl.u32 %v854, 7
      %v856 = vsub.s32 4, %v855
      %v857 = vrot.slane %v73, %v856
      %v858 = vadd.f32 %v848, %v857
      %v859 = vadd.f32 %v852, %v857
      %v860 = vand.u32 2147483647, %v858
      %v861 = vand.u32 2147483647, %v859
      %v862 = vstv %s845
      %v863 = vmul.f32 %v862, %v860
      %v864 = vmul.f32 %v862, %v861
      %v865 = vadd.f32 %v843, %v863
      %v866 = vadd.f32 %v844, %v864
      %s867 = sld [smem:[#allocation7 + $0x1d]]
      %868 = vset.pattern.permute.xlu0 29
      %869 = vperm.xlu0 %868, %v68
      %v870 = vpop.permute.xlu0 %869
      %872 = vset.pattern.permute.xlu0 29
      %873 = vperm.xlu0 %872, %v69
      %v874 = vpop.permute.xlu0 %873
      %v876 = vlaneseq
      %v877 = vshrl.u32 %v876, 7
      %v878 = vsub.s32 5, %v877
      %v879 = vrot.slane %v73, %v878
      %v880 = vadd.f32 %v870, %v879
      %v881 = vadd.f32 %v874, %v879
      %v882 = vand.u32 2147483647, %v880
      %v883 = vand.u32 2147483647, %v881
      %v884 = vstv %s867
      %v885 = vmul.f32 %v884, %v882
      %v886 = vmul.f32 %v884, %v883
      %v887 = vadd.f32 %v865, %v885
      %v888 = vadd.f32 %v866, %v886
      %s889 = sld [smem:[#allocation7 + $0x1e]]
      %890 = vset.pattern.permute.xlu0 30
      %891 = vperm.xlu0 %890, %v68
      %v892 = vpop.permute.xlu0 %891
      %894 = vset.pattern.permute.xlu0 30
      %895 = vperm.xlu0 %894, %v69
      %v896 = vpop.permute.xlu0 %895
      %v898 = vlaneseq
      %v899 = vshrl.u32 %v898, 7
      %v900 = vsub.s32 6, %v899
      %v901 = vrot.slane %v73, %v900
      %v902 = vadd.f32 %v892, %v901
      %v903 = vadd.f32 %v896, %v901
      %v904 = vand.u32 2147483647, %v902
      %v905 = vand.u32 2147483647, %v903
      %v906 = vstv %s889
      %v907 = vmul.f32 %v906, %v904
      %v908 = vmul.f32 %v906, %v905
      %v909 = vadd.f32 %v887, %v907
      %v910 = vadd.f32 %v888, %v908
      %s911 = sld [smem:[#allocation7 + $0x1f]]
      %912 = vset.pattern.permute.xlu0 31
      %913 = vperm.xlu0 %912, %v68
      %v914 = vpop.permute.xlu0 %913
      %916 = vset.pattern.permute.xlu0 31
      %917 = vperm.xlu0 %916, %v69
      %v918 = vpop.permute.xlu0 %917
      %v920 = vlaneseq
      %v921 = vshrl.u32 %v920, 7
      %v922 = vsub.s32 7, %v921
      %v923 = vrot.slane %v73, %v922
      %v924 = vadd.f32 %v914, %v923
      %v925 = vadd.f32 %v918, %v923
      %v926 = vand.u32 2147483647, %v924
      %v927 = vand.u32 2147483647, %v925
      %v928 = vstv %s911
      %v929 = vmul.f32 %v928, %v926
      %v930 = vmul.f32 %v928, %v927
      %v931 = vadd.f32 %v909, %v929
      %v932 = vadd.f32 %v910, %v930
      %v933 = vsel %vm457, %v931, -inf
      %934 = vmax.xlane.f32.xlu0 %v933
      %v935 = vpop.xlane.xlu0 %934
      %v936 = vsel %vm457, %v932, -inf
      %937 = vmax.xlane.f32.xlu0 %v936
      %v938 = vpop.xlane.xlu0 %937
      %v939 = vmax.f32 %v83, %v935
      %v940 = vmax.f32 %v84, %v938
      %v941 = vsub.f32 %v83, %v939
      %v942 = vsub.f32 %v84, %v940
      %v943 = vmul.f32 %v941, 1.442695
      %v944 = vpow.pop %v943
      %v945 = vmul.f32 %v942, 1.442695
      %v946 = vpow.pop %v945
      %948 = vset.pattern.permute.xlu0 1
      %949 = vperm.xlu0 %948, %v939
      %v950 = vpop.permute.xlu0 %949
      %953 = vset.pattern.permute.xlu0 1
      %954 = vperm.xlu0 %953, %v940
      %v955 = vpop.permute.xlu0 %954
      %v957 = vsub.f32 %v931, %v950
      %v958 = vsub.f32 %v932, %v955
      %v959 = vmul.f32 %v957, 1.442695
      %v960 = vpow.pop %v959
      %v961 = vmul.f32 %v958, 1.442695
      %v962 = vpow.pop %v961
      %v963 = vsel %vm492, %v960, 0.0
      %v964 = vsel %vm493, %v962, 0.0
      %v965 = vmul.f32 %v944, %v85
      %v966 = vmul.f32 %v946, %v86
      %v967 = vsel %vm457, %v963, 0.0
      %968 = vadd.xlane.f32.xlu0 %v967
      %v969 = vpop.xlane.xlu0 %968
      %v970 = vsel %vm457, %v964, 0.0
      %971 = vadd.xlane.f32.xlu0 %v970
      %v972 = vpop.xlane.xlu0 %971
      %v973 = vadd.f32 %v965, %v969
      %v974 = vadd.f32 %v966, %v972
      %976 = vset.pattern.permute.xlu0 1
      %977 = vperm.xlu0 %976, %v944
      %v978 = vpop.permute.xlu0 %977
      %981 = vset.pattern.permute.xlu0 1
      %982 = vperm.xlu0 %981, %v946
      %v983 = vpop.permute.xlu0 %982
      %v985 = vpack.c.bf16 %v964, %v963
      %986 = vrot.lane.b32.xlu0 %v521, 112
      %v987 = vpop.permute.xlu0 %986
      %v990 = vsel %vm457, %v985, 0
      %992 = vmatprep.subr.bf16.mxu0 0
      %993 = vmatpush1.bf16.msra.mxu0 %v987
      %994 = vmatprep.subr.bf16.mxu0 0
      %995 = vmatpush1.bf16.msra.mxu0 0
      %996 = vmatprep.subr.bf16.mxu0 0
      %997 = vmatpush1.bf16.msra.mxu0 0
      %998 = vmatprep.subr.bf16.mxu0 0
      %999 = vmatpush1.bf16.msra.mxu0 0
      %1000 = vmatprep.subr.bf16.mxu0 0
      %1001 = vmatpush1.bf16.msra.mxu0 0
      %1002 = vmatprep.subr.bf16.mxu0 0
      %1003 = vmatpush1.bf16.msra.mxu0 0
      %1004 = vmatprep.subr.bf16.mxu0 0
      %1005 = vmatpush1.bf16.msra.mxu0 0
      %1006 = vmatprep.subr.bf16.mxu0 0
      %1007 = vmatpush1.bf16.msra.mxu0 0
      %1008 = vmatprep.subr.bf16.mxu0 0
      %1009 = vmatpush1.bf16.msra.mxu0 0
      %1010 = vmatprep.subr.bf16.mxu0 0
      %1011 = vmatpush1.bf16.msra.mxu0 0
      %1012 = vmatprep.subr.bf16.mxu0 0
      %1013 = vmatpush1.bf16.msra.mxu0 0
      %1014 = vmatprep.subr.bf16.mxu0 0
      %1015 = vmatpush1.bf16.msra.mxu0 0
      %1016 = vmatprep.subr.bf16.mxu0 0
      %1017 = vmatpush1.bf16.msra.mxu0 0
      %1018 = vmatprep.subr.bf16.mxu0 0
      %1019 = vmatpush1.bf16.msra.mxu0 0
      %1020 = vmatprep.subr.bf16.mxu0 0
      %1021 = vmatpush1.bf16.msra.mxu0 0
      %1022 = vmatprep.subr.bf16.mxu0 0
      %1023 = vmatpush1.bf16.msra.mxu0 0
      %1024 = vmatprep.mubr.bf16.mxu0 0
      %1025 = vmatmul.mubr.bf16.gmra.mrb[0].mxu0 %v990
      %v1026 = vpop.f32.mrb[0].mxu0
      %v1027 = vadd.f32 0.0, %v1026
      %v1028 = vpop.f32.mrb[0].mxu0
      %v1029 = vpop.f32.mrb[0].mxu0
      %v1030 = vadd.f32 0.0, %v1029
      %v1031 = vpop.f32.mrb[0].mxu0
      %1032 = vdwg.mxu0
      %1033 = vset.pattern.permute.xlu0 2
      %1034 = vperm.xlu0 %1033, %v80
      %v1035 = vpop.permute.xlu0 %1034
      %1037 = vset.pattern.permute.xlu0 2
      %1038 = vperm.xlu0 %1037, %v81
      %v1039 = vpop.permute.xlu0 %1038
      %v1041 = vlaneseq
      %v1042 = vshrl.u32 %v1041, 7
      %v1043 = vsub.s32 2, %v1042
      %v1044 = vrot.slane %v82, %v1043
      %v1045 = vadd.f32 %v1035, %v1044
      %v1046 = vadd.f32 %v1039, %v1044
      %s1047 = sld [smem:[#allocation7 + $0x20]]
      %1048 = vset.pattern.permute.xlu0 32
      %1049 = vperm.xlu0 %1048, %v68
      %v1050 = vpop.permute.xlu0 %1049
      %1052 = vset.pattern.permute.xlu0 32
      %1053 = vperm.xlu0 %1052, %v69
      %v1054 = vpop.permute.xlu0 %1053
      %v1056 = vlaneseq
      %v1057 = vshrl.u32 %v1056, 7
      %v1058 = vsub.s32 0, %v1057
      %v1059 = vrot.slane %v74, %v1058
      %v1060 = vadd.f32 %v1050, %v1059
      %v1061 = vadd.f32 %v1054, %v1059
      %v1062 = vand.u32 2147483647, %v1060
      %v1063 = vand.u32 2147483647, %v1061
      %v1064 = vstv %s1047
      %v1065 = vmul.f32 %v1064, %v1062
      %v1066 = vmul.f32 %v1064, %v1063
      %v1067 = vadd.f32 %v1045, %v1065
      %v1068 = vadd.f32 %v1046, %v1066
      %s1069 = sld [smem:[#allocation7 + $0x21]]
      %1070 = vset.pattern.permute.xlu0 33
      %1071 = vperm.xlu0 %1070, %v68
      %v1072 = vpop.permute.xlu0 %1071
      %1074 = vset.pattern.permute.xlu0 33
      %1075 = vperm.xlu0 %1074, %v69
      %v1076 = vpop.permute.xlu0 %1075
      %v1078 = vlaneseq
      %v1079 = vshrl.u32 %v1078, 7
      %v1080 = vsub.s32 1, %v1079
      %v1081 = vrot.slane %v74, %v1080
      %v1082 = vadd.f32 %v1072, %v1081
      %v1083 = vadd.f32 %v1076, %v1081
      %v1084 = vand.u32 2147483647, %v1082
      %v1085 = vand.u32 2147483647, %v1083
      %v1086 = vstv %s1069
      %v1087 = vmul.f32 %v1086, %v1084
      %v1088 = vmul.f32 %v1086, %v1085
      %v1089 = vadd.f32 %v1067, %v1087
      %v1090 = vadd.f32 %v1068, %v1088
      %s1091 = sld [smem:[#allocation7 + $0x22]]
      %1092 = vset.pattern.permute.xlu0 34
      %1093 = vperm.xlu0 %1092, %v68
      %v1094 = vpop.permute.xlu0 %1093
      %1096 = vset.pattern.permute.xlu0 34
      %1097 = vperm.xlu0 %1096, %v69
      %v1098 = vpop.permute.xlu0 %1097
      %v1100 = vlaneseq
      %v1101 = vshrl.u32 %v1100, 7
      %v1102 = vsub.s32 2, %v1101
      %v1103 = vrot.slane %v74, %v1102
      %v1104 = vadd.f32 %v1094, %v1103
      %v1105 = vadd.f32 %v1098, %v1103
      %v1106 = vand.u32 2147483647, %v1104
      %v1107 = vand.u32 2147483647, %v1105
      %v1108 = vstv %s1091
      %v1109 = vmul.f32 %v1108, %v1106
      %v1110 = vmul.f32 %v1108, %v1107
      %v1111 = vadd.f32 %v1089, %v1109
      %v1112 = vadd.f32 %v1090, %v1110
      %s1113 = sld [smem:[#allocation7 + $0x23]]
      %1114 = vset.pattern.permute.xlu0 35
      %1115 = vperm.xlu0 %1114, %v68
      %v1116 = vpop.permute.xlu0 %1115
      %1118 = vset.pattern.permute.xlu0 35
      %1119 = vperm.xlu0 %1118, %v69
      %v1120 = vpop.permute.xlu0 %1119
      %v1122 = vlaneseq
      %v1123 = vshrl.u32 %v1122, 7
      %v1124 = vsub.s32 3, %v1123
      %v1125 = vrot.slane %v74, %v1124
      %v1126 = vadd.f32 %v1116, %v1125
      %v1127 = vadd.f32 %v1120, %v1125
      %v1128 = vand.u32 2147483647, %v1126
      %v1129 = vand.u32 2147483647, %v1127
      %v1130 = vstv %s1113
      %v1131 = vmul.f32 %v1130, %v1128
      %v1132 = vmul.f32 %v1130, %v1129
      %v1133 = vadd.f32 %v1111, %v1131
      %v1134 = vadd.f32 %v1112, %v1132
      %s1135 = sld [smem:[#allocation7 + $0x24]]
      %1136 = vset.pattern.permute.xlu0 36
      %1137 = vperm.xlu0 %1136, %v68
      %v1138 = vpop.permute.xlu0 %1137
      %1140 = vset.pattern.permute.xlu0 36
      %1141 = vperm.xlu0 %1140, %v69
      %v1142 = vpop.permute.xlu0 %1141
      %v1144 = vlaneseq
      %v1145 = vshrl.u32 %v1144, 7
      %v1146 = vsub.s32 4, %v1145
      %v1147 = vrot.slane %v74, %v1146
      %v1148 = vadd.f32 %v1138, %v1147
      %v1149 = vadd.f32 %v1142, %v1147
      %v1150 = vand.u32 2147483647, %v1148
      %v1151 = vand.u32 2147483647, %v1149
      %v1152 = vstv %s1135
      %v1153 = vmul.f32 %v1152, %v1150
      %v1154 = vmul.f32 %v1152, %v1151
      %v1155 = vadd.f32 %v1133, %v1153
      %v1156 = vadd.f32 %v1134, %v1154
      %s1157 = sld [smem:[#allocation7 + $0x25]]
      %1158 = vset.pattern.permute.xlu0 37
      %1159 = vperm.xlu0 %1158, %v68
      %v1160 = vpop.permute.xlu0 %1159
      %1162 = vset.pattern.permute.xlu0 37
      %1163 = vperm.xlu0 %1162, %v69
      %v1164 = vpop.permute.xlu0 %1163
      %v1166 = vlaneseq
      %v1167 = vshrl.u32 %v1166, 7
      %v1168 = vsub.s32 5, %v1167
      %v1169 = vrot.slane %v74, %v1168
      %v1170 = vadd.f32 %v1160, %v1169
      %v1171 = vadd.f32 %v1164, %v1169
      %v1172 = vand.u32 2147483647, %v1170
      %v1173 = vand.u32 2147483647, %v1171
      %v1174 = vstv %s1157
      %v1175 = vmul.f32 %v1174, %v1172
      %v1176 = vmul.f32 %v1174, %v1173
      %v1177 = vadd.f32 %v1155, %v1175
      %v1178 = vadd.f32 %v1156, %v1176
      %s1179 = sld [smem:[#allocation7 + $0x26]]
      %1180 = vset.pattern.permute.xlu0 38
      %1181 = vperm.xlu0 %1180, %v68
      %v1182 = vpop.permute.xlu0 %1181
      %1184 = vset.pattern.permute.xlu0 38
      %1185 = vperm.xlu0 %1184, %v69
      %v1186 = vpop.permute.xlu0 %1185
      %v1188 = vlaneseq
      %v1189 = vshrl.u32 %v1188, 7
      %v1190 = vsub.s32 6, %v1189
      %v1191 = vrot.slane %v74, %v1190
      %v1192 = vadd.f32 %v1182, %v1191
      %v1193 = vadd.f32 %v1186, %v1191
      %v1194 = vand.u32 2147483647, %v1192
      %v1195 = vand.u32 2147483647, %v1193
      %v1196 = vstv %s1179
      %v1197 = vmul.f32 %v1196, %v1194
      %v1198 = vmul.f32 %v1196, %v1195
      %v1199 = vadd.f32 %v1177, %v1197
      %v1200 = vadd.f32 %v1178, %v1198
      %s1201 = sld [smem:[#allocation7 + $0x27]]
      %1202 = vset.pattern.permute.xlu0 39
      %1203 = vperm.xlu0 %1202, %v68
      %v1204 = vpop.permute.xlu0 %1203
      %1206 = vset.pattern.permute.xlu0 39
      %1207 = vperm.xlu0 %1206, %v69
      %v1208 = vpop.permute.xlu0 %1207
      %v1210 = vlaneseq
      %v1211 = vshrl.u32 %v1210, 7
      %v1212 = vsub.s32 7, %v1211
      %v1213 = vrot.slane %v74, %v1212
      %v1214 = vadd.f32 %v1204, %v1213
      %v1215 = vadd.f32 %v1208, %v1213
      %v1216 = vand.u32 2147483647, %v1214
      %v1217 = vand.u32 2147483647, %v1215
      %v1218 = vstv %s1201
      %v1219 = vmul.f32 %v1218, %v1216
      %v1220 = vmul.f32 %v1218, %v1217
      %v1221 = vadd.f32 %v1199, %v1219
      %v1222 = vadd.f32 %v1200, %v1220
      %s1223 = sld [smem:[#allocation7 + $0x28]]
      %1224 = vset.pattern.permute.xlu0 40
      %1225 = vperm.xlu0 %1224, %v68
      %v1226 = vpop.permute.xlu0 %1225
      %1228 = vset.pattern.permute.xlu0 40
      %1229 = vperm.xlu0 %1228, %v69
      %v1230 = vpop.permute.xlu0 %1229
      %v1232 = vlaneseq
      %v1233 = vshrl.u32 %v1232, 7
      %v1234 = vsub.s32 0, %v1233
      %v1235 = vrot.slane %v75, %v1234
      %v1236 = vadd.f32 %v1226, %v1235
      %v1237 = vadd.f32 %v1230, %v1235
      %v1238 = vand.u32 2147483647, %v1236
      %v1239 = vand.u32 2147483647, %v1237
      %v1240 = vstv %s1223
      %v1241 = vmul.f32 %v1240, %v1238
      %v1242 = vmul.f32 %v1240, %v1239
      %v1243 = vadd.f32 %v1221, %v1241
      %v1244 = vadd.f32 %v1222, %v1242
      %s1245 = sld [smem:[#allocation7 + $0x29]]
      %1246 = vset.pattern.permute.xlu0 41
      %1247 = vperm.xlu0 %1246, %v68
      %v1248 = vpop.permute.xlu0 %1247
      %1250 = vset.pattern.permute.xlu0 41
      %1251 = vperm.xlu0 %1250, %v69
      %v1252 = vpop.permute.xlu0 %1251
      %v1254 = vlaneseq
      %v1255 = vshrl.u32 %v1254, 7
      %v1256 = vsub.s32 1, %v1255
      %v1257 = vrot.slane %v75, %v1256
      %v1258 = vadd.f32 %v1248, %v1257
      %v1259 = vadd.f32 %v1252, %v1257
      %v1260 = vand.u32 2147483647, %v1258
      %v1261 = vand.u32 2147483647, %v1259
      %v1262 = vstv %s1245
      %v1263 = vmul.f32 %v1262, %v1260
      %v1264 = vmul.f32 %v1262, %v1261
      %v1265 = vadd.f32 %v1243, %v1263
      %v1266 = vadd.f32 %v1244, %v1264
      %s1267 = sld [smem:[#allocation7 + $0x2a]]
      %1268 = vset.pattern.permute.xlu0 42
      %1269 = vperm.xlu0 %1268, %v68
      %v1270 = vpop.permute.xlu0 %1269
      %1272 = vset.pattern.permute.xlu0 42
      %1273 = vperm.xlu0 %1272, %v69
      %v1274 = vpop.permute.xlu0 %1273
      %v1276 = vlaneseq
      %v1277 = vshrl.u32 %v1276, 7
      %v1278 = vsub.s32 2, %v1277
      %v1279 = vrot.slane %v75, %v1278
      %v1280 = vadd.f32 %v1270, %v1279
      %v1281 = vadd.f32 %v1274, %v1279
      %v1282 = vand.u32 2147483647, %v1280
      %v1283 = vand.u32 2147483647, %v1281
      %v1284 = vstv %s1267
      %v1285 = vmul.f32 %v1284, %v1282
      %v1286 = vmul.f32 %v1284, %v1283
      %v1287 = vadd.f32 %v1265, %v1285
      %v1288 = vadd.f32 %v1266, %v1286
      %s1289 = sld [smem:[#allocation7 + $0x2b]]
      %1290 = vset.pattern.permute.xlu0 43
      %1291 = vperm.xlu0 %1290, %v68
      %v1292 = vpop.permute.xlu0 %1291
      %1294 = vset.pattern.permute.xlu0 43
      %1295 = vperm.xlu0 %1294, %v69
      %v1296 = vpop.permute.xlu0 %1295
      %v1298 = vlaneseq
      %v1299 = vshrl.u32 %v1298, 7
      %v1300 = vsub.s32 3, %v1299
      %v1301 = vrot.slane %v75, %v1300
      %v1302 = vadd.f32 %v1292, %v1301
      %v1303 = vadd.f32 %v1296, %v1301
      %v1304 = vand.u32 2147483647, %v1302
      %v1305 = vand.u32 2147483647, %v1303
      %v1306 = vstv %s1289
      %v1307 = vmul.f32 %v1306, %v1304
      %v1308 = vmul.f32 %v1306, %v1305
      %v1309 = vadd.f32 %v1287, %v1307
      %v1310 = vadd.f32 %v1288, %v1308
      %s1311 = sld [smem:[#allocation7 + $0x2c]]
      %1312 = vset.pattern.permute.xlu0 44
      %1313 = vperm.xlu0 %1312, %v68
      %v1314 = vpop.permute.xlu0 %1313
      %1316 = vset.pattern.permute.xlu0 44
      %1317 = vperm.xlu0 %1316, %v69
      %v1318 = vpop.permute.xlu0 %1317
      %v1320 = vlaneseq
      %v1321 = vshrl.u32 %v1320, 7
      %v1322 = vsub.s32 4, %v1321
      %v1323 = vrot.slane %v75, %v1322
      %v1324 = vadd.f32 %v1314, %v1323
      %v1325 = vadd.f32 %v1318, %v1323
      %v1326 = vand.u32 2147483647, %v1324
      %v1327 = vand.u32 2147483647, %v1325
      %v1328 = vstv %s1311
      %v1329 = vmul.f32 %v1328, %v1326
      %v1330 = vmul.f32 %v1328, %v1327
      %v1331 = vadd.f32 %v1309, %v1329
      %v1332 = vadd.f32 %v1310, %v1330
      %s1333 = sld [smem:[#allocation7 + $0x2d]]
      %1334 = vset.pattern.permute.xlu0 45
      %1335 = vperm.xlu0 %1334, %v68
      %v1336 = vpop.permute.xlu0 %1335
      %1338 = vset.pattern.permute.xlu0 45
      %1339 = vperm.xlu0 %1338, %v69
      %v1340 = vpop.permute.xlu0 %1339
      %v1342 = vlaneseq
      %v1343 = vshrl.u32 %v1342, 7
      %v1344 = vsub.s32 5, %v1343
      %v1345 = vrot.slane %v75, %v1344
      %v1346 = vadd.f32 %v1336, %v1345
      %v1347 = vadd.f32 %v1340, %v1345
      %v1348 = vand.u32 2147483647, %v1346
      %v1349 = vand.u32 2147483647, %v1347
      %v1350 = vstv %s1333
      %v1351 = vmul.f32 %v1350, %v1348
      %v1352 = vmul.f32 %v1350, %v1349
      %v1353 = vadd.f32 %v1331, %v1351
      %v1354 = vadd.f32 %v1332, %v1352
      %s1355 = sld [smem:[#allocation7 + $0x2e]]
      %1356 = vset.pattern.permute.xlu0 46
      %1357 = vperm.xlu0 %1356, %v68
      %v1358 = vpop.permute.xlu0 %1357
      %1360 = vset.pattern.permute.xlu0 46
      %1361 = vperm.xlu0 %1360, %v69
      %v1362 = vpop.permute.xlu0 %1361
      %v1364 = vlaneseq
      %v1365 = vshrl.u32 %v1364, 7
      %v1366 = vsub.s32 6, %v1365
      %v1367 = vrot.slane %v75, %v1366
      %v1368 = vadd.f32 %v1358, %v1367
      %v1369 = vadd.f32 %v1362, %v1367
      %v1370 = vand.u32 2147483647, %v1368
      %v1371 = vand.u32 2147483647, %v1369
      %v1372 = vstv %s1355
      %v1373 = vmul.f32 %v1372, %v1370
      %v1374 = vmul.f32 %v1372, %v1371
      %v1375 = vadd.f32 %v1353, %v1373
      %v1376 = vadd.f32 %v1354, %v1374
      %s1377 = sld [smem:[#allocation7 + $0x2f]]
      %1378 = vset.pattern.permute.xlu0 47
      %1379 = vperm.xlu0 %1378, %v68
      %v1380 = vpop.permute.xlu0 %1379
      %1382 = vset.pattern.permute.xlu0 47
      %1383 = vperm.xlu0 %1382, %v69
      %v1384 = vpop.permute.xlu0 %1383
      %v1386 = vlaneseq
      %v1387 = vshrl.u32 %v1386, 7
      %v1388 = vsub.s32 7, %v1387
      %v1389 = vrot.slane %v75, %v1388
      %v1390 = vadd.f32 %v1380, %v1389
      %v1391 = vadd.f32 %v1384, %v1389
      %v1392 = vand.u32 2147483647, %v1390
      %v1393 = vand.u32 2147483647, %v1391
      %v1394 = vstv %s1377
      %v1395 = vmul.f32 %v1394, %v1392
      %v1396 = vmul.f32 %v1394, %v1393
      %v1397 = vadd.f32 %v1375, %v1395
      %v1398 = vadd.f32 %v1376, %v1396
      %v1399 = vsel %vm457, %v1397, -inf
      %1400 = vmax.xlane.f32.xlu0 %v1399
      %v1401 = vpop.xlane.xlu0 %1400
      %v1402 = vsel %vm457, %v1398, -inf
      %1403 = vmax.xlane.f32.xlu0 %v1402
      %v1404 = vpop.xlane.xlu0 %1403
      %v1405 = vmax.f32 %v83, %v1401
      %v1406 = vmax.f32 %v84, %v1404
      %v1407 = vsub.f32 %v83, %v1405
      %v1408 = vsub.f32 %v84, %v1406
      %v1409 = vmul.f32 %v1407, 1.442695
      %v1410 = vpow.pop %v1409
      %v1411 = vmul.f32 %v1408, 1.442695
      %v1412 = vpow.pop %v1411
      %1414 = vset.pattern.permute.xlu0 2
      %1415 = vperm.xlu0 %1414, %v1405
      %v1416 = vpop.permute.xlu0 %1415
      %1419 = vset.pattern.permute.xlu0 2
      %1420 = vperm.xlu0 %1419, %v1406
      %v1421 = vpop.permute.xlu0 %1420
      %v1423 = vsub.f32 %v1397, %v1416
      %v1424 = vsub.f32 %v1398, %v1421
      %v1425 = vmul.f32 %v1423, 1.442695
      %v1426 = vpow.pop %v1425
      %v1427 = vmul.f32 %v1424, 1.442695
      %v1428 = vpow.pop %v1427
      %v1429 = vsel %vm492, %v1426, 0.0
      %v1430 = vsel %vm493, %v1428, 0.0
      %v1431 = vmul.f32 %v1410, %v85
      %v1432 = vmul.f32 %v1412, %v86
      %v1433 = vsel %vm457, %v1429, 0.0
      %1434 = vadd.xlane.f32.xlu0 %v1433
      %v1435 = vpop.xlane.xlu0 %1434
      %v1436 = vsel %vm457, %v1430, 0.0
      %1437 = vadd.xlane.f32.xlu0 %v1436
      %v1438 = vpop.xlane.xlu0 %1437
      %v1439 = vadd.f32 %v1431, %v1435
      %v1440 = vadd.f32 %v1432, %v1438
      %1442 = vset.pattern.permute.xlu0 2
      %1443 = vperm.xlu0 %1442, %v1410
      %v1444 = vpop.permute.xlu0 %1443
      %1447 = vset.pattern.permute.xlu0 2
      %1448 = vperm.xlu0 %1447, %v1412
      %v1449 = vpop.permute.xlu0 %1448
      %v1451 = vpack.c.bf16 %v1430, %v1429
      %1452 = vrot.lane.b32.xlu0 %v521, 96
      %v1453 = vpop.permute.xlu0 %1452
      %v1456 = vsel %vm457, %v1451, 0
      %1458 = vmatprep.subr.bf16.mxu0 0
      %1459 = vmatpush1.bf16.msra.mxu0 %v1453
      %1460 = vmatprep.subr.bf16.mxu0 0
      %1461 = vmatpush1.bf16.msra.mxu0 0
      %1462 = vmatprep.subr.bf16.mxu0 0
      %1463 = vmatpush1.bf16.msra.mxu0 0
      %1464 = vmatprep.subr.bf16.mxu0 0
      %1465 = vmatpush1.bf16.msra.mxu0 0
      %1466 = vmatprep.subr.bf16.mxu0 0
      %1467 = vmatpush1.bf16.msra.mxu0 0
      %1468 = vmatprep.subr.bf16.mxu0 0
      %1469 = vmatpush1.bf16.msra.mxu0 0
      %1470 = vmatprep.subr.bf16.mxu0 0
      %1471 = vmatpush1.bf16.msra.mxu0 0
      %1472 = vmatprep.subr.bf16.mxu0 0
      %1473 = vmatpush1.bf16.msra.mxu0 0
      %1474 = vmatprep.subr.bf16.mxu0 0
      %1475 = vmatpush1.bf16.msra.mxu0 0
      %1476 = vmatprep.subr.bf16.mxu0 0
      %1477 = vmatpush1.bf16.msra.mxu0 0
      %1478 = vmatprep.subr.bf16.mxu0 0
      %1479 = vmatpush1.bf16.msra.mxu0 0
      %1480 = vmatprep.subr.bf16.mxu0 0
      %1481 = vmatpush1.bf16.msra.mxu0 0
      %1482 = vmatprep.subr.bf16.mxu0 0
      %1483 = vmatpush1.bf16.msra.mxu0 0
      %1484 = vmatprep.subr.bf16.mxu0 0
      %1485 = vmatpush1.bf16.msra.mxu0 0
      %1486 = vmatprep.subr.bf16.mxu0 0
      %1487 = vmatpush1.bf16.msra.mxu0 0
      %1488 = vmatprep.subr.bf16.mxu0 0
      %1489 = vmatpush1.bf16.msra.mxu0 0
      %1490 = vmatprep.mubr.bf16.mxu0 0
      %1491 = vmatmul.mubr.bf16.gmra.mrb[0].mxu0 %v1456
      %v1492 = vpop.f32.mrb[0].mxu0
      %v1493 = vadd.f32 0.0, %v1492
      %v1494 = vpop.f32.mrb[0].mxu0
      %v1495 = vpop.f32.mrb[0].mxu0
      %v1496 = vadd.f32 0.0, %v1495
      %v1497 = vpop.f32.mrb[0].mxu0
      %1498 = vdwg.mxu0
      %1499 = vset.pattern.permute.xlu0 3
      %1500 = vperm.xlu0 %1499, %v80
      %v1501 = vpop.permute.xlu0 %1500
      %1503 = vset.pattern.permute.xlu0 3
      %1504 = vperm.xlu0 %1503, %v81
      %v1505 = vpop.permute.xlu0 %1504
      %v1507 = vlaneseq
      %v1508 = vshrl.u32 %v1507, 7
      %v1509 = vsub.s32 3, %v1508
      %v1510 = vrot.slane %v82, %v1509
      %v1511 = vadd.f32 %v1501, %v1510
      %v1512 = vadd.f32 %v1505, %v1510
      %s1513 = sld [smem:[#allocation7 + $0x30]]
      %1514 = vset.pattern.permute.xlu0 48
      %1515 = vperm.xlu0 %1514, %v68
      %v1516 = vpop.permute.xlu0 %1515
      %1518 = vset.pattern.permute.xlu0 48
      %1519 = vperm.xlu0 %1518, %v69
      %v1520 = vpop.permute.xlu0 %1519
      %v1522 = vlaneseq
      %v1523 = vshrl.u32 %v1522, 7
      %v1524 = vsub.s32 0, %v1523
      %v1525 = vrot.slane %v76, %v1524
      %v1526 = vadd.f32 %v1516, %v1525
      %v1527 = vadd.f32 %v1520, %v1525
      %v1528 = vand.u32 2147483647, %v1526
      %v1529 = vand.u32 2147483647, %v1527
      %v1530 = vstv %s1513
      %v1531 = vmul.f32 %v1530, %v1528
      %v1532 = vmul.f32 %v1530, %v1529
      %v1533 = vadd.f32 %v1511, %v1531
      %v1534 = vadd.f32 %v1512, %v1532
      %s1535 = sld [smem:[#allocation7 + $0x31]]
      %1536 = vset.pattern.permute.xlu0 49
      %1537 = vperm.xlu0 %1536, %v68
      %v1538 = vpop.permute.xlu0 %1537
      %1540 = vset.pattern.permute.xlu0 49
      %1541 = vperm.xlu0 %1540, %v69
      %v1542 = vpop.permute.xlu0 %1541
      %v1544 = vlaneseq
      %v1545 = vshrl.u32 %v1544, 7
      %v1546 = vsub.s32 1, %v1545
      %v1547 = vrot.slane %v76, %v1546
      %v1548 = vadd.f32 %v1538, %v1547
      %v1549 = vadd.f32 %v1542, %v1547
      %v1550 = vand.u32 2147483647, %v1548
      %v1551 = vand.u32 2147483647, %v1549
      %v1552 = vstv %s1535
      %v1553 = vmul.f32 %v1552, %v1550
      %v1554 = vmul.f32 %v1552, %v1551
      %v1555 = vadd.f32 %v1533, %v1553
      %v1556 = vadd.f32 %v1534, %v1554
      %s1557 = sld [smem:[#allocation7 + $0x32]]
      %1558 = vset.pattern.permute.xlu0 50
      %1559 = vperm.xlu0 %1558, %v68
      %v1560 = vpop.permute.xlu0 %1559
      %1562 = vset.pattern.permute.xlu0 50
      %1563 = vperm.xlu0 %1562, %v69
      %v1564 = vpop.permute.xlu0 %1563
      %v1566 = vlaneseq
      %v1567 = vshrl.u32 %v1566, 7
      %v1568 = vsub.s32 2, %v1567
      %v1569 = vrot.slane %v76, %v1568
      %v1570 = vadd.f32 %v1560, %v1569
      %v1571 = vadd.f32 %v1564, %v1569
      %v1572 = vand.u32 2147483647, %v1570
      %v1573 = vand.u32 2147483647, %v1571
      %v1574 = vstv %s1557
      %v1575 = vmul.f32 %v1574, %v1572
      %v1576 = vmul.f32 %v1574, %v1573
      %v1577 = vadd.f32 %v1555, %v1575
      %v1578 = vadd.f32 %v1556, %v1576
      %s1579 = sld [smem:[#allocation7 + $0x33]]
      %1580 = vset.pattern.permute.xlu0 51
      %1581 = vperm.xlu0 %1580, %v68
      %v1582 = vpop.permute.xlu0 %1581
      %1584 = vset.pattern.permute.xlu0 51
      %1585 = vperm.xlu0 %1584, %v69
      %v1586 = vpop.permute.xlu0 %1585
      %v1588 = vlaneseq
      %v1589 = vshrl.u32 %v1588, 7
      %v1590 = vsub.s32 3, %v1589
      %v1591 = vrot.slane %v76, %v1590
      %v1592 = vadd.f32 %v1582, %v1591
      %v1593 = vadd.f32 %v1586, %v1591
      %v1594 = vand.u32 2147483647, %v1592
      %v1595 = vand.u32 2147483647, %v1593
      %v1596 = vstv %s1579
      %v1597 = vmul.f32 %v1596, %v1594
      %v1598 = vmul.f32 %v1596, %v1595
      %v1599 = vadd.f32 %v1577, %v1597
      %v1600 = vadd.f32 %v1578, %v1598
      %s1601 = sld [smem:[#allocation7 + $0x34]]
      %1602 = vset.pattern.permute.xlu0 52
      %1603 = vperm.xlu0 %1602, %v68
      %v1604 = vpop.permute.xlu0 %1603
      %1606 = vset.pattern.permute.xlu0 52
      %1607 = vperm.xlu0 %1606, %v69
      %v1608 = vpop.permute.xlu0 %1607
      %v1610 = vlaneseq
      %v1611 = vshrl.u32 %v1610, 7
      %v1612 = vsub.s32 4, %v1611
      %v1613 = vrot.slane %v76, %v1612
      %v1614 = vadd.f32 %v1604, %v1613
      %v1615 = vadd.f32 %v1608, %v1613
      %v1616 = vand.u32 2147483647, %v1614
      %v1617 = vand.u32 2147483647, %v1615
      %v1618 = vstv %s1601
      %v1619 = vmul.f32 %v1618, %v1616
      %v1620 = vmul.f32 %v1618, %v1617
      %v1621 = vadd.f32 %v1599, %v1619
      %v1622 = vadd.f32 %v1600, %v1620
      %s1623 = sld [smem:[#allocation7 + $0x35]]
      %1624 = vset.pattern.permute.xlu0 53
      %1625 = vperm.xlu0 %1624, %v68
      %v1626 = vpop.permute.xlu0 %1625
      %1628 = vset.pattern.permute.xlu0 53
      %1629 = vperm.xlu0 %1628, %v69
      %v1630 = vpop.permute.xlu0 %1629
      %v1632 = vlaneseq
      %v1633 = vshrl.u32 %v1632, 7
      %v1634 = vsub.s32 5, %v1633
      %v1635 = vrot.slane %v76, %v1634
      %v1636 = vadd.f32 %v1626, %v1635
      %v1637 = vadd.f32 %v1630, %v1635
      %v1638 = vand.u32 2147483647, %v1636
      %v1639 = vand.u32 2147483647, %v1637
      %v1640 = vstv %s1623
      %v1641 = vmul.f32 %v1640, %v1638
      %v1642 = vmul.f32 %v1640, %v1639
      %v1643 = vadd.f32 %v1621, %v1641
      %v1644 = vadd.f32 %v1622, %v1642
      %s1645 = sld [smem:[#allocation7 + $0x36]]
      %1646 = vset.pattern.permute.xlu0 54
      %1647 = vperm.xlu0 %1646, %v68
      %v1648 = vpop.permute.xlu0 %1647
      %1650 = vset.pattern.permute.xlu0 54
      %1651 = vperm.xlu0 %1650, %v69
      %v1652 = vpop.permute.xlu0 %1651
      %v1654 = vlaneseq
      %v1655 = vshrl.u32 %v1654, 7
      %v1656 = vsub.s32 6, %v1655
      %v1657 = vrot.slane %v76, %v1656
      %v1658 = vadd.f32 %v1648, %v1657
      %v1659 = vadd.f32 %v1652, %v1657
      %v1660 = vand.u32 2147483647, %v1658
      %v1661 = vand.u32 2147483647, %v1659
      %v1662 = vstv %s1645
      %v1663 = vmul.f32 %v1662, %v1660
      %v1664 = vmul.f32 %v1662, %v1661
      %v1665 = vadd.f32 %v1643, %v1663
      %v1666 = vadd.f32 %v1644, %v1664
      %s1667 = sld [smem:[#allocation7 + $0x37]]
      %1668 = vset.pattern.permute.xlu0 55
      %1669 = vperm.xlu0 %1668, %v68
      %v1670 = vpop.permute.xlu0 %1669
      %1672 = vset.pattern.permute.xlu0 55
      %1673 = vperm.xlu0 %1672, %v69
      %v1674 = vpop.permute.xlu0 %1673
      %v1676 = vlaneseq
      %v1677 = vshrl.u32 %v1676, 7
      %v1678 = vsub.s32 7, %v1677
      %v1679 = vrot.slane %v76, %v1678
      %v1680 = vadd.f32 %v1670, %v1679
      %v1681 = vadd.f32 %v1674, %v1679
      %v1682 = vand.u32 2147483647, %v1680
      %v1683 = vand.u32 2147483647, %v1681
      %v1684 = vstv %s1667
      %v1685 = vmul.f32 %v1684, %v1682
      %v1686 = vmul.f32 %v1684, %v1683
      %v1687 = vadd.f32 %v1665, %v1685
      %v1688 = vadd.f32 %v1666, %v1686
      %s1689 = sld [smem:[#allocation7 + $0x38]]
      %1690 = vset.pattern.permute.xlu0 56
      %1691 = vperm.xlu0 %1690, %v68
      %v1692 = vpop.permute.xlu0 %1691
      %1694 = vset.pattern.permute.xlu0 56
      %1695 = vperm.xlu0 %1694, %v69
      %v1696 = vpop.permute.xlu0 %1695
      %v1698 = vlaneseq
      %v1699 = vshrl.u32 %v1698, 7
      %v1700 = vsub.s32 0, %v1699
      %v1701 = vrot.slane %v77, %v1700
      %v1702 = vadd.f32 %v1692, %v1701
      %v1703 = vadd.f32 %v1696, %v1701
      %v1704 = vand.u32 2147483647, %v1702
      %v1705 = vand.u32 2147483647, %v1703
      %v1706 = vstv %s1689
      %v1707 = vmul.f32 %v1706, %v1704
      %v1708 = vmul.f32 %v1706, %v1705
      %v1709 = vadd.f32 %v1687, %v1707
      %v1710 = vadd.f32 %v1688, %v1708
      %s1711 = sld [smem:[#allocation7 + $0x39]]
      %1712 = vset.pattern.permute.xlu0 57
      %1713 = vperm.xlu0 %1712, %v68
      %v1714 = vpop.permute.xlu0 %1713
      %1716 = vset.pattern.permute.xlu0 57
      %1717 = vperm.xlu0 %1716, %v69
      %v1718 = vpop.permute.xlu0 %1717
      %v1720 = vlaneseq
      %v1721 = vshrl.u32 %v1720, 7
      %v1722 = vsub.s32 1, %v1721
      %v1723 = vrot.slane %v77, %v1722
      %v1724 = vadd.f32 %v1714, %v1723
      %v1725 = vadd.f32 %v1718, %v1723
      %v1726 = vand.u32 2147483647, %v1724
      %v1727 = vand.u32 2147483647, %v1725
      %v1728 = vstv %s1711
      %v1729 = vmul.f32 %v1728, %v1726
      %v1730 = vmul.f32 %v1728, %v1727
      %v1731 = vadd.f32 %v1709, %v1729
      %v1732 = vadd.f32 %v1710, %v1730
      %s1733 = sld [smem:[#allocation7 + $0x3a]]
      %1734 = vset.pattern.permute.xlu0 58
      %1735 = vperm.xlu0 %1734, %v68
      %v1736 = vpop.permute.xlu0 %1735
      %1738 = vset.pattern.permute.xlu0 58
      %1739 = vperm.xlu0 %1738, %v69
      %v1740 = vpop.permute.xlu0 %1739
      %v1742 = vlaneseq
      %v1743 = vshrl.u32 %v1742, 7
      %v1744 = vsub.s32 2, %v1743
      %v1745 = vrot.slane %v77, %v1744
      %v1746 = vadd.f32 %v1736, %v1745
      %v1747 = vadd.f32 %v1740, %v1745
      %v1748 = vand.u32 2147483647, %v1746
      %v1749 = vand.u32 2147483647, %v1747
      %v1750 = vstv %s1733
      %v1751 = vmul.f32 %v1750, %v1748
      %v1752 = vmul.f32 %v1750, %v1749
      %v1753 = vadd.f32 %v1731, %v1751
      %v1754 = vadd.f32 %v1732, %v1752
      %s1755 = sld [smem:[#allocation7 + $0x3b]]
      %1756 = vset.pattern.permute.xlu0 59
      %1757 = vperm.xlu0 %1756, %v68
      %v1758 = vpop.permute.xlu0 %1757
      %1760 = vset.pattern.permute.xlu0 59
      %1761 = vperm.xlu0 %1760, %v69
      %v1762 = vpop.permute.xlu0 %1761
      %v1764 = vlaneseq
      %v1765 = vshrl.u32 %v1764, 7
      %v1766 = vsub.s32 3, %v1765
      %v1767 = vrot.slane %v77, %v1766
      %v1768 = vadd.f32 %v1758, %v1767
      %v1769 = vadd.f32 %v1762, %v1767
      %v1770 = vand.u32 2147483647, %v1768
      %v1771 = vand.u32 2147483647, %v1769
      %v1772 = vstv %s1755
      %v1773 = vmul.f32 %v1772, %v1770
      %v1774 = vmul.f32 %v1772, %v1771
      %v1775 = vadd.f32 %v1753, %v1773
      %v1776 = vadd.f32 %v1754, %v1774
      %s1777 = sld [smem:[#allocation7 + $0x3c]]
      %1778 = vset.pattern.permute.xlu0 60
      %1779 = vperm.xlu0 %1778, %v68
      %v1780 = vpop.permute.xlu0 %1779
      %1782 = vset.pattern.permute.xlu0 60
      %1783 = vperm.xlu0 %1782, %v69
      %v1784 = vpop.permute.xlu0 %1783
      %v1786 = vlaneseq
      %v1787 = vshrl.u32 %v1786, 7
      %v1788 = vsub.s32 4, %v1787
      %v1789 = vrot.slane %v77, %v1788
      %v1790 = vadd.f32 %v1780, %v1789
      %v1791 = vadd.f32 %v1784, %v1789
      %v1792 = vand.u32 2147483647, %v1790
      %v1793 = vand.u32 2147483647, %v1791
      %v1794 = vstv %s1777
      %v1795 = vmul.f32 %v1794, %v1792
      %v1796 = vmul.f32 %v1794, %v1793
      %v1797 = vadd.f32 %v1775, %v1795
      %v1798 = vadd.f32 %v1776, %v1796
      %s1799 = sld [smem:[#allocation7 + $0x3d]]
      %1800 = vset.pattern.permute.xlu0 61
      %1801 = vperm.xlu0 %1800, %v68
      %v1802 = vpop.permute.xlu0 %1801
      %1804 = vset.pattern.permute.xlu0 61
      %1805 = vperm.xlu0 %1804, %v69
      %v1806 = vpop.permute.xlu0 %1805
      %v1808 = vlaneseq
      %v1809 = vshrl.u32 %v1808, 7
      %v1810 = vsub.s32 5, %v1809
      %v1811 = vrot.slane %v77, %v1810
      %v1812 = vadd.f32 %v1802, %v1811
      %v1813 = vadd.f32 %v1806, %v1811
      %v1814 = vand.u32 2147483647, %v1812
      %v1815 = vand.u32 2147483647, %v1813
      %v1816 = vstv %s1799
      %v1817 = vmul.f32 %v1816, %v1814
      %v1818 = vmul.f32 %v1816, %v1815
      %v1819 = vadd.f32 %v1797, %v1817
      %v1820 = vadd.f32 %v1798, %v1818
      %s1821 = sld [smem:[#allocation7 + $0x3e]]
      %1822 = vset.pattern.permute.xlu0 62
      %1823 = vperm.xlu0 %1822, %v68
      %v1824 = vpop.permute.xlu0 %1823
      %1826 = vset.pattern.permute.xlu0 62
      %1827 = vperm.xlu0 %1826, %v69
      %v1828 = vpop.permute.xlu0 %1827
      %v1830 = vlaneseq
      %v1831 = vshrl.u32 %v1830, 7
      %v1832 = vsub.s32 6, %v1831
      %v1833 = vrot.slane %v77, %v1832
      %v1834 = vadd.f32 %v1824, %v1833
      %v1835 = vadd.f32 %v1828, %v1833
      %v1836 = vand.u32 2147483647, %v1834
      %v1837 = vand.u32 2147483647, %v1835
      %v1838 = vstv %s1821
      %v1839 = vmul.f32 %v1838, %v1836
      %v1840 = vmul.f32 %v1838, %v1837
      %v1841 = vadd.f32 %v1819, %v1839
      %v1842 = vadd.f32 %v1820, %v1840
      %s1843 = sld [smem:[#allocation7 + $0x3f]]
      %1844 = vset.pattern.permute.xlu0 63
      %1845 = vperm.xlu0 %1844, %v68
      %v1846 = vpop.permute.xlu0 %1845
      %1848 = vset.pattern.permute.xlu0 63
      %1849 = vperm.xlu0 %1848, %v69
      %v1850 = vpop.permute.xlu0 %1849
      %v1852 = vlaneseq
      %v1853 = vshrl.u32 %v1852, 7
      %v1854 = vsub.s32 7, %v1853
      %v1855 = vrot.slane %v77, %v1854
      %v1856 = vadd.f32 %v1846, %v1855
      %v1857 = vadd.f32 %v1850, %v1855
      %v1858 = vand.u32 2147483647, %v1856
      %v1859 = vand.u32 2147483647, %v1857
      %v1860 = vstv %s1843
      %v1861 = vmul.f32 %v1860, %v1858
      %v1862 = vmul.f32 %v1860, %v1859
      %v1863 = vadd.f32 %v1841, %v1861
      %v1864 = vadd.f32 %v1842, %v1862
      %v1865 = vsel %vm457, %v1863, -inf
      %1866 = vmax.xlane.f32.xlu0 %v1865
      %v1867 = vpop.xlane.xlu0 %1866
      %v1868 = vsel %vm457, %v1864, -inf
      %1869 = vmax.xlane.f32.xlu0 %v1868
      %v1870 = vpop.xlane.xlu0 %1869
      %v1871 = vmax.f32 %v83, %v1867
      %v1872 = vmax.f32 %v84, %v1870
      %v1873 = vsub.f32 %v83, %v1871
      %v1874 = vsub.f32 %v84, %v1872
      %v1875 = vmul.f32 %v1873, 1.442695
      %v1876 = vpow.pop %v1875
      %v1877 = vmul.f32 %v1874, 1.442695
      %v1878 = vpow.pop %v1877
      %1880 = vset.pattern.permute.xlu0 3
      %1881 = vperm.xlu0 %1880, %v1871
      %v1882 = vpop.permute.xlu0 %1881
      %1885 = vset.pattern.permute.xlu0 3
      %1886 = vperm.xlu0 %1885, %v1872
      %v1887 = vpop.permute.xlu0 %1886
      %v1889 = vsub.f32 %v1863, %v1882
      %v1890 = vsub.f32 %v1864, %v1887
      %v1891 = vmul.f32 %v1889, 1.442695
      %v1892 = vpow.pop %v1891
      %v1893 = vmul.f32 %v1890, 1.442695
      %v1894 = vpow.pop %v1893
      %v1895 = vsel %vm492, %v1892, 0.0
      %v1896 = vsel %vm493, %v1894, 0.0
      %v1897 = vmul.f32 %v1876, %v85
      %v1898 = vmul.f32 %v1878, %v86
      %v1899 = vsel %vm457, %v1895, 0.0
      %1900 = vadd.xlane.f32.xlu0 %v1899
      %v1901 = vpop.xlane.xlu0 %1900
      %v1902 = vsel %vm457, %v1896, 0.0
      %1903 = vadd.xlane.f32.xlu0 %v1902
      %v1904 = vpop.xlane.xlu0 %1903
      %v1905 = vadd.f32 %v1897, %v1901
      %v1906 = vadd.f32 %v1898, %v1904
      %1908 = vset.pattern.permute.xlu0 3
      %1909 = vperm.xlu0 %1908, %v1876
      %v1910 = vpop.permute.xlu0 %1909
      %1913 = vset.pattern.permute.xlu0 3
      %1914 = vperm.xlu0 %1913, %v1878
      %v1915 = vpop.permute.xlu0 %1914
      %v1917 = vpack.c.bf16 %v1896, %v1895
      %1918 = vrot.lane.b32.xlu0 %v521, 80
      %v1919 = vpop.permute.xlu0 %1918
      %v1922 = vsel %vm457, %v1917, 0
      %1924 = vmatprep.subr.bf16.mxu0 0
      %1925 = vmatpush1.bf16.msra.mxu0 %v1919
      %1926 = vmatprep.subr.bf16.mxu0 0
      %1927 = vmatpush1.bf16.msra.mxu0 0
      %1928 = vmatprep.subr.bf16.mxu0 0
      %1929 = vmatpush1.bf16.msra.mxu0 0
      %1930 = vmatprep.subr.bf16.mxu0 0
      %1931 = vmatpush1.bf16.msra.mxu0 0
      %1932 = vmatprep.subr.bf16.mxu0 0
      %1933 = vmatpush1.bf16.msra.mxu0 0
      %1934 = vmatprep.subr.bf16.mxu0 0
      %1935 = vmatpush1.bf16.msra.mxu0 0
      %1936 = vmatprep.subr.bf16.mxu0 0
      %1937 = vmatpush1.bf16.msra.mxu0 0
      %1938 = vmatprep.subr.bf16.mxu0 0
      %1939 = vmatpush1.bf16.msra.mxu0 0
      %1940 = vmatprep.subr.bf16.mxu0 0
      %1941 = vmatpush1.bf16.msra.mxu0 0
      %1942 = vmatprep.subr.bf16.mxu0 0
      %1943 = vmatpush1.bf16.msra.mxu0 0
      %1944 = vmatprep.subr.bf16.mxu0 0
      %1945 = vmatpush1.bf16.msra.mxu0 0
      %1946 = vmatprep.subr.bf16.mxu0 0
      %1947 = vmatpush1.bf16.msra.mxu0 0
      %1948 = vmatprep.subr.bf16.mxu0 0
      %1949 = vmatpush1.bf16.msra.mxu0 0
      %1950 = vmatprep.subr.bf16.mxu0 0
      %1951 = vmatpush1.bf16.msra.mxu0 0
      %1952 = vmatprep.subr.bf16.mxu0 0
      %1953 = vmatpush1.bf16.msra.mxu0 0
      %1954 = vmatprep.subr.bf16.mxu0 0
      %1955 = vmatpush1.bf16.msra.mxu0 0
      %1956 = vmatprep.mubr.bf16.mxu0 0
      %1957 = vmatmul.mubr.bf16.gmra.mrb[0].mxu0 %v1922
      %v1958 = vpop.f32.mrb[0].mxu0
      %v1959 = vadd.f32 0.0, %v1958
      %v1960 = vpop.f32.mrb[0].mxu0
      %v1961 = vpop.f32.mrb[0].mxu0
      %v1962 = vadd.f32 0.0, %v1961
      %v1963 = vpop.f32.mrb[0].mxu0
      %1964 = vdwg.mxu0
      %vm1965 = vcmask 7168
      %v1966 = vsel %vm1965, %v464, %v939
      %v1967 = vsel %vm1965, %v465, %v940
      %vm1968 = vcmask 15360
      %v1969 = vsel %vm1968, %v1966, %v1405
      %v1970 = vsel %vm1968, %v1967, %v1406
      %vm1971 = vcmask 23552
      %v1972 = vsel %vm1971, %v1969, %v1871
      %v1973 = vsel %vm1971, %v1970, %v1872
      %vm1974 = vcmask 31744
      %1975 = vst.msk [vmem:[#allocation3] sm:$0xff] %vm1974, %v1972
      %1976 = vst.msk [vmem:[#allocation3 + $0x8] sm:$0xff] %vm1974, %v1973
      %v1977 = vsel %vm1965, %v504, %v973
      %v1978 = vsel %vm1965, %v505, %v974
      %v1979 = vsel %vm1968, %v1977, %v1439
      %v1980 = vsel %vm1968, %v1978, %v1440
      %v1981 = vsel %vm1971, %v1979, %v1905
      %v1982 = vsel %vm1971, %v1980, %v1906
      %1983 = vst.msk [vmem:[#allocation4] sm:$0xff] %vm1974, %v1981
      %1984 = vst.msk [vmem:[#allocation4 + $0x8] sm:$0xff] %vm1974, %v1982
      %v1985 = vsel %vm457, %v509, %v978
      %v1986 = vsel %vm457, %v514, %v983
      %vm1987 = vcmask 261120
      %v1988 = vsel %vm1987, %v1985, %v1444
      %v1989 = vsel %vm1987, %v1986, %v1449
      %vm1990 = vcmask 392192
      %v1991 = vsel %vm1990, %v1988, %v1910
      %v1992 = vsel %vm1990, %v1989, %v1915
      %v1993 = vld [vmem:[#allocation2] sm:$0xff]
      %v1994 = vld [vmem:[#allocation2 + $0x8] sm:$0xff]
      %v1995 = vmul.f32 %v1991, %v1993
      %v1996 = vmul.f32 %v1992, %v1994
      %1999 = vrot.lane.b32.xlu0 %v1027, 16
      %v2000 = vpop.permute.xlu0 %1999
      %2001 = vrot.lane.b32.xlu0 %v1030, 16
      %v2002 = vpop.permute.xlu0 %2001
      %2007 = vrot.lane.b32.xlu0 %v1493, 32
      %v2008 = vpop.permute.xlu0 %2007
      %2009 = vrot.lane.b32.xlu0 %v1496, 32
      %v2010 = vpop.permute.xlu0 %2009
      %2015 = vrot.lane.b32.xlu0 %v1959, 48
      %v2016 = vpop.permute.xlu0 %2015
      %2017 = vrot.lane.b32.xlu0 %v1962, 48
      %v2018 = vpop.permute.xlu0 %2017
      %v2021 = vsel %vm457, %v561, %v2000
      %v2022 = vsel %vm457, %v564, %v2002
      %v2023 = vsel %vm1987, %v2021, %v2008
      %v2024 = vsel %vm1987, %v2022, %v2010
      %v2025 = vsel %vm1990, %v2023, %v2016
      %v2026 = vsel %vm1990, %v2024, %v2018
      %v2027 = vadd.f32 %v1995, %v2025
      %v2028 = vadd.f32 %v1996, %v2026
      %vm2029 = vcmask 523264
      %2030 = vst.msk [vmem:[#allocation2] sm:$0xff] %vm2029, %v2027
      %2031 = vst.msk [vmem:[#allocation2 + $0x8] sm:$0xff] %vm2029, %v2028
    $region41: #{gat_forward.5} parent=1 // pred_fallthru
      _
    // Predicated region
    $region42: #{gat_forward.5} parent=1 // pred_check
      %p2032 = pneg %p44
    $region43: #{gat_forward.5} parent=1 // pred_check_branch
      %2034 = sbr.rel (%p2032) target = $region45
    $region44: #{gat_forward.5} parent=1 // pred_region
      %v2035 = vld [vmem:[#allocation4] sm:$0xff]
      %v2036 = vld [vmem:[#allocation4 + $0x8] sm:$0xff]
      %v2037 = vmax.f32 %v2035, 1e-20
      %v2038 = vmax.f32 %v2036, 1e-20
      %v2039 = vrcp.pop %v2037
      %v2040 = vrcp.pop %v2038
      %v2041 = vld [vmem:[#allocation2] sm:$0xff]
      %v2042 = vld [vmem:[#allocation2 + $0x8] sm:$0xff]
      %2044 = vset.pattern.permute.xlu0 0
      %2045 = vperm.xlu0 %2044, %v2039
      %v2046 = vpop.permute.xlu0 %2045
      %2049 = vset.pattern.permute.xlu0 0
      %2050 = vperm.xlu0 %2049, %v2040
      %v2051 = vpop.permute.xlu0 %2050
      %v2053 = vmul.f32 %v2041, %v2046
      %v2054 = vmul.f32 %v2042, %v2051
      %2055 = vset.pattern.permute.xlu0 1
      %2056 = vperm.xlu0 %2055, %v2039
      %v2057 = vpop.permute.xlu0 %2056
      %2059 = vset.pattern.permute.xlu0 1
      %2060 = vperm.xlu0 %2059, %v2040
      %v2061 = vpop.permute.xlu0 %2060
      %v2063 = vmul.f32 %v2041, %v2057
      %v2064 = vmul.f32 %v2042, %v2061
      %2065 = vset.pattern.permute.xlu0 2
      %2066 = vperm.xlu0 %2065, %v2039
      %v2067 = vpop.permute.xlu0 %2066
      %2069 = vset.pattern.permute.xlu0 2
      %2070 = vperm.xlu0 %2069, %v2040
      %v2071 = vpop.permute.xlu0 %2070
      %v2073 = vmul.f32 %v2041, %v2067
      %v2074 = vmul.f32 %v2042, %v2071
      %2075 = vset.pattern.permute.xlu0 3
      %2076 = vperm.xlu0 %2075, %v2039
      %v2077 = vpop.permute.xlu0 %2076
      %2079 = vset.pattern.permute.xlu0 3
      %2080 = vperm.xlu0 %2079, %v2040
      %v2081 = vpop.permute.xlu0 %2080
      %v2083 = vmul.f32 %v2041, %v2077
      %v2084 = vmul.f32 %v2042, %v2081
      %vm2085 = vcmask 130048
      %v2086 = vsel %vm2085, %v2053, %v2063
      %v2087 = vsel %vm2085, %v2054, %v2064
      %vm2088 = vcmask 261120
      %v2089 = vsel %vm2088, %v2086, %v2073
      %v2090 = vsel %vm2088, %v2087, %v2074
      %vm2091 = vcmask 392192
      %v2092 = vsel %vm2091, %v2089, %v2083
      %v2093 = vsel %vm2091, %v2090, %v2084
      %vm2094 = vcmp.gt.f32.partialorder %v2092, 0.0
      %vm2095 = vcmp.gt.f32.partialorder %v2093, 0.0
      %v2096 = vmin.f32 %v2092, 0.0
      %v2097 = vmin.f32 %v2093, 0.0
      %v2098 = vmul.f32 %v2096, 1.442695
      %v2099 = vpow.pop %v2098
      %v2100 = vmul.f32 %v2097, 1.442695
      %v2101 = vpow.pop %v2100
      %v2102 = vsub.f32 %v2099, 1.0
      %v2103 = vsub.f32 %v2101, 1.0
      %v2104 = vsel %vm2094, %v2092, %v2102
      %v2105 = vsel %vm2095, %v2093, %v2103
      %vm2106 = vcmask 523264
      %2107 = vst.msk [vmem:[%s8] sm:$0xff] %vm2106, %v2104
      %2108 = vst.msk [vmem:[%s8 + $0x8] sm:$0xff] %vm2106, %v2105
    $region45: #{gat_forward.5} parent=1 // pred_fallthru
      _
    // Predicated region
    $region46: #{gat_forward.5} parent=1 // pred_check
      _
    $region47: #{gat_forward.5} parent=1 // pred_check_branch
      %2110 = sbr.rel (0) target = $region49
    $region48: #{gat_forward.5} parent=1 // pred_region
      _
    $region49: #{gat_forward.5} parent=1 // pred_fallthru
      _
    // Predicated region
    $region50: #{gat_forward.5} parent=1 // pred_check
      _
    $region51: #{gat_forward.5} parent=1 // pred_check_branch
      %2112 = sbr.rel (0) target = $region53
    $region52: #{gat_forward.5} parent=1 // pred_region
      _
    $region53: #{gat_forward.5} parent=1 // pred_fallthru
      _
    %2113 = vsyncpa [#allocation8], 1

</llo_original>
